<compile_context>
chip_gen: v7x
topology: tpu7x:2x2x1
jax: 0.10.0
libtpu: 0.0.40
codegen_flags: <defaults>
</compile_context>

<pallas_src>
import jax
import jax.numpy as jnp
import numpy as np
from jax.experimental import pallas as pl
from jax.experimental.pallas import tpu as pltpu


# ----------------------------- kernel ---------------------------------------


def _rpn_scale_kernel(x_ref, w1_ref, b1_ref, wh_ref, bh_ref, out_ref,
                      xp_ref, fp_ref):
    # x_ref:  (Bt, H, W, Cin)      bf16 unpadded NHWC input tile
    # w1_ref: (9*Cin, C2)          bf16 im2col conv1 weight
    # b1_ref: (1, C2)              f32  conv1 bias
    # wh_ref: (9*C2, NC)           bf16 im2col fused logits+deltas weight
    # bh_ref: (1, NC)              f32  fused bias          (NC = nb*2 + nb*8)
    # out_ref:(Bt, H*W, NC)        f32  fused heads output
    # xp_ref: (Bt, H+2, W+2, Cin)  f32  VMEM scratch with zero halo
    # fp_ref: (Bt, H+2, W+2, C2)   f32  VMEM scratch with zero halo
    Bt, H, W, Cin = x_ref.shape
    C2 = w1_ref.shape[-1]
    NC = wh_ref.shape[-1]

    def im2col(src_ref, c):
        # 9 shifted taps concatenated along channels -> (Bt*H*W, 9*c).
        taps = [src_ref[:, dy:dy + H, dx:dx + W, :]
                for dy in range(3) for dx in range(3)]
        return jnp.concatenate(taps, axis=-1).reshape(Bt * H * W, 9 * c)

    # In-kernel halo padding (replaces the wrapper-side jnp.pad HBM passes).
    xp_ref[...] = jnp.zeros_like(xp_ref)
    xp_ref[:, 1:H + 1, 1:W + 1, :] = x_ref[...].astype(xp_ref.dtype)

    # conv1 + bias + ReLU as one big-K (K = 9*Cin) bf16 GEMM, f32 accumulate.
    f = jnp.dot(im2col(xp_ref, Cin).astype(jnp.bfloat16), w1_ref[...],
                preferred_element_type=jnp.float32)
    f = jnp.maximum(f + b1_ref[...], 0.0)
    # TODO(synk): F.dropout(p=0.5, training=True) omitted — identity in eval.

    fp_ref[...] = jnp.zeros_like(fp_ref)
    fp_ref[:, 1:H + 1, 1:W + 1, :] = f.reshape(Bt, H, W, C2)

    # Fused logits+deltas heads as one big-K (K = 9*C2) bf16 GEMM.
    heads = jnp.dot(im2col(fp_ref, C2).astype(jnp.bfloat16), wh_ref[...],
                    preferred_element_type=jnp.float32)
    heads = heads + bh_ref[...]
    out_ref[...] = heads.reshape(Bt, H * W, NC).astype(out_ref.dtype)


# ----------------------------- wrapper ---------------------------------------


def _rpn_single_scale(x_nchw, w1, b1, wl, bl, wd, bd, *, batch_tile=None):
    B, Cin, H, W = x_nchw.shape
    C2 = w1.shape[-1]
    nl = wl.shape[-1]
    nd = wd.shape[-1]
    nc = nl + nd
    nb = nl // 2

    if batch_tile is None:
        # >=2 grid steps so the "parallel" batch axis shards across v7x's two
        # TensorCores; on v5e/v6e (1 TC) pass batch_tile=B for a single block.
        batch_tile = B if B == 1 else pl.cdiv(B, 2)
    Bt = min(batch_tile, B)
    grid = (pl.cdiv(B, Bt),)

    # NCHW -> NHWC (channels on lanes); bf16 halves the input DMA bytes.
    # TODO(synk): drop this transpose if the upstream producer emits NHWC.
    x_nhwc = jnp.transpose(x_nchw, (0, 2, 3, 1)).astype(jnp.bfloat16)

    # im2col weight layout; fuse logits + deltas along the output channels.
    w1_flat = w1.reshape(9 * Cin, C2).astype(jnp.bfloat16)
    wh_flat = (jnp.concatenate([wl, wd], axis=-1)
               .reshape(9 * C2, nc).astype(jnp.bfloat16))
    bh = jnp.concatenate([bl, bd], axis=-1)

    out = pl.pallas_call(
        _rpn_scale_kernel,
        out_shape=jax.ShapeDtypeStruct((B, H * W, nc), jnp.float32),
        grid=grid,
        in_specs=[
            pl.BlockSpec((Bt, H, W, Cin), lambda i: (i, 0, 0, 0)),
            pl.BlockSpec((9 * Cin, C2), lambda i: (0, 0)),
            pl.BlockSpec((1, C2), lambda i: (0, 0)),
            pl.BlockSpec((9 * C2, nc), lambda i: (0, 0)),
            pl.BlockSpec((1, nc), lambda i: (0, 0)),
        ],
        out_specs=pl.BlockSpec((Bt, H * W, nc), lambda i: (i, 0, 0)),
        scratch_shapes=[
            pltpu.VMEM((Bt, H + 2, W + 2, Cin), jnp.float32),
            pltpu.VMEM((Bt, H + 2, W + 2, C2), jnp.float32),
        ],
        compiler_params=pltpu.CompilerParams(
            dimension_semantics=("parallel",)),
    )(x_nhwc, w1_flat, b1, wh_flat, bh)

    # Same memory order as torch's permute(0,2,3,1).contiguous().view(...).
    logit_flat = out[:, :, :nl].reshape(B, H * W * nb, 2)
    delta_flat = out[:, :, nl:].reshape(B, H * W * nb, 2, 4)
    return logit_flat, delta_flat


def rpn_multi_head(fs, params, *, batch_tile=None):
    """fs: list of (B, Cin, H_l, W_l) NCHW feature maps (one per RPN scale).
    params[l]: dict with w1 (9,Cin,2Cin), b1 (1,2Cin), wl (9,2Cin,nb*2),
               bl (1,nb*2), wd (9,2Cin,nb*8), bd (1,nb*8)."""
    logits, deltas = [], []
    for x, p in zip(fs, params):
        lg, dl = _rpn_single_scale(x, p["w1"], p["b1"], p["wl"], p["bl"],
                                   p["wd"], p["bd"], batch_tile=batch_tile)
        logits.append(lg)
        deltas.append(dl)
    return jnp.concatenate(logits, axis=1), jnp.concatenate(deltas, axis=1)


# ----------------------------- reference -------------------------------------


def _conv3x3_ref(x_nchw, w9, b):
    # Same numerics as the kernel: bf16 operands, f32 accumulation, f32 bias.
    Cin, Cout = w9.shape[1], w9.shape[2]
    w_oihw = jnp.transpose(w9.reshape(3, 3, Cin, Cout), (3, 2, 0, 1))
    y = jax.lax.conv_general_dilated(
        x_nchw.astype(jnp.bfloat16), w_oihw.astype(jnp.bfloat16),
        window_strides=(1, 1), padding="SAME",
        dimension_numbers=("NCHW", "OIHW", "NCHW"),
        preferred_element_type=jnp.float32)
    return y + b[0][None, :, None, None]


def rpn_multi_head_ref(fs, params):
    B = fs[0].shape[0]
    logits, deltas = [], []
    for x, p in zip(fs, params):
        f = jnp.maximum(_conv3x3_ref(x, p["w1"], p["b1"]), 0.0)
        logit = _conv3x3_ref(f, p["wl"], p["bl"])
        delta = _conv3x3_ref(f, p["wd"], p["bd"])
        logits.append(jnp.transpose(logit, (0, 2, 3, 1)).reshape(B, -1, 2))
        deltas.append(jnp.transpose(delta, (0, 2, 3, 1)).reshape(B, -1, 2, 4))
    return jnp.concatenate(logits, 1), jnp.concatenate(deltas, 1)


# ------------------------------- main ----------------------------------------


if __name__ == "__main__":
    # Small config consistent with RpnMultiHead:
    #   in_channels=8 -> hidden channels=16, 2 scales,
    #   num_bases = [len(cfg.rpn_base_apsect_ratios[l])] = [2, 3]
    B = 2
    in_channels = 8
    C2 = in_channels * 2
    spatial = [(16, 16), (8, 8)]
    num_bases = [2, 3]

    key = jax.random.PRNGKey(0)
    fs, params = [], []
    for (H, W), nb in zip(spatial, num_bases):
        key, kx, k1, k2, k3, k4, k5, k6 = jax.random.split(key, 8)
        fs.append(jax.random.normal(kx, (B, in_channels, H, W), jnp.float32))
        nl, nd = nb * 2, nb * 2 * 4
        params.append(dict(
            w1=jax.random.normal(k1, (9, in_channels, C2), jnp.float32) * 0.1,
            b1=jax.random.normal(k2, (1, C2), jnp.float32) * 0.1,
            wl=jax.random.normal(k3, (9, C2, nl), jnp.float32) * 0.1,
            bl=jax.random.normal(k4, (1, nl), jnp.float32) * 0.1,
            wd=jax.random.normal(k5, (9, C2, nd), jnp.float32) * 0.1,
            bd=jax.random.normal(k6, (1, nd), jnp.float32) * 0.1,
        ))

    logits, deltas = rpn_multi_head(fs, params)
    logits, deltas = jax.block_until_ready((logits, deltas))

    ref_logits, ref_deltas = rpn_multi_head_ref(fs, params)
    np.testing.assert_allclose(np.asarray(logits), np.asarray(ref_logits),
                               rtol=5e-3, atol=5e-3)
    np.testing.assert_allclose(np.asarray(deltas), np.asarray(ref_deltas),
                               rtol=5e-3, atol=5e-3)
    print("KERNEL_OK")
</pallas_src>

<mosaic_0001>
module attributes {stable_mosaic.version = 11 : i64} {
  func.func @_rpn_scale_kernel(%arg0: i32, %arg1: memref<1x16x16x8xbf16, #tpu.memory_space<vmem>>, %arg2: memref<72x16xbf16, #tpu.memory_space<vmem>>, %arg3: memref<1x16xf32, #tpu.memory_space<vmem>>, %arg4: memref<144x20xbf16, #tpu.memory_space<vmem>>, %arg5: memref<1x20xf32, #tpu.memory_space<vmem>>, %arg6: memref<1x256x20xf32, #tpu.memory_space<vmem>>, %arg7: memref<1x18x18x8xf32, #tpu.memory_space<vmem>>, %arg8: memref<1x18x18x16xf32, #tpu.memory_space<vmem>>) attributes {dimension_semantics = [#tpu.dimension_semantics<parallel>], iteration_bounds = array<i64: 2>, scalar_prefetch = 0 : i64, scratch_operands = 2 : i64, tpu.core_type = #tpu.core_type<tc>, window_params = [{transform_indices = @transform_0, window_bounds = array<i64: 1, 16, 16, 8>}, {pipeline_mode = #tpu.pipeline_mode<synchronous>, transform_indices = @transform_1, window_bounds = array<i64: 72, 16>}, {pipeline_mode = #tpu.pipeline_mode<synchronous>, transform_indices = @transform_2, window_bounds = array<i64: 1, 16>}, {pipeline_mode = #tpu.pipeline_mode<synchronous>, transform_indices = @transform_3, window_bounds = array<i64: 144, 20>}, {pipeline_mode = #tpu.pipeline_mode<synchronous>, transform_indices = @transform_4, window_bounds = array<i64: 1, 20>}, {transform_indices = @transform_5, window_bounds = array<i64: 1, 256, 20>}]} {
    %cst = arith.constant 0.000000e+00 : f32
    %0 = vector.broadcast %cst : f32 to vector<1x18x18x8xf32>
    %c0 = arith.constant 0 : index
    %c0_0 = arith.constant 0 : index
    %c0_1 = arith.constant 0 : index
    %c0_2 = arith.constant 0 : index
    %1 = vector.load %arg7[%c0, %c0_0, %c0_1, %c0_2] : memref<1x18x18x8xf32, #tpu.memory_space<vmem>>, vector<1x18x18x8xf32>
    tpu.vector_store %arg7[%c0, %c0_0, %c0_1, %c0_2], %0 {strides = array<i32>} : memref<1x18x18x8xf32, #tpu.memory_space<vmem>>, vector<1x18x18x8xf32>,
    %c0_3 = arith.constant 0 : index
    %c0_4 = arith.constant 0 : index
    %c0_5 = arith.constant 0 : index
    %c0_6 = arith.constant 0 : index
    %2 = vector.load %arg1[%c0_3, %c0_4, %c0_5, %c0_6] : memref<1x16x16x8xbf16, #tpu.memory_space<vmem>>, vector<1x16x16x8xbf16>
    %3 = arith.extf %2 : vector<1x16x16x8xbf16> to vector<1x16x16x8xf32>
    %c0_7 = arith.constant 0 : index
    %c1 = arith.constant 1 : index
    %c1_8 = arith.constant 1 : index
    %c0_9 = arith.constant 0 : index
    %4 = vector.load %arg7[%c0_7, %c1, %c1_8, %c0_9] : memref<1x18x18x8xf32, #tpu.memory_space<vmem>>, vector<1x16x16x8xf32>
    tpu.vector_store %arg7[%c0_7, %c1, %c1_8, %c0_9], %3 {strides = array<i32>} : memref<1x18x18x8xf32, #tpu.memory_space<vmem>>, vector<1x16x16x8xf32>,
    %c0_10 = arith.constant 0 : index
    %c0_11 = arith.constant 0 : index
    %c0_12 = arith.constant 0 : index
    %c0_13 = arith.constant 0 : index
    %5 = vector.load %arg7[%c0_10, %c0_11, %c0_12, %c0_13] : memref<1x18x18x8xf32, #tpu.memory_space<vmem>>, vector<1x16x16x8xf32>
    %c0_14 = arith.constant 0 : index
    %c0_15 = arith.constant 0 : index
    %c1_16 = arith.constant 1 : index
    %c0_17 = arith.constant 0 : index
    %6 = vector.load %arg7[%c0_14, %c0_15, %c1_16, %c0_17] : memref<1x18x18x8xf32, #tpu.memory_space<vmem>>, vector<1x16x16x8xf32>
    %c0_18 = arith.constant 0 : index
    %c0_19 = arith.constant 0 : index
    %c2 = arith.constant 2 : index
    %c0_20 = arith.constant 0 : index
    %7 = vector.load %arg7[%c0_18, %c0_19, %c2, %c0_20] : memref<1x18x18x8xf32, #tpu.memory_space<vmem>>, vector<1x16x16x8xf32>
    %c0_21 = arith.constant 0 : index
    %c1_22 = arith.constant 1 : index
    %c0_23 = arith.constant 0 : index
    %c0_24 = arith.constant 0 : index
    %8 = vector.load %arg7[%c0_21, %c1_22, %c0_23, %c0_24] : memref<1x18x18x8xf32, #tpu.memory_space<vmem>>, vector<1x16x16x8xf32>
    %c0_25 = arith.constant 0 : index
    %c1_26 = arith.constant 1 : index
    %c1_27 = arith.constant 1 : index
    %c0_28 = arith.constant 0 : index
    %9 = vector.load %arg7[%c0_25, %c1_26, %c1_27, %c0_28] : memref<1x18x18x8xf32, #tpu.memory_space<vmem>>, vector<1x16x16x8xf32>
    %c0_29 = arith.constant 0 : index
    %c1_30 = arith.constant 1 : index
    %c2_31 = arith.constant 2 : index
    %c0_32 = arith.constant 0 : index
    %10 = vector.load %arg7[%c0_29, %c1_30, %c2_31, %c0_32] : memref<1x18x18x8xf32, #tpu.memory_space<vmem>>, vector<1x16x16x8xf32>
    %c0_33 = arith.constant 0 : index
    %c2_34 = arith.constant 2 : index
    %c0_35 = arith.constant 0 : index
    %c0_36 = arith.constant 0 : index
    %11 = vector.load %arg7[%c0_33, %c2_34, %c0_35, %c0_36] : memref<1x18x18x8xf32, #tpu.memory_space<vmem>>, vector<1x16x16x8xf32>
    %c0_37 = arith.constant 0 : index
    %c2_38 = arith.constant 2 : index
    %c1_39 = arith.constant 1 : index
    %c0_40 = arith.constant 0 : index
    %12 = vector.load %arg7[%c0_37, %c2_38, %c1_39, %c0_40] : memref<1x18x18x8xf32, #tpu.memory_space<vmem>>, vector<1x16x16x8xf32>
    %c0_41 = arith.constant 0 : index
    %c2_42 = arith.constant 2 : index
    %c2_43 = arith.constant 2 : index
    %c0_44 = arith.constant 0 : index
    %13 = vector.load %arg7[%c0_41, %c2_42, %c2_43, %c0_44] : memref<1x18x18x8xf32, #tpu.memory_space<vmem>>, vector<1x16x16x8xf32>
    %14 = tpu.concatenate %5, %6, %7, %8, %9, %10, %11, %12, %13 in 3 : vector<1x16x16x8xf32>, vector<1x16x16x8xf32>, vector<1x16x16x8xf32>, vector<1x16x16x8xf32>, vector<1x16x16x8xf32>, vector<1x16x16x8xf32>, vector<1x16x16x8xf32>, vector<1x16x16x8xf32>, vector<1x16x16x8xf32> -> vector<1x16x16x72xf32>
    %15 = vector.shape_cast %14 : vector<1x16x16x72xf32> to vector<256x72xf32>
    %16 = arith.truncf %15 : vector<256x72xf32> to vector<256x72xbf16>
    %c0_45 = arith.constant 0 : index
    %c0_46 = arith.constant 0 : index
    %17 = vector.load %arg2[%c0_45, %c0_46] : memref<72x16xbf16, #tpu.memory_space<vmem>>, vector<72x16xbf16>
    %cst_47 = arith.constant dense<0.000000e+00> : vector<256x16xf32>
    %18 = tpu.matmul %16, %17, %cst_47 {dimension_numbers = #tpu.dot_dimension_numbers<[1], [0], [0], [1], [0, 0, 1, 1], [], []>} : vector<256x72xbf16>, vector<72x16xbf16>, vector<256x16xf32> -> vector<256x16xf32>
    %c0_48 = arith.constant 0 : index
    %c0_49 = arith.constant 0 : index
    %19 = vector.load %arg3[%c0_48, %c0_49] : memref<1x16xf32, #tpu.memory_space<vmem>>, vector<1x16xf32>
    %20 = vector.broadcast %19 : vector<1x16xf32> to vector<256x16xf32>
    %21 = arith.addf %18, %20 : vector<256x16xf32>
    %cst_50 = arith.constant 0.000000e+00 : f32
    %22 = vector.broadcast %cst_50 : f32 to vector<256x16xf32>
    %23 = arith.maximumf %21, %22 : vector<256x16xf32>
    %cst_51 = arith.constant 0.000000e+00 : f32
    %24 = vector.broadcast %cst_51 : f32 to vector<1x18x18x16xf32>
    %c0_52 = arith.constant 0 : index
    %c0_53 = arith.constant 0 : index
    %c0_54 = arith.constant 0 : index
    %c0_55 = arith.constant 0 : index
    %25 = vector.load %arg8[%c0_52, %c0_53, %c0_54, %c0_55] : memref<1x18x18x16xf32, #tpu.memory_space<vmem>>, vector<1x18x18x16xf32>
    tpu.vector_store %arg8[%c0_52, %c0_53, %c0_54, %c0_55], %24 {strides = array<i32>} : memref<1x18x18x16xf32, #tpu.memory_space<vmem>>, vector<1x18x18x16xf32>,
    %26 = vector.shape_cast %23 : vector<256x16xf32> to vector<1x16x16x16xf32>
    %c0_56 = arith.constant 0 : index
    %c1_57 = arith.constant 1 : index
    %c1_58 = arith.constant 1 : index
    %c0_59 = arith.constant 0 : index
    %27 = vector.load %arg8[%c0_56, %c1_57, %c1_58, %c0_59] : memref<1x18x18x16xf32, #tpu.memory_space<vmem>>, vector<1x16x16x16xf32>
    tpu.vector_store %arg8[%c0_56, %c1_57, %c1_58, %c0_59], %26 {strides = array<i32>} : memref<1x18x18x16xf32, #tpu.memory_space<vmem>>, vector<1x16x16x16xf32>,
    %c0_60 = arith.constant 0 : index
    %c0_61 = arith.constant 0 : index
    %c0_62 = arith.constant 0 : index
    %c0_63 = arith.constant 0 : index
    %28 = vector.load %arg8[%c0_60, %c0_61, %c0_62, %c0_63] : memref<1x18x18x16xf32, #tpu.memory_space<vmem>>, vector<1x16x16x16xf32>
    %c0_64 = arith.constant 0 : index
    %c0_65 = arith.constant 0 : index
    %c1_66 = arith.constant 1 : index
    %c0_67 = arith.constant 0 : index
    %29 = vector.load %arg8[%c0_64, %c0_65, %c1_66, %c0_67] : memref<1x18x18x16xf32, #tpu.memory_space<vmem>>, vector<1x16x16x16xf32>
    %c0_68 = arith.constant 0 : index
    %c0_69 = arith.constant 0 : index
    %c2_70 = arith.constant 2 : index
    %c0_71 = arith.constant 0 : index
    %30 = vector.load %arg8[%c0_68, %c0_69, %c2_70, %c0_71] : memref<1x18x18x16xf32, #tpu.memory_space<vmem>>, vector<1x16x16x16xf32>
    %c0_72 = arith.constant 0 : index
    %c1_73 = arith.constant 1 : index
    %c0_74 = arith.constant 0 : index
    %c0_75 = arith.constant 0 : index
    %31 = vector.load %arg8[%c0_72, %c1_73, %c0_74, %c0_75] : memref<1x18x18x16xf32, #tpu.memory_space<vmem>>, vector<1x16x16x16xf32>
    %c0_76 = arith.constant 0 : index
    %c1_77 = arith.constant 1 : index
    %c1_78 = arith.constant 1 : index
    %c0_79 = arith.constant 0 : index
    %32 = vector.load %arg8[%c0_76, %c1_77, %c1_78, %c0_79] : memref<1x18x18x16xf32, #tpu.memory_space<vmem>>, vector<1x16x16x16xf32>
    %c0_80 = arith.constant 0 : index
    %c1_81 = arith.constant 1 : index
    %c2_82 = arith.constant 2 : index
    %c0_83 = arith.constant 0 : index
    %33 = vector.load %arg8[%c0_80, %c1_81, %c2_82, %c0_83] : memref<1x18x18x16xf32, #tpu.memory_space<vmem>>, vector<1x16x16x16xf32>
    %c0_84 = arith.constant 0 : index
    %c2_85 = arith.constant 2 : index
    %c0_86 = arith.constant 0 : index
    %c0_87 = arith.constant 0 : index
    %34 = vector.load %arg8[%c0_84, %c2_85, %c0_86, %c0_87] : memref<1x18x18x16xf32, #tpu.memory_space<vmem>>, vector<1x16x16x16xf32>
    %c0_88 = arith.constant 0 : index
    %c2_89 = arith.constant 2 : index
    %c1_90 = arith.constant 1 : index
    %c0_91 = arith.constant 0 : index
    %35 = vector.load %arg8[%c0_88, %c2_89, %c1_90, %c0_91] : memref<1x18x18x16xf32, #tpu.memory_space<vmem>>, vector<1x16x16x16xf32>
    %c0_92 = arith.constant 0 : index
    %c2_93 = arith.constant 2 : index
    %c2_94 = arith.constant 2 : index
    %c0_95 = arith.constant 0 : index
    %36 = vector.load %arg8[%c0_92, %c2_93, %c2_94, %c0_95] : memref<1x18x18x16xf32, #tpu.memory_space<vmem>>, vector<1x16x16x16xf32>
    %37 = tpu.concatenate %28, %29, %30, %31, %32, %33, %34, %35, %36 in 3 : vector<1x16x16x16xf32>, vector<1x16x16x16xf32>, vector<1x16x16x16xf32>, vector<1x16x16x16xf32>, vector<1x16x16x16xf32>, vector<1x16x16x16xf32>, vector<1x16x16x16xf32>, vector<1x16x16x16xf32>, vector<1x16x16x16xf32> -> vector<1x16x16x144xf32>
    %38 = vector.shape_cast %37 : vector<1x16x16x144xf32> to vector<256x144xf32>
    %39 = arith.truncf %38 : vector<256x144xf32> to vector<256x144xbf16>
    %c0_96 = arith.constant 0 : index
    %c0_97 = arith.constant 0 : index
    %40 = vector.load %arg4[%c0_96, %c0_97] : memref<144x20xbf16, #tpu.memory_space<vmem>>, vector<144x20xbf16>
    %cst_98 = arith.constant dense<0.000000e+00> : vector<256x20xf32>
    %41 = tpu.matmul %39, %40, %cst_98 {dimension_numbers = #tpu.dot_dimension_numbers<[1], [0], [0], [1], [0, 0, 1, 1], [], []>} : vector<256x144xbf16>, vector<144x20xbf16>, vector<256x20xf32> -> vector<256x20xf32>
    %c0_99 = arith.constant 0 : index
    %c0_100 = arith.constant 0 : index
    %42 = vector.load %arg5[%c0_99, %c0_100] : memref<1x20xf32, #tpu.memory_space<vmem>>, vector<1x20xf32>
    %43 = vector.broadcast %42 : vector<1x20xf32> to vector<256x20xf32>
    %44 = arith.addf %41, %43 : vector<256x20xf32>
    %45 = vector.shape_cast %44 : vector<256x20xf32> to vector<1x256x20xf32>
    %c0_101 = arith.constant 0 : index
    %c0_102 = arith.constant 0 : index
    %c0_103 = arith.constant 0 : index
    %46 = vector.load %arg6[%c0_101, %c0_102, %c0_103] : memref<1x256x20xf32, #tpu.memory_space<vmem>>, vector<1x256x20xf32>
    tpu.vector_store %arg6[%c0_101, %c0_102, %c0_103], %45 {strides = array<i32>} : memref<1x256x20xf32, #tpu.memory_space<vmem>>, vector<1x256x20xf32>,
    return
  }
  func.func @transform_0(%arg0: i32) -> (i32, i32, i32, i32) {
    %c0_i32 = arith.constant 0 : i32
    %c0_i32_0 = arith.constant 0 : i32
    %c0_i32_1 = arith.constant 0 : i32
    %c0_i32_2 = arith.constant 0 : i32
    return %arg0, %c0_i32, %c0_i32_0, %c0_i32_1 : i32, i32, i32, i32
  }
  func.func @transform_1(%arg0: i32) -> (i32, i32) {
    %c0_i32 = arith.constant 0 : i32
    %c0_i32_0 = arith.constant 0 : i32
    %c0_i32_1 = arith.constant 0 : i32
    return %c0_i32, %c0_i32_0 : i32, i32
  }
  func.func @transform_2(%arg0: i32) -> (i32, i32) {
    %c0_i32 = arith.constant 0 : i32
    %c0_i32_0 = arith.constant 0 : i32
    %c0_i32_1 = arith.constant 0 : i32
    return %c0_i32, %c0_i32_0 : i32, i32
  }
  func.func @transform_3(%arg0: i32) -> (i32, i32) {
    %c0_i32 = arith.constant 0 : i32
    %c0_i32_0 = arith.constant 0 : i32
    %c0_i32_1 = arith.constant 0 : i32
    return %c0_i32, %c0_i32_0 : i32, i32
  }
  func.func @transform_4(%arg0: i32) -> (i32, i32) {
    %c0_i32 = arith.constant 0 : i32
    %c0_i32_0 = arith.constant 0 : i32
    %c0_i32_1 = arith.constant 0 : i32
    return %c0_i32, %c0_i32_0 : i32, i32
  }
  func.func @transform_5(%arg0: i32) -> (i32, i32, i32) {
    %c0_i32 = arith.constant 0 : i32
    %c0_i32_0 = arith.constant 0 : i32
    %c0_i32_1 = arith.constant 0 : i32
    return %arg0, %c0_i32, %c0_i32_0 : i32, i32, i32
  }
}

</mosaic_0001>

<llo_original>
// kernel: tpu_custom_call.1
$region0: #{tpu_custom_call.1}
  #allocation0 [shape = 'u32[]', space=smem, size = 0x4, offset = 0x4, fixed_abs, tag = 'smem constant byte address 0x4 - core index']
  #allocation1 [shape = 'u32[144,128]{1,0:T(1,128)}', space=vmem, size = 0x12000, scoped, tag = 'internal scratch']
  #allocation2 [shape = 'f32[1,18,18,8]{3,2,1,0:T(8,128)}', space=vmem, size = 0x36000, scoped, tag = 'scratch operand']
  #allocation3 [shape = 'f32[1,18,18,16]{3,2,1,0:T(8,128)}', space=vmem, size = 0x36000, scoped, tag = 'scratch operand']
  %s0 = inlined_call_operand.vmem [shape: bf16[2,16,16,8], index: 0, kind: input, shape index: {}]
  %s1 = inlined_call_operand.vmem [shape: bf16[72,16], index: 1, kind: input, shape index: {}]
  %s2 = inlined_call_operand.vmem [shape: f32[1,16], index: 2, kind: input, shape index: {}]
  %s3 = inlined_call_operand.vmem [shape: bf16[144,20], index: 3, kind: input, shape index: {}]
  %s4 = inlined_call_operand.vmem [shape: f32[1,20], index: 4, kind: input, shape index: {}]
  %s5 = inlined_call_operand.vmem [shape: f32[2,256,20], index: 5, kind: output, shape index: {}]
  %s6 = sld [smem:[#allocation0]]
  $region53: #{tpu_custom_call.1} parent=0
    _
  %s8 = ssub.s32 1, %s6
  %s9 = scalar_select 0, %s8, %s6
  loop: start=0, step=1, limit=4
  $region2: #{tpu_custom_call.1} parent=0 // loop_pre_header
    _
  $region3: #{tpu_custom_call.1} parent=0 // loop_header
    %s11 = sphi 0, %s15
    %p12 = scmp.ge.s32.totalorder %s11, 4
    %s21 = sphi 0, %s23
    %s24 = sphi 0, %s21
    %s25 = sphi 0, %s24
    %s41 = sphi 0, %s25
    %s45 = sphi 0, %s45
    %s47 = sphi 0, %s45
    %s48 = sphi 0, %s47
    %s62 = sphi 0, %s48
    %s66 = sphi 0, %s66
    %s68 = sphi 0, %s66
    %s69 = sphi 0, %s68
    %s83 = sphi 0, %s69
    %s87 = sphi 0, %s87
    %s89 = sphi 0, %s87
    %s90 = sphi 0, %s89
    %s104 = sphi 0, %s90
    %s108 = sphi 0, %s108
    %s110 = sphi 0, %s108
    %s111 = sphi 0, %s110
    %s125 = sphi 0, %s111
    %s131 = sphi 0, %s133
    %s134 = sphi 0, %s131
    %s135 = sphi 0, %s134
    %s151 = sphi 0, %s135
  $region4: #{tpu_custom_call.1} parent=0 // loop_header_branch
    %14 = sbr.rel (%p12) target = $region8
  $region5: #{tpu_custom_call.1} parent=0 // loop_body
    %s16 = ssub.s32 %s11, 1
    %s17 = ssub.s32 %s11, 2
    %s18 = sadd.s32 %s11, 1
    %s19 = ssub.s32 %s11, %s18
    %p20 = scmp.eq.s32.totalorder %s19, 0
    %s22 = sadd.s32 %s21, 1
    %s23 = scalar_select %p20, %s21, %s22
    %p26 = pneg %p20
    %p27 = scmp.eq.s32.totalorder %s11, 1
    %p28 = por %p26, %p27
    %p29 = scmp.ne.s32.totalorder %s21, %s24
    %p30 = scmp.eq.s32.totalorder %s11, 0
    %p31 = por %p29, %p30
    %p32 = scmp.ne.s32.totalorder %s21, %s24
    %p33 = scmp.eq.s32.totalorder %s16, 1
    %p34 = por %p32, %p33
    %p35 = scmp.ne.s32.totalorder %s24, %s25
    %p36 = scmp.eq.s32.totalorder %s16, 0
    %p37 = por %p35, %p36
    %p38 = scmp.ne.s32.totalorder %s24, %s25
    %p39 = scmp.eq.s32.totalorder %s17, 1
    %p40 = por %p38, %p39
    %p42 = scmp.ne.s32.totalorder %s25, %s41
    %p43 = scmp.eq.s32.totalorder %s17, 0
    %p44 = por %p42, %p43
    %s46 = sadd.s32 %s45, 1
    %p49 = scmp.eq.s32.totalorder %s11, 1
    %p50 = scmp.ne.s32.totalorder %s45, %s47
    %p51 = scmp.eq.s32.totalorder %s11, 0
    %p52 = por %p50, %p51
    %p53 = scmp.ne.s32.totalorder %s45, %s47
    %p54 = scmp.eq.s32.totalorder %s16, 1
    %p55 = por %p53, %p54
    %p56 = scmp.ne.s32.totalorder %s47, %s48
    %p57 = scmp.eq.s32.totalorder %s16, 0
    %p58 = por %p56, %p57
    %p59 = scmp.ne.s32.totalorder %s47, %s48
    %p60 = scmp.eq.s32.totalorder %s17, 1
    %p61 = por %p59, %p60
    %p63 = scmp.ne.s32.totalorder %s48, %s62
    %p64 = scmp.eq.s32.totalorder %s17, 0
    %p65 = por %p63, %p64
    %s67 = sadd.s32 %s66, 1
    %p70 = scmp.eq.s32.totalorder %s11, 1
    %p71 = scmp.ne.s32.totalorder %s66, %s68
    %p72 = scmp.eq.s32.totalorder %s11, 0
    %p73 = por %p71, %p72
    %p74 = scmp.ne.s32.totalorder %s66, %s68
    %p75 = scmp.eq.s32.totalorder %s16, 1
    %p76 = por %p74, %p75
    %p77 = scmp.ne.s32.totalorder %s68, %s69
    %p78 = scmp.eq.s32.totalorder %s16, 0
    %p79 = por %p77, %p78
    %p80 = scmp.ne.s32.totalorder %s68, %s69
    %p81 = scmp.eq.s32.totalorder %s17, 1
    %p82 = por %p80, %p81
    %p84 = scmp.ne.s32.totalorder %s69, %s83
    %p85 = scmp.eq.s32.totalorder %s17, 0
    %p86 = por %p84, %p85
    %s88 = sadd.s32 %s87, 1
    %p91 = scmp.eq.s32.totalorder %s11, 1
    %p92 = scmp.ne.s32.totalorder %s87, %s89
    %p93 = scmp.eq.s32.totalorder %s11, 0
    %p94 = por %p92, %p93
    %p95 = scmp.ne.s32.totalorder %s87, %s89
    %p96 = scmp.eq.s32.totalorder %s16, 1
    %p97 = por %p95, %p96
    %p98 = scmp.ne.s32.totalorder %s89, %s90
    %p99 = scmp.eq.s32.totalorder %s16, 0
    %p100 = por %p98, %p99
    %p101 = scmp.ne.s32.totalorder %s89, %s90
    %p102 = scmp.eq.s32.totalorder %s17, 1
    %p103 = por %p101, %p102
    %p105 = scmp.ne.s32.totalorder %s90, %s104
    %p106 = scmp.eq.s32.totalorder %s17, 0
    %p107 = por %p105, %p106
    %s109 = sadd.s32 %s108, 1
    %p112 = scmp.eq.s32.totalorder %s11, 1
    %p113 = scmp.ne.s32.totalorder %s108, %s110
    %p114 = scmp.eq.s32.totalorder %s11, 0
    %p115 = por %p113, %p114
    %p116 = scmp.ne.s32.totalorder %s108, %s110
    %p117 = scmp.eq.s32.totalorder %s16, 1
    %p118 = por %p116, %p117
    %p119 = scmp.ne.s32.totalorder %s110, %s111
    %p120 = scmp.eq.s32.totalorder %s16, 0
    %p121 = por %p119, %p120
    %p122 = scmp.ne.s32.totalorder %s110, %s111
    %p123 = scmp.eq.s32.totalorder %s17, 1
    %p124 = por %p122, %p123
    %p126 = scmp.ne.s32.totalorder %s111, %s125
    %p127 = scmp.eq.s32.totalorder %s17, 0
    %p128 = por %p126, %p127
    %s129 = ssub.s32 %s11, %s18
    %p130 = scmp.eq.s32.totalorder %s129, 0
    %s132 = sadd.s32 %s131, 1
    %s133 = scalar_select %p130, %s131, %s132
    %p136 = pneg %p130
    %p137 = scmp.eq.s32.totalorder %s11, 1
    %p138 = por %p136, %p137
    %p139 = scmp.ne.s32.totalorder %s131, %s134
    %p140 = scmp.eq.s32.totalorder %s11, 0
    %p141 = por %p139, %p140
    %p142 = scmp.ne.s32.totalorder %s131, %s134
    %p143 = scmp.eq.s32.totalorder %s16, 1
    %p144 = por %p142, %p143
    %p145 = scmp.ne.s32.totalorder %s134, %s135
    %p146 = scmp.eq.s32.totalorder %s16, 0
    %p147 = por %p145, %p146
    %p148 = scmp.ne.s32.totalorder %s134, %s135
    %p149 = scmp.eq.s32.totalorder %s17, 1
    %p150 = por %p148, %p149
    %p152 = scmp.ne.s32.totalorder %s135, %s151
    %p153 = scmp.eq.s32.totalorder %s17, 0
    %p154 = por %p152, %p153
    %p155 = scmp.le.s32.totalorder 1, %s11
    %p156 = scmp.lt.s32.totalorder %s11, 3
    %p157 = pnand %p155, %p156
    %p158 = pneg %p157
    // Predicated region
    $region9: #{tpu_custom_call.1} parent=5 // pred_check
      _
    $region10: #{tpu_custom_call.1} parent=5 // pred_check_branch
      %160 = sbr.rel (%p157) target = $region12
    $region11: #{tpu_custom_call.1} parent=5 // pred_region
      %s161 = ssub.s32 %s11, 1
      // Predicated region
      $region13: #{tpu_custom_call.1} parent=11 // pred_check
        %p162 = pneg %p58
      $region14: #{tpu_custom_call.1} parent=11 // pred_check_branch
        %164 = sbr.rel (%p162) target = $region16
      $region15: #{tpu_custom_call.1} parent=11 // pred_region
        _
      $region16: #{tpu_custom_call.1} parent=11 // pred_fallthru
        _
      // Predicated region
      $region17: #{tpu_custom_call.1} parent=11 // pred_check
        %p165 = pneg %p79
      $region18: #{tpu_custom_call.1} parent=11 // pred_check_branch
        %167 = sbr.rel (%p165) target = $region20
      $region19: #{tpu_custom_call.1} parent=11 // pred_region
        _
      $region20: #{tpu_custom_call.1} parent=11 // pred_fallthru
        _
      // Predicated region
      $region21: #{tpu_custom_call.1} parent=11 // pred_check
        %p168 = pneg %p100
      $region22: #{tpu_custom_call.1} parent=11 // pred_check_branch
        %170 = sbr.rel (%p168) target = $region24
      $region23: #{tpu_custom_call.1} parent=11 // pred_region
        _
      $region24: #{tpu_custom_call.1} parent=11 // pred_fallthru
        _
      // Predicated region
      $region25: #{tpu_custom_call.1} parent=11 // pred_check
        %p171 = pneg %p121
      $region26: #{tpu_custom_call.1} parent=11 // pred_check_branch
        %173 = sbr.rel (%p171) target = $region28
      $region27: #{tpu_custom_call.1} parent=11 // pred_region
        _
      $region28: #{tpu_custom_call.1} parent=11 // pred_fallthru
        _
    $region12: #{tpu_custom_call.1} parent=5 // pred_fallthru
      _
    %p174 = scmp.lt.s32.totalorder %s11, 2
    // Predicated region
    $region29: #{tpu_custom_call.1} parent=5 // pred_check
      %p175 = pneg %p174
    $region30: #{tpu_custom_call.1} parent=5 // pred_check_branch
      %177 = sbr.rel (%p175) target = $region32
    $region31: #{tpu_custom_call.1} parent=5 // pred_region
      // Predicated region
      $region33: #{tpu_custom_call.1} parent=31 // pred_check
        %p178 = pneg %p31
      $region34: #{tpu_custom_call.1} parent=31 // pred_check_branch
        %180 = sbr.rel (%p178) target = $region36
      $region35: #{tpu_custom_call.1} parent=31 // pred_region
        %p181 = scmp.lt.s32.totalorder %s11, 1
        %s182 = scalar_select %p181, %s11, 1
        %s183 = smul.addr %s182, 32
        %s184 = smul.addr %s183, 4
        %s185 = scalar_lea.vmem %s0, %s184
      $region36: #{tpu_custom_call.1} parent=31 // pred_fallthru
        _
    $region32: #{tpu_custom_call.1} parent=5 // pred_fallthru
      _
    %p186 = scmp.le.s32.totalorder 1, %s11
    %p187 = scmp.lt.s32.totalorder %s11, 3
    %p188 = pnand %p186, %p187
    %p189 = pneg %p188
    // Predicated region
    $region37: #{tpu_custom_call.1} parent=5 // pred_check
      _
    $region38: #{tpu_custom_call.1} parent=5 // pred_check_branch
      %191 = sbr.rel (%p188) target = $region40
    $region39: #{tpu_custom_call.1} parent=5 // pred_region
      %s192 = ssub.s32 %s11, 1
      %p193 = scmp.lt.s32.totalorder %s16, 1
      %s194 = scalar_select %p193, %s16, 1
      %s195 = smul.addr %s194, 32
      %s196 = smul.addr %s195, 4
      %s197 = scalar_lea.vmem %s0, %s196
      %p198 = pneg %p37
      %p199 = pneg %p34
      %p200 = pneg %p58
      %p201 = pneg %p55
      %p202 = pneg %p79
      %p203 = pneg %p76
      %p204 = pneg %p100
      %p205 = pneg %p97
      %p206 = pneg %p121
      %p207 = pneg %p118
      %p208 = pneg %p147
      %p209 = pneg %p144
      %p210 = scmp.lt.s32.totalorder %s16, 1
      %s211 = scalar_select %p210, %s16, 1
      %s212 = smul.addr %s211, 32
      %s213 = smul.addr %s212, 8
      %s214 = scalar_lea.vmem %s5, %s213
      %p215 = scmp.lt.s32.totalorder %s16, 1
      %s216 = scalar_select %p215, %s16, 1
      %s217 = smul.addr %s216, 32
      %s218 = smul.addr %s217, 4
      %s219 = scalar_lea.vmem %s0, %s218
      %p220 = scmp.lt.s32.totalorder %s16, 1
      %s221 = scalar_select %p220, %s16, 1
      %s222 = smul.addr %s221, 32
      %s223 = smul.addr %s222, 8
      %s224 = scalar_lea.vmem %s5, %s223
      %vm226 = vcmask 64512
      %227 = vst.msk [vmem:[#allocation2] sm:$0xff] %vm226, 0.0
      %228 = vst.msk [vmem:[#allocation2 + $0x8] sm:$0xff] %vm226, 0.0
      %vm229 = vcmask 58368
      %230 = vst.msk [vmem:[#allocation2 + $0x10] sm:$0x3] %vm229, 0.0
      %231 = vst.msk [vmem:[#allocation2 + $0x18] sm:$0xff] %vm226, 0.0
      %232 = vst.msk [vmem:[#allocation2 + $0x20] sm:$0xff] %vm226, 0.0
      %233 = vst.msk [vmem:[#allocation2 + $0x28] sm:$0x3] %vm229, 0.0
      %234 = vst.msk [vmem:[#allocation2 + $0x30] sm:$0xff] %vm226, 0.0
      %235 = vst.msk [vmem:[#allocation2 + $0x38] sm:$0xff] %vm226, 0.0
      %236 = vst.msk [vmem:[#allocation2 + $0x40] sm:$0x3] %vm229, 0.0
      %237 = vst.msk [vmem:[#allocation2 + $0x48] sm:$0xff] %vm226, 0.0
      %238 = vst.msk [vmem:[#allocation2 + $0x50] sm:$0xff] %vm226, 0.0
      %239 = vst.msk [vmem:[#allocation2 + $0x58] sm:$0x3] %vm229, 0.0
      %240 = vst.msk [vmem:[#allocation2 + $0x60] sm:$0xff] %vm226, 0.0
      %241 = vst.msk [vmem:[#allocation2 + $0x68] sm:$0xff] %vm226, 0.0
      %242 = vst.msk [vmem:[#allocation2 + $0x70] sm:$0x3] %vm229, 0.0
      %243 = vst.msk [vmem:[#allocation2 + $0x78] sm:$0xff] %vm226, 0.0
      %244 = vst.msk [vmem:[#allocation2 + $0x80] sm:$0xff] %vm226, 0.0
      %245 = vst.msk [vmem:[#allocation2 + $0x88] sm:$0x3] %vm229, 0.0
      %246 = vst.msk [vmem:[#allocation2 + $0x90] sm:$0xff] %vm226, 0.0
      %247 = vst.msk [vmem:[#allocation2 + $0x98] sm:$0xff] %vm226, 0.0
      %248 = vst.msk [vmem:[#allocation2 + $0xa0] sm:$0x3] %vm229, 0.0
      %249 = vst.msk [vmem:[#allocation2 + $0xa8] sm:$0xff] %vm226, 0.0
      %250 = vst.msk [vmem:[#allocation2 + $0xb0] sm:$0xff] %vm226, 0.0
      %251 = vst.msk [vmem:[#allocation2 + $0xb8] sm:$0x3] %vm229, 0.0
      %252 = vst.msk [vmem:[#allocation2 + $0xc0] sm:$0xff] %vm226, 0.0
      %253 = vst.msk [vmem:[#allocation2 + $0xc8] sm:$0xff] %vm226, 0.0
      %254 = vst.msk [vmem:[#allocation2 + $0xd0] sm:$0x3] %vm229, 0.0
      %255 = vst.msk [vmem:[#allocation2 + $0xd8] sm:$0xff] %vm226, 0.0
      %256 = vst.msk [vmem:[#allocation2 + $0xe0] sm:$0xff] %vm226, 0.0
      %257 = vst.msk [vmem:[#allocation2 + $0xe8] sm:$0x3] %vm229, 0.0
      %258 = vst.msk [vmem:[#allocation2 + $0xf0] sm:$0xff] %vm226, 0.0
      %259 = vst.msk [vmem:[#allocation2 + $0xf8] sm:$0xff] %vm226, 0.0
      %260 = vst.msk [vmem:[#allocation2 + $0x100] sm:$0x3] %vm229, 0.0
      %261 = vst.msk [vmem:[#allocation2 + $0x108] sm:$0xff] %vm226, 0.0
      %262 = vst.msk [vmem:[#allocation2 + $0x110] sm:$0xff] %vm226, 0.0
      %263 = vst.msk [vmem:[#allocation2 + $0x118] sm:$0x3] %vm229, 0.0
      %264 = vst.msk [vmem:[#allocation2 + $0x120] sm:$0xff] %vm226, 0.0
      %265 = vst.msk [vmem:[#allocation2 + $0x128] sm:$0xff] %vm226, 0.0
      %266 = vst.msk [vmem:[#allocation2 + $0x130] sm:$0x3] %vm229, 0.0
      %267 = vst.msk [vmem:[#allocation2 + $0x138] sm:$0xff] %vm226, 0.0
      %268 = vst.msk [vmem:[#allocation2 + $0x140] sm:$0xff] %vm226, 0.0
      %269 = vst.msk [vmem:[#allocation2 + $0x148] sm:$0x3] %vm229, 0.0
      %270 = vst.msk [vmem:[#allocation2 + $0x150] sm:$0xff] %vm226, 0.0
      %271 = vst.msk [vmem:[#allocation2 + $0x158] sm:$0xff] %vm226, 0.0
      %272 = vst.msk [vmem:[#allocation2 + $0x160] sm:$0x3] %vm229, 0.0
      %273 = vst.msk [vmem:[#allocation2 + $0x168] sm:$0xff] %vm226, 0.0
      %274 = vst.msk [vmem:[#allocation2 + $0x170] sm:$0xff] %vm226, 0.0
      %275 = vst.msk [vmem:[#allocation2 + $0x178] sm:$0x3] %vm229, 0.0
      %276 = vst.msk [vmem:[#allocation2 + $0x180] sm:$0xff] %vm226, 0.0
      %277 = vst.msk [vmem:[#allocation2 + $0x188] sm:$0xff] %vm226, 0.0
      %278 = vst.msk [vmem:[#allocation2 + $0x190] sm:$0x3] %vm229, 0.0
      %279 = vst.msk [vmem:[#allocation2 + $0x198] sm:$0xff] %vm226, 0.0
      %280 = vst.msk [vmem:[#allocation2 + $0x1a0] sm:$0xff] %vm226, 0.0
      %281 = vst.msk [vmem:[#allocation2 + $0x1a8] sm:$0x3] %vm229, 0.0
      %v282 = vld [vmem:[%s219] sm:$0xf]
      %v283 = vld [vmem:[%s219 + $0x4] sm:$0xf]
      %v284 = vld [vmem:[%s219 + $0x8] sm:$0xf]
      %v285 = vld [vmem:[%s219 + $0xc] sm:$0xf]
      %v286 = vld [vmem:[%s219 + $0x10] sm:$0xf]
      %v287 = vld [vmem:[%s219 + $0x14] sm:$0xf]
      %v288 = vld [vmem:[%s219 + $0x18] sm:$0xf]
      %v289 = vld [vmem:[%s219 + $0x1c] sm:$0xf]
      %v290 = vld [vmem:[%s219 + $0x20] sm:$0xf]
      %v291 = vld [vmem:[%s219 + $0x24] sm:$0xf]
      %v292 = vld [vmem:[%s219 + $0x28] sm:$0xf]
      %v293 = vld [vmem:[%s219 + $0x2c] sm:$0xf]
      %v294 = vld [vmem:[%s219 + $0x30] sm:$0xf]
      %v295 = vld [vmem:[%s219 + $0x34] sm:$0xf]
      %v296 = vld [vmem:[%s219 + $0x38] sm:$0xf]
      %v297 = vld [vmem:[%s219 + $0x3c] sm:$0xf]
      %v298 = vld [vmem:[%s219 + $0x40] sm:$0xf]
      %v299 = vld [vmem:[%s219 + $0x44] sm:$0xf]
      %v300 = vld [vmem:[%s219 + $0x48] sm:$0xf]
      %v301 = vld [vmem:[%s219 + $0x4c] sm:$0xf]
      %v302 = vld [vmem:[%s219 + $0x50] sm:$0xf]
      %v303 = vld [vmem:[%s219 + $0x54] sm:$0xf]
      %v304 = vld [vmem:[%s219 + $0x58] sm:$0xf]
      %v305 = vld [vmem:[%s219 + $0x5c] sm:$0xf]
      %v306 = vld [vmem:[%s219 + $0x60] sm:$0xf]
      %v307 = vld [vmem:[%s219 + $0x64] sm:$0xf]
      %v308 = vld [vmem:[%s219 + $0x68] sm:$0xf]
      %v309 = vld [vmem:[%s219 + $0x6c] sm:$0xf]
      %v310 = vld [vmem:[%s219 + $0x70] sm:$0xf]
      %v311 = vld [vmem:[%s219 + $0x74] sm:$0xf]
      %v312 = vld [vmem:[%s219 + $0x78] sm:$0xf]
      %v313 = vld [vmem:[%s219 + $0x7c] sm:$0xf]
      %v314 = vunpack.c.l.bf16 %v282
      %v315 = vunpack.c.l.bf16 %v283
      %v316 = vunpack.c.l.bf16 %v284
      %v317 = vunpack.c.l.bf16 %v285
      %v318 = vunpack.c.l.bf16 %v286
      %v319 = vunpack.c.l.bf16 %v287
      %v320 = vunpack.c.l.bf16 %v288
      %v321 = vunpack.c.l.bf16 %v289
      %v322 = vunpack.c.l.bf16 %v290
      %v323 = vunpack.c.l.bf16 %v291
      %v324 = vunpack.c.l.bf16 %v292
      %v325 = vunpack.c.l.bf16 %v293
      %v326 = vunpack.c.l.bf16 %v294
      %v327 = vunpack.c.l.bf16 %v295
      %v328 = vunpack.c.l.bf16 %v296
      %v329 = vunpack.c.l.bf16 %v297
      %v330 = vunpack.c.l.bf16 %v298
      %v331 = vunpack.c.l.bf16 %v299
      %v332 = vunpack.c.l.bf16 %v300
      %v333 = vunpack.c.l.bf16 %v301
      %v334 = vunpack.c.l.bf16 %v302
      %v335 = vunpack.c.l.bf16 %v303
      %v336 = vunpack.c.l.bf16 %v304
      %v337 = vunpack.c.l.bf16 %v305
      %v338 = vunpack.c.l.bf16 %v306
      %v339 = vunpack.c.l.bf16 %v307
      %v340 = vunpack.c.l.bf16 %v308
      %v341 = vunpack.c.l.bf16 %v309
      %v342 = vunpack.c.l.bf16 %v310
      %v343 = vunpack.c.l.bf16 %v311
      %v344 = vunpack.c.l.bf16 %v312
      %v345 = vunpack.c.l.bf16 %v313
      %s346 = scalar_lea.vmem [#allocation2], 24
      %347 = vst.msk [vmem:[%s346 + $0x1] sm:$0xff] %vm226, %v314
      %348 = vst.msk [vmem:[%s346 + $0x9] sm:$0xff] %vm226, %v315
      %349 = vst.msk [vmem:[%s346 + $0x19] sm:$0xff] %vm226, %v316
      %350 = vst.msk [vmem:[%s346 + $0x21] sm:$0xff] %vm226, %v317
      %351 = vst.msk [vmem:[%s346 + $0x31] sm:$0xff] %vm226, %v318
      %352 = vst.msk [vmem:[%s346 + $0x39] sm:$0xff] %vm226, %v319
      %353 = vst.msk [vmem:[%s346 + $0x49] sm:$0xff] %vm226, %v320
      %354 = vst.msk [vmem:[%s346 + $0x51] sm:$0xff] %vm226, %v321
      %355 = vst.msk [vmem:[%s346 + $0x61] sm:$0xff] %vm226, %v322
      %356 = vst.msk [vmem:[%s346 + $0x69] sm:$0xff] %vm226, %v323
      %357 = vst.msk [vmem:[%s346 + $0x79] sm:$0xff] %vm226, %v324
      %358 = vst.msk [vmem:[%s346 + $0x81] sm:$0xff] %vm226, %v325
      %359 = vst.msk [vmem:[%s346 + $0x91] sm:$0xff] %vm226, %v326
      %360 = vst.msk [vmem:[%s346 + $0x99] sm:$0xff] %vm226, %v327
      %361 = vst.msk [vmem:[%s346 + $0xa9] sm:$0xff] %vm226, %v328
      %362 = vst.msk [vmem:[%s346 + $0xb1] sm:$0xff] %vm226, %v329
      %363 = vst.msk [vmem:[%s346 + $0xc1] sm:$0xff] %vm226, %v330
      %364 = vst.msk [vmem:[%s346 + $0xc9] sm:$0xff] %vm226, %v331
      %365 = vst.msk [vmem:[%s346 + $0xd9] sm:$0xff] %vm226, %v332
      %366 = vst.msk [vmem:[%s346 + $0xe1] sm:$0xff] %vm226, %v333
      %367 = vst.msk [vmem:[%s346 + $0xf1] sm:$0xff] %vm226, %v334
      %368 = vst.msk [vmem:[%s346 + $0xf9] sm:$0xff] %vm226, %v335
      %369 = vst.msk [vmem:[%s346 + $0x109] sm:$0xff] %vm226, %v336
      %370 = vst.msk [vmem:[%s346 + $0x111] sm:$0xff] %vm226, %v337
      %371 = vst.msk [vmem:[%s346 + $0x121] sm:$0xff] %vm226, %v338
      %372 = vst.msk [vmem:[%s346 + $0x129] sm:$0xff] %vm226, %v339
      %373 = vst.msk [vmem:[%s346 + $0x139] sm:$0xff] %vm226, %v340
      %374 = vst.msk [vmem:[%s346 + $0x141] sm:$0xff] %vm226, %v341
      %375 = vst.msk [vmem:[%s346 + $0x151] sm:$0xff] %vm226, %v342
      %376 = vst.msk [vmem:[%s346 + $0x159] sm:$0xff] %vm226, %v343
      %377 = vst.msk [vmem:[%s346 + $0x169] sm:$0xff] %vm226, %v344
      %378 = vst.msk [vmem:[%s346 + $0x171] sm:$0xff] %vm226, %v345
      %v379 = vld [vmem:[#allocation2] sm:$0xff]
      %v380 = vld [vmem:[#allocation2 + $0x8] sm:$0xff]
      %v381 = vld [vmem:[#allocation2 + $0x18] sm:$0xff]
      %v382 = vld [vmem:[#allocation2 + $0x20] sm:$0xff]
      %v383 = vld [vmem:[#allocation2 + $0x30] sm:$0xff]
      %v384 = vld [vmem:[#allocation2 + $0x38] sm:$0xff]
      %v385 = vld [vmem:[#allocation2 + $0x48] sm:$0xff]
      %v386 = vld [vmem:[#allocation2 + $0x50] sm:$0xff]
      %v387 = vld [vmem:[#allocation2 + $0x60] sm:$0xff]
      %v388 = vld [vmem:[#allocation2 + $0x68] sm:$0xff]
      %v389 = vld [vmem:[#allocation2 + $0x78] sm:$0xff]
      %v390 = vld [vmem:[#allocation2 + $0x80] sm:$0xff]
      %v391 = vld [vmem:[#allocation2 + $0x90] sm:$0xff]
      %v392 = vld [vmem:[#allocation2 + $0x98] sm:$0xff]
      %v393 = vld [vmem:[#allocation2 + $0xa8] sm:$0xff]
      %v394 = vld [vmem:[#allocation2 + $0xb0] sm:$0xff]
      %v395 = vld [vmem:[#allocation2 + $0xc0] sm:$0xff]
      %v396 = vld [vmem:[#allocation2 + $0xc8] sm:$0xff]
      %v397 = vld [vmem:[#allocation2 + $0xd8] sm:$0xff]
      %v398 = vld [vmem:[#allocation2 + $0xe0] sm:$0xff]
      %v399 = vld [vmem:[#allocation2 + $0xf0] sm:$0xff]
      %v400 = vld [vmem:[#allocation2 + $0xf8] sm:$0xff]
      %v401 = vld [vmem:[#allocation2 + $0x108] sm:$0xff]
      %v402 = vld [vmem:[#allocation2 + $0x110] sm:$0xff]
      %v403 = vld [vmem:[#allocation2 + $0x120] sm:$0xff]
      %v404 = vld [vmem:[#allocation2 + $0x128] sm:$0xff]
      %v405 = vld [vmem:[#allocation2 + $0x138] sm:$0xff]
      %v406 = vld [vmem:[#allocation2 + $0x140] sm:$0xff]
      %v407 = vld [vmem:[#allocation2 + $0x150] sm:$0xff]
      %v408 = vld [vmem:[#allocation2 + $0x158] sm:$0xff]
      %v409 = vld [vmem:[#allocation2 + $0x168] sm:$0xff]
      %v410 = vld [vmem:[#allocation2 + $0x170] sm:$0xff]
      %v411 = vld [vmem:[#allocation2 + $0x1] sm:$0xff]
      %v412 = vld [vmem:[#allocation2 + $0x9] sm:$0xff]
      %v413 = vld [vmem:[#allocation2 + $0x19] sm:$0xff]
      %v414 = vld [vmem:[#allocation2 + $0x21] sm:$0xff]
      %v415 = vld [vmem:[#allocation2 + $0x31] sm:$0xff]
      %v416 = vld [vmem:[#allocation2 + $0x39] sm:$0xff]
      %v417 = vld [vmem:[#allocation2 + $0x49] sm:$0xff]
      %v418 = vld [vmem:[#allocation2 + $0x51] sm:$0xff]
      %v419 = vld [vmem:[#allocation2 + $0x61] sm:$0xff]
      %v420 = vld [vmem:[#allocation2 + $0x69] sm:$0xff]
      %v421 = vld [vmem:[#allocation2 + $0x79] sm:$0xff]
      %v422 = vld [vmem:[#allocation2 + $0x81] sm:$0xff]
      %v423 = vld [vmem:[#allocation2 + $0x91] sm:$0xff]
      %v424 = vld [vmem:[#allocation2 + $0x99] sm:$0xff]
      %v425 = vld [vmem:[#allocation2 + $0xa9] sm:$0xff]
      %v426 = vld [vmem:[#allocation2 + $0xb1] sm:$0xff]
      %v427 = vld [vmem:[#allocation2 + $0xc1] sm:$0xff]
      %v428 = vld [vmem:[#allocation2 + $0xc9] sm:$0xff]
      %v429 = vld [vmem:[#allocation2 + $0xd9] sm:$0xff]
      %v430 = vld [vmem:[#allocation2 + $0xe1] sm:$0xff]
      %v431 = vld [vmem:[#allocation2 + $0xf1] sm:$0xff]
      %v432 = vld [vmem:[#allocation2 + $0xf9] sm:$0xff]
      %v433 = vld [vmem:[#allocation2 + $0x109] sm:$0xff]
      %v434 = vld [vmem:[#allocation2 + $0x111] sm:$0xff]
      %v435 = vld [vmem:[#allocation2 + $0x121] sm:$0xff]
      %v436 = vld [vmem:[#allocation2 + $0x129] sm:$0xff]
      %v437 = vld [vmem:[#allocation2 + $0x139] sm:$0xff]
      %v438 = vld [vmem:[#allocation2 + $0x141] sm:$0xff]
      %v439 = vld [vmem:[#allocation2 + $0x151] sm:$0xff]
      %v440 = vld [vmem:[#allocation2 + $0x159] sm:$0xff]
      %v441 = vld [vmem:[#allocation2 + $0x169] sm:$0xff]
      %v442 = vld [vmem:[#allocation2 + $0x171] sm:$0xff]
      %v443 = vld [vmem:[#allocation2 + $0x2] sm:$0xff]
      %v444 = vld [vmem:[#allocation2 + $0xa] sm:$0xff]
      %v445 = vld [vmem:[#allocation2 + $0x1a] sm:$0xff]
      %v446 = vld [vmem:[#allocation2 + $0x22] sm:$0xff]
      %v447 = vld [vmem:[#allocation2 + $0x32] sm:$0xff]
      %v448 = vld [vmem:[#allocation2 + $0x3a] sm:$0xff]
      %v449 = vld [vmem:[#allocation2 + $0x4a] sm:$0xff]
      %v450 = vld [vmem:[#allocation2 + $0x52] sm:$0xff]
      %v451 = vld [vmem:[#allocation2 + $0x62] sm:$0xff]
      %v452 = vld [vmem:[#allocation2 + $0x6a] sm:$0xff]
      %v453 = vld [vmem:[#allocation2 + $0x7a] sm:$0xff]
      %v454 = vld [vmem:[#allocation2 + $0x82] sm:$0xff]
      %v455 = vld [vmem:[#allocation2 + $0x92] sm:$0xff]
      %v456 = vld [vmem:[#allocation2 + $0x9a] sm:$0xff]
      %v457 = vld [vmem:[#allocation2 + $0xaa] sm:$0xff]
      %v458 = vld [vmem:[#allocation2 + $0xb2] sm:$0xff]
      %v459 = vld [vmem:[#allocation2 + $0xc2] sm:$0xff]
      %v460 = vld [vmem:[#allocation2 + $0xca] sm:$0xff]
      %v461 = vld [vmem:[#allocation2 + $0xda] sm:$0xff]
      %v462 = vld [vmem:[#allocation2 + $0xe2] sm:$0xff]
      %v463 = vld [vmem:[#allocation2 + $0xf2] sm:$0xff]
      %v464 = vld [vmem:[#allocation2 + $0xfa] sm:$0xff]
      %v465 = vld [vmem:[#allocation2 + $0x10a] sm:$0xff]
      %v466 = vld [vmem:[#allocation2 + $0x112] sm:$0xff]
      %v467 = vld [vmem:[#allocation2 + $0x122] sm:$0xff]
      %v468 = vld [vmem:[#allocation2 + $0x12a] sm:$0xff]
      %v469 = vld [vmem:[#allocation2 + $0x13a] sm:$0xff]
      %v470 = vld [vmem:[#allocation2 + $0x142] sm:$0xff]
      %v471 = vld [vmem:[#allocation2 + $0x152] sm:$0xff]
      %v472 = vld [vmem:[#allocation2 + $0x15a] sm:$0xff]
      %v473 = vld [vmem:[#allocation2 + $0x16a] sm:$0xff]
      %v474 = vld [vmem:[#allocation2 + $0x172] sm:$0xff]
      %v475 = vld [vmem:[%s346] sm:$0xff]
      %v476 = vld [vmem:[%s346 + $0x8] sm:$0xff]
      %v477 = vld [vmem:[%s346 + $0x18] sm:$0xff]
      %v478 = vld [vmem:[%s346 + $0x20] sm:$0xff]
      %v479 = vld [vmem:[%s346 + $0x30] sm:$0xff]
      %v480 = vld [vmem:[%s346 + $0x38] sm:$0xff]
      %v481 = vld [vmem:[%s346 + $0x48] sm:$0xff]
      %v482 = vld [vmem:[%s346 + $0x50] sm:$0xff]
      %v483 = vld [vmem:[%s346 + $0x60] sm:$0xff]
      %v484 = vld [vmem:[%s346 + $0x68] sm:$0xff]
      %v485 = vld [vmem:[%s346 + $0x78] sm:$0xff]
      %v486 = vld [vmem:[%s346 + $0x80] sm:$0xff]
      %v487 = vld [vmem:[%s346 + $0x90] sm:$0xff]
      %v488 = vld [vmem:[%s346 + $0x98] sm:$0xff]
      %v489 = vld [vmem:[%s346 + $0xa8] sm:$0xff]
      %v490 = vld [vmem:[%s346 + $0xb0] sm:$0xff]
      %v491 = vld [vmem:[%s346 + $0xc0] sm:$0xff]
      %v492 = vld [vmem:[%s346 + $0xc8] sm:$0xff]
      %v493 = vld [vmem:[%s346 + $0xd8] sm:$0xff]
      %v494 = vld [vmem:[%s346 + $0xe0] sm:$0xff]
      %v495 = vld [vmem:[%s346 + $0xf0] sm:$0xff]
      %v496 = vld [vmem:[%s346 + $0xf8] sm:$0xff]
      %v497 = vld [vmem:[%s346 + $0x108] sm:$0xff]
      %v498 = vld [vmem:[%s346 + $0x110] sm:$0xff]
      %v499 = vld [vmem:[%s346 + $0x120] sm:$0xff]
      %v500 = vld [vmem:[%s346 + $0x128] sm:$0xff]
      %v501 = vld [vmem:[%s346 + $0x138] sm:$0xff]
      %v502 = vld [vmem:[%s346 + $0x140] sm:$0xff]
      %v503 = vld [vmem:[%s346 + $0x150] sm:$0xff]
      %v504 = vld [vmem:[%s346 + $0x158] sm:$0xff]
      %v505 = vld [vmem:[%s346 + $0x168] sm:$0xff]
      %v506 = vld [vmem:[%s346 + $0x170] sm:$0xff]
      %v507 = vld [vmem:[%s346 + $0x1] sm:$0xff]
      %v508 = vld [vmem:[%s346 + $0x9] sm:$0xff]
      %v509 = vld [vmem:[%s346 + $0x19] sm:$0xff]
      %v510 = vld [vmem:[%s346 + $0x21] sm:$0xff]
      %v511 = vld [vmem:[%s346 + $0x31] sm:$0xff]
      %v512 = vld [vmem:[%s346 + $0x39] sm:$0xff]
      %v513 = vld [vmem:[%s346 + $0x49] sm:$0xff]
      %v514 = vld [vmem:[%s346 + $0x51] sm:$0xff]
      %v515 = vld [vmem:[%s346 + $0x61] sm:$0xff]
      %v516 = vld [vmem:[%s346 + $0x69] sm:$0xff]
      %v517 = vld [vmem:[%s346 + $0x79] sm:$0xff]
      %v518 = vld [vmem:[%s346 + $0x81] sm:$0xff]
      %v519 = vld [vmem:[%s346 + $0x91] sm:$0xff]
      %v520 = vld [vmem:[%s346 + $0x99] sm:$0xff]
      %v521 = vld [vmem:[%s346 + $0xa9] sm:$0xff]
      %v522 = vld [vmem:[%s346 + $0xb1] sm:$0xff]
      %v523 = vld [vmem:[%s346 + $0xc1] sm:$0xff]
      %v524 = vld [vmem:[%s346 + $0xc9] sm:$0xff]
      %v525 = vld [vmem:[%s346 + $0xd9] sm:$0xff]
      %v526 = vld [vmem:[%s346 + $0xe1] sm:$0xff]
      %v527 = vld [vmem:[%s346 + $0xf1] sm:$0xff]
      %v528 = vld [vmem:[%s346 + $0xf9] sm:$0xff]
      %v529 = vld [vmem:[%s346 + $0x109] sm:$0xff]
      %v530 = vld [vmem:[%s346 + $0x111] sm:$0xff]
      %v531 = vld [vmem:[%s346 + $0x121] sm:$0xff]
      %v532 = vld [vmem:[%s346 + $0x129] sm:$0xff]
      %v533 = vld [vmem:[%s346 + $0x139] sm:$0xff]
      %v534 = vld [vmem:[%s346 + $0x141] sm:$0xff]
      %v535 = vld [vmem:[%s346 + $0x151] sm:$0xff]
      %v536 = vld [vmem:[%s346 + $0x159] sm:$0xff]
      %v537 = vld [vmem:[%s346 + $0x169] sm:$0xff]
      %v538 = vld [vmem:[%s346 + $0x171] sm:$0xff]
      %v539 = vld [vmem:[%s346 + $0x2] sm:$0xff]
      %v540 = vld [vmem:[%s346 + $0xa] sm:$0xff]
      %v541 = vld [vmem:[%s346 + $0x1a] sm:$0xff]
      %v542 = vld [vmem:[%s346 + $0x22] sm:$0xff]
      %v543 = vld [vmem:[%s346 + $0x32] sm:$0xff]
      %v544 = vld [vmem:[%s346 + $0x3a] sm:$0xff]
      %v545 = vld [vmem:[%s346 + $0x4a] sm:$0xff]
      %v546 = vld [vmem:[%s346 + $0x52] sm:$0xff]
      %v547 = vld [vmem:[%s346 + $0x62] sm:$0xff]
      %v548 = vld [vmem:[%s346 + $0x6a] sm:$0xff]
      %v549 = vld [vmem:[%s346 + $0x7a] sm:$0xff]
      %v550 = vld [vmem:[%s346 + $0x82] sm:$0xff]
      %v551 = vld [vmem:[%s346 + $0x92] sm:$0xff]
      %v552 = vld [vmem:[%s346 + $0x9a] sm:$0xff]
      %v553 = vld [vmem:[%s346 + $0xaa] sm:$0xff]
      %v554 = vld [vmem:[%s346 + $0xb2] sm:$0xff]
      %v555 = vld [vmem:[%s346 + $0xc2] sm:$0xff]
      %v556 = vld [vmem:[%s346 + $0xca] sm:$0xff]
      %v557 = vld [vmem:[%s346 + $0xda] sm:$0xff]
      %v558 = vld [vmem:[%s346 + $0xe2] sm:$0xff]
      %v559 = vld [vmem:[%s346 + $0xf2] sm:$0xff]
      %v560 = vld [vmem:[%s346 + $0xfa] sm:$0xff]
      %v561 = vld [vmem:[%s346 + $0x10a] sm:$0xff]
      %v562 = vld [vmem:[%s346 + $0x112] sm:$0xff]
      %v563 = vld [vmem:[%s346 + $0x122] sm:$0xff]
      %v564 = vld [vmem:[%s346 + $0x12a] sm:$0xff]
      %v565 = vld [vmem:[%s346 + $0x13a] sm:$0xff]
      %v566 = vld [vmem:[%s346 + $0x142] sm:$0xff]
      %v567 = vld [vmem:[%s346 + $0x152] sm:$0xff]
      %v568 = vld [vmem:[%s346 + $0x15a] sm:$0xff]
      %v569 = vld [vmem:[%s346 + $0x16a] sm:$0xff]
      %v570 = vld [vmem:[%s346 + $0x172] sm:$0xff]
      %s571 = scalar_lea.vmem [#allocation2], 48
      %v572 = vld [vmem:[%s571] sm:$0xff]
      %v573 = vld [vmem:[%s571 + $0x8] sm:$0xff]
      %v574 = vld [vmem:[%s571 + $0x18] sm:$0xff]
      %v575 = vld [vmem:[%s571 + $0x20] sm:$0xff]
      %v576 = vld [vmem:[%s571 + $0x30] sm:$0xff]
      %v577 = vld [vmem:[%s571 + $0x38] sm:$0xff]
      %v578 = vld [vmem:[%s571 + $0x48] sm:$0xff]
      %v579 = vld [vmem:[%s571 + $0x50] sm:$0xff]
      %v580 = vld [vmem:[%s571 + $0x60] sm:$0xff]
      %v581 = vld [vmem:[%s571 + $0x68] sm:$0xff]
      %v582 = vld [vmem:[%s571 + $0x78] sm:$0xff]
      %v583 = vld [vmem:[%s571 + $0x80] sm:$0xff]
      %v584 = vld [vmem:[%s571 + $0x90] sm:$0xff]
      %v585 = vld [vmem:[%s571 + $0x98] sm:$0xff]
      %v586 = vld [vmem:[%s571 + $0xa8] sm:$0xff]
      %v587 = vld [vmem:[%s571 + $0xb0] sm:$0xff]
      %v588 = vld [vmem:[%s571 + $0xc0] sm:$0xff]
      %v589 = vld [vmem:[%s571 + $0xc8] sm:$0xff]
      %v590 = vld [vmem:[%s571 + $0xd8] sm:$0xff]
      %v591 = vld [vmem:[%s571 + $0xe0] sm:$0xff]
      %v592 = vld [vmem:[%s571 + $0xf0] sm:$0xff]
      %v593 = vld [vmem:[%s571 + $0xf8] sm:$0xff]
      %v594 = vld [vmem:[%s571 + $0x108] sm:$0xff]
      %v595 = vld [vmem:[%s571 + $0x110] sm:$0xff]
      %v596 = vld [vmem:[%s571 + $0x120] sm:$0xff]
      %v597 = vld [vmem:[%s571 + $0x128] sm:$0xff]
      %v598 = vld [vmem:[%s571 + $0x138] sm:$0xff]
      %v599 = vld [vmem:[%s571 + $0x140] sm:$0xff]
      %v600 = vld [vmem:[%s571 + $0x150] sm:$0xff]
      %v601 = vld [vmem:[%s571 + $0x158] sm:$0xff]
      %v602 = vld [vmem:[%s571 + $0x168] sm:$0xff]
      %v603 = vld [vmem:[%s571 + $0x170] sm:$0xff]
      %v604 = vld [vmem:[%s571 + $0x1] sm:$0xff]
      %v605 = vld [vmem:[%s571 + $0x9] sm:$0xff]
      %v606 = vld [vmem:[%s571 + $0x19] sm:$0xff]
      %v607 = vld [vmem:[%s571 + $0x21] sm:$0xff]
      %v608 = vld [vmem:[%s571 + $0x31] sm:$0xff]
      %v609 = vld [vmem:[%s571 + $0x39] sm:$0xff]
      %v610 = vld [vmem:[%s571 + $0x49] sm:$0xff]
      %v611 = vld [vmem:[%s571 + $0x51] sm:$0xff]
      %v612 = vld [vmem:[%s571 + $0x61] sm:$0xff]
      %v613 = vld [vmem:[%s571 + $0x69] sm:$0xff]
      %v614 = vld [vmem:[%s571 + $0x79] sm:$0xff]
      %v615 = vld [vmem:[%s571 + $0x81] sm:$0xff]
      %v616 = vld [vmem:[%s571 + $0x91] sm:$0xff]
      %v617 = vld [vmem:[%s571 + $0x99] sm:$0xff]
      %v618 = vld [vmem:[%s571 + $0xa9] sm:$0xff]
      %v619 = vld [vmem:[%s571 + $0xb1] sm:$0xff]
      %v620 = vld [vmem:[%s571 + $0xc1] sm:$0xff]
      %v621 = vld [vmem:[%s571 + $0xc9] sm:$0xff]
      %v622 = vld [vmem:[%s571 + $0xd9] sm:$0xff]
      %v623 = vld [vmem:[%s571 + $0xe1] sm:$0xff]
      %v624 = vld [vmem:[%s571 + $0xf1] sm:$0xff]
      %v625 = vld [vmem:[%s571 + $0xf9] sm:$0xff]
      %v626 = vld [vmem:[%s571 + $0x109] sm:$0xff]
      %v627 = vld [vmem:[%s571 + $0x111] sm:$0xff]
      %v628 = vld [vmem:[%s571 + $0x121] sm:$0xff]
      %v629 = vld [vmem:[%s571 + $0x129] sm:$0xff]
      %v630 = vld [vmem:[%s571 + $0x139] sm:$0xff]
      %v631 = vld [vmem:[%s571 + $0x141] sm:$0xff]
      %v632 = vld [vmem:[%s571 + $0x151] sm:$0xff]
      %v633 = vld [vmem:[%s571 + $0x159] sm:$0xff]
      %v634 = vld [vmem:[%s571 + $0x169] sm:$0xff]
      %v635 = vld [vmem:[%s571 + $0x171] sm:$0xff]
      %v636 = vld [vmem:[%s571 + $0x2] sm:$0xff]
      %v637 = vld [vmem:[%s571 + $0xa] sm:$0xff]
      %v638 = vld [vmem:[%s571 + $0x1a] sm:$0xff]
      %v639 = vld [vmem:[%s571 + $0x22] sm:$0xff]
      %v640 = vld [vmem:[%s571 + $0x32] sm:$0xff]
      %v641 = vld [vmem:[%s571 + $0x3a] sm:$0xff]
      %v642 = vld [vmem:[%s571 + $0x4a] sm:$0xff]
      %v643 = vld [vmem:[%s571 + $0x52] sm:$0xff]
      %v644 = vld [vmem:[%s571 + $0x62] sm:$0xff]
      %v645 = vld [vmem:[%s571 + $0x6a] sm:$0xff]
      %v646 = vld [vmem:[%s571 + $0x7a] sm:$0xff]
      %v647 = vld [vmem:[%s571 + $0x82] sm:$0xff]
      %v648 = vld [vmem:[%s571 + $0x92] sm:$0xff]
      %v649 = vld [vmem:[%s571 + $0x9a] sm:$0xff]
      %v650 = vld [vmem:[%s571 + $0xaa] sm:$0xff]
      %v651 = vld [vmem:[%s571 + $0xb2] sm:$0xff]
      %v652 = vld [vmem:[%s571 + $0xc2] sm:$0xff]
      %v653 = vld [vmem:[%s571 + $0xca] sm:$0xff]
      %v654 = vld [vmem:[%s571 + $0xda] sm:$0xff]
      %v655 = vld [vmem:[%s571 + $0xe2] sm:$0xff]
      %v656 = vld [vmem:[%s571 + $0xf2] sm:$0xff]
      %v657 = vld [vmem:[%s571 + $0xfa] sm:$0xff]
      %v658 = vld [vmem:[%s571 + $0x10a] sm:$0xff]
      %v659 = vld [vmem:[%s571 + $0x112] sm:$0xff]
      %v660 = vld [vmem:[%s571 + $0x122] sm:$0xff]
      %v661 = vld [vmem:[%s571 + $0x12a] sm:$0xff]
      %v662 = vld [vmem:[%s571 + $0x13a] sm:$0xff]
      %v663 = vld [vmem:[%s571 + $0x142] sm:$0xff]
      %v664 = vld [vmem:[%s571 + $0x152] sm:$0xff]
      %v665 = vld [vmem:[%s571 + $0x15a] sm:$0xff]
      %v666 = vld [vmem:[%s571 + $0x16a] sm:$0xff]
      %v667 = vld [vmem:[%s571 + $0x172] sm:$0xff]
      %700 = vrot.lane.b32.xlu0 %v411, 8
      %v701 = vpop.permute.xlu0 %700
      %702 = vrot.lane.b32.xlu0 %v412, 8
      %v703 = vpop.permute.xlu0 %702
      %704 = vrot.lane.b32.xlu0 %v413, 8
      %v705 = vpop.permute.xlu0 %704
      %706 = vrot.lane.b32.xlu0 %v414, 8
      %v707 = vpop.permute.xlu0 %706
      %708 = vrot.lane.b32.xlu0 %v415, 8
      %v709 = vpop.permute.xlu0 %708
      %710 = vrot.lane.b32.xlu0 %v416, 8
      %v711 = vpop.permute.xlu0 %710
      %712 = vrot.lane.b32.xlu0 %v417, 8
      %v713 = vpop.permute.xlu0 %712
      %714 = vrot.lane.b32.xlu0 %v418, 8
      %v715 = vpop.permute.xlu0 %714
      %716 = vrot.lane.b32.xlu0 %v419, 8
      %v717 = vpop.permute.xlu0 %716
      %718 = vrot.lane.b32.xlu0 %v420, 8
      %v719 = vpop.permute.xlu0 %718
      %720 = vrot.lane.b32.xlu0 %v421, 8
      %v721 = vpop.permute.xlu0 %720
      %722 = vrot.lane.b32.xlu0 %v422, 8
      %v723 = vpop.permute.xlu0 %722
      %724 = vrot.lane.b32.xlu0 %v423, 8
      %v725 = vpop.permute.xlu0 %724
      %726 = vrot.lane.b32.xlu0 %v424, 8
      %v727 = vpop.permute.xlu0 %726
      %728 = vrot.lane.b32.xlu0 %v425, 8
      %v729 = vpop.permute.xlu0 %728
      %730 = vrot.lane.b32.xlu0 %v426, 8
      %v731 = vpop.permute.xlu0 %730
      %732 = vrot.lane.b32.xlu0 %v427, 8
      %v733 = vpop.permute.xlu0 %732
      %734 = vrot.lane.b32.xlu0 %v428, 8
      %v735 = vpop.permute.xlu0 %734
      %736 = vrot.lane.b32.xlu0 %v429, 8
      %v737 = vpop.permute.xlu0 %736
      %738 = vrot.lane.b32.xlu0 %v430, 8
      %v739 = vpop.permute.xlu0 %738
      %740 = vrot.lane.b32.xlu0 %v431, 8
      %v741 = vpop.permute.xlu0 %740
      %742 = vrot.lane.b32.xlu0 %v432, 8
      %v743 = vpop.permute.xlu0 %742
      %744 = vrot.lane.b32.xlu0 %v433, 8
      %v745 = vpop.permute.xlu0 %744
      %746 = vrot.lane.b32.xlu0 %v434, 8
      %v747 = vpop.permute.xlu0 %746
      %748 = vrot.lane.b32.xlu0 %v435, 8
      %v749 = vpop.permute.xlu0 %748
      %750 = vrot.lane.b32.xlu0 %v436, 8
      %v751 = vpop.permute.xlu0 %750
      %752 = vrot.lane.b32.xlu0 %v437, 8
      %v753 = vpop.permute.xlu0 %752
      %754 = vrot.lane.b32.xlu0 %v438, 8
      %v755 = vpop.permute.xlu0 %754
      %756 = vrot.lane.b32.xlu0 %v439, 8
      %v757 = vpop.permute.xlu0 %756
      %758 = vrot.lane.b32.xlu0 %v440, 8
      %v759 = vpop.permute.xlu0 %758
      %760 = vrot.lane.b32.xlu0 %v441, 8
      %v761 = vpop.permute.xlu0 %760
      %762 = vrot.lane.b32.xlu0 %v442, 8
      %v763 = vpop.permute.xlu0 %762
      %828 = vrot.lane.b32.xlu0 %v443, 16
      %v829 = vpop.permute.xlu0 %828
      %830 = vrot.lane.b32.xlu0 %v444, 16
      %v831 = vpop.permute.xlu0 %830
      %832 = vrot.lane.b32.xlu0 %v445, 16
      %v833 = vpop.permute.xlu0 %832
      %834 = vrot.lane.b32.xlu0 %v446, 16
      %v835 = vpop.permute.xlu0 %834
      %836 = vrot.lane.b32.xlu0 %v447, 16
      %v837 = vpop.permute.xlu0 %836
      %838 = vrot.lane.b32.xlu0 %v448, 16
      %v839 = vpop.permute.xlu0 %838
      %840 = vrot.lane.b32.xlu0 %v449, 16
      %v841 = vpop.permute.xlu0 %840
      %842 = vrot.lane.b32.xlu0 %v450, 16
      %v843 = vpop.permute.xlu0 %842
      %844 = vrot.lane.b32.xlu0 %v451, 16
      %v845 = vpop.permute.xlu0 %844
      %846 = vrot.lane.b32.xlu0 %v452, 16
      %v847 = vpop.permute.xlu0 %846
      %848 = vrot.lane.b32.xlu0 %v453, 16
      %v849 = vpop.permute.xlu0 %848
      %850 = vrot.lane.b32.xlu0 %v454, 16
      %v851 = vpop.permute.xlu0 %850
      %852 = vrot.lane.b32.xlu0 %v455, 16
      %v853 = vpop.permute.xlu0 %852
      %854 = vrot.lane.b32.xlu0 %v456, 16
      %v855 = vpop.permute.xlu0 %854
      %856 = vrot.lane.b32.xlu0 %v457, 16
      %v857 = vpop.permute.xlu0 %856
      %858 = vrot.lane.b32.xlu0 %v458, 16
      %v859 = vpop.permute.xlu0 %858
      %860 = vrot.lane.b32.xlu0 %v459, 16
      %v861 = vpop.permute.xlu0 %860
      %862 = vrot.lane.b32.xlu0 %v460, 16
      %v863 = vpop.permute.xlu0 %862
      %864 = vrot.lane.b32.xlu0 %v461, 16
      %v865 = vpop.permute.xlu0 %864
      %866 = vrot.lane.b32.xlu0 %v462, 16
      %v867 = vpop.permute.xlu0 %866
      %868 = vrot.lane.b32.xlu0 %v463, 16
      %v869 = vpop.permute.xlu0 %868
      %870 = vrot.lane.b32.xlu0 %v464, 16
      %v871 = vpop.permute.xlu0 %870
      %872 = vrot.lane.b32.xlu0 %v465, 16
      %v873 = vpop.permute.xlu0 %872
      %874 = vrot.lane.b32.xlu0 %v466, 16
      %v875 = vpop.permute.xlu0 %874
      %876 = vrot.lane.b32.xlu0 %v467, 16
      %v877 = vpop.permute.xlu0 %876
      %878 = vrot.lane.b32.xlu0 %v468, 16
      %v879 = vpop.permute.xlu0 %878
      %880 = vrot.lane.b32.xlu0 %v469, 16
      %v881 = vpop.permute.xlu0 %880
      %882 = vrot.lane.b32.xlu0 %v470, 16
      %v883 = vpop.permute.xlu0 %882
      %884 = vrot.lane.b32.xlu0 %v471, 16
      %v885 = vpop.permute.xlu0 %884
      %886 = vrot.lane.b32.xlu0 %v472, 16
      %v887 = vpop.permute.xlu0 %886
      %888 = vrot.lane.b32.xlu0 %v473, 16
      %v889 = vpop.permute.xlu0 %888
      %890 = vrot.lane.b32.xlu0 %v474, 16
      %v891 = vpop.permute.xlu0 %890
      %956 = vrot.lane.b32.xlu0 %v475, 24
      %v957 = vpop.permute.xlu0 %956
      %958 = vrot.lane.b32.xlu0 %v476, 24
      %v959 = vpop.permute.xlu0 %958
      %960 = vrot.lane.b32.xlu0 %v477, 24
      %v961 = vpop.permute.xlu0 %960
      %962 = vrot.lane.b32.xlu0 %v478, 24
      %v963 = vpop.permute.xlu0 %962
      %964 = vrot.lane.b32.xlu0 %v479, 24
      %v965 = vpop.permute.xlu0 %964
      %966 = vrot.lane.b32.xlu0 %v480, 24
      %v967 = vpop.permute.xlu0 %966
      %968 = vrot.lane.b32.xlu0 %v481, 24
      %v969 = vpop.permute.xlu0 %968
      %970 = vrot.lane.b32.xlu0 %v482, 24
      %v971 = vpop.permute.xlu0 %970
      %972 = vrot.lane.b32.xlu0 %v483, 24
      %v973 = vpop.permute.xlu0 %972
      %974 = vrot.lane.b32.xlu0 %v484, 24
      %v975 = vpop.permute.xlu0 %974
      %976 = vrot.lane.b32.xlu0 %v485, 24
      %v977 = vpop.permute.xlu0 %976
      %978 = vrot.lane.b32.xlu0 %v486, 24
      %v979 = vpop.permute.xlu0 %978
      %980 = vrot.lane.b32.xlu0 %v487, 24
      %v981 = vpop.permute.xlu0 %980
      %982 = vrot.lane.b32.xlu0 %v488, 24
      %v983 = vpop.permute.xlu0 %982
      %984 = vrot.lane.b32.xlu0 %v489, 24
      %v985 = vpop.permute.xlu0 %984
      %986 = vrot.lane.b32.xlu0 %v490, 24
      %v987 = vpop.permute.xlu0 %986
      %988 = vrot.lane.b32.xlu0 %v491, 24
      %v989 = vpop.permute.xlu0 %988
      %990 = vrot.lane.b32.xlu0 %v492, 24
      %v991 = vpop.permute.xlu0 %990
      %992 = vrot.lane.b32.xlu0 %v493, 24
      %v993 = vpop.permute.xlu0 %992
      %994 = vrot.lane.b32.xlu0 %v494, 24
      %v995 = vpop.permute.xlu0 %994
      %996 = vrot.lane.b32.xlu0 %v495, 24
      %v997 = vpop.permute.xlu0 %996
      %998 = vrot.lane.b32.xlu0 %v496, 24
      %v999 = vpop.permute.xlu0 %998
      %1000 = vrot.lane.b32.xlu0 %v497, 24
      %v1001 = vpop.permute.xlu0 %1000
      %1002 = vrot.lane.b32.xlu0 %v498, 24
      %v1003 = vpop.permute.xlu0 %1002
      %1004 = vrot.lane.b32.xlu0 %v499, 24
      %v1005 = vpop.permute.xlu0 %1004
      %1006 = vrot.lane.b32.xlu0 %v500, 24
      %v1007 = vpop.permute.xlu0 %1006
      %1008 = vrot.lane.b32.xlu0 %v501, 24
      %v1009 = vpop.permute.xlu0 %1008
      %1010 = vrot.lane.b32.xlu0 %v502, 24
      %v1011 = vpop.permute.xlu0 %1010
      %1012 = vrot.lane.b32.xlu0 %v503, 24
      %v1013 = vpop.permute.xlu0 %1012
      %1014 = vrot.lane.b32.xlu0 %v504, 24
      %v1015 = vpop.permute.xlu0 %1014
      %1016 = vrot.lane.b32.xlu0 %v505, 24
      %v1017 = vpop.permute.xlu0 %1016
      %1018 = vrot.lane.b32.xlu0 %v506, 24
      %v1019 = vpop.permute.xlu0 %1018
      %1084 = vrot.lane.b32.xlu0 %v507, 32
      %v1085 = vpop.permute.xlu0 %1084
      %1086 = vrot.lane.b32.xlu0 %v508, 32
      %v1087 = vpop.permute.xlu0 %1086
      %1088 = vrot.lane.b32.xlu0 %v509, 32
      %v1089 = vpop.permute.xlu0 %1088
      %1090 = vrot.lane.b32.xlu0 %v510, 32
      %v1091 = vpop.permute.xlu0 %1090
      %1092 = vrot.lane.b32.xlu0 %v511, 32
      %v1093 = vpop.permute.xlu0 %1092
      %1094 = vrot.lane.b32.xlu0 %v512, 32
      %v1095 = vpop.permute.xlu0 %1094
      %1096 = vrot.lane.b32.xlu0 %v513, 32
      %v1097 = vpop.permute.xlu0 %1096
      %1098 = vrot.lane.b32.xlu0 %v514, 32
      %v1099 = vpop.permute.xlu0 %1098
      %1100 = vrot.lane.b32.xlu0 %v515, 32
      %v1101 = vpop.permute.xlu0 %1100
      %1102 = vrot.lane.b32.xlu0 %v516, 32
      %v1103 = vpop.permute.xlu0 %1102
      %1104 = vrot.lane.b32.xlu0 %v517, 32
      %v1105 = vpop.permute.xlu0 %1104
      %1106 = vrot.lane.b32.xlu0 %v518, 32
      %v1107 = vpop.permute.xlu0 %1106
      %1108 = vrot.lane.b32.xlu0 %v519, 32
      %v1109 = vpop.permute.xlu0 %1108
      %1110 = vrot.lane.b32.xlu0 %v520, 32
      %v1111 = vpop.permute.xlu0 %1110
      %1112 = vrot.lane.b32.xlu0 %v521, 32
      %v1113 = vpop.permute.xlu0 %1112
      %1114 = vrot.lane.b32.xlu0 %v522, 32
      %v1115 = vpop.permute.xlu0 %1114
      %1116 = vrot.lane.b32.xlu0 %v523, 32
      %v1117 = vpop.permute.xlu0 %1116
      %1118 = vrot.lane.b32.xlu0 %v524, 32
      %v1119 = vpop.permute.xlu0 %1118
      %1120 = vrot.lane.b32.xlu0 %v525, 32
      %v1121 = vpop.permute.xlu0 %1120
      %1122 = vrot.lane.b32.xlu0 %v526, 32
      %v1123 = vpop.permute.xlu0 %1122
      %1124 = vrot.lane.b32.xlu0 %v527, 32
      %v1125 = vpop.permute.xlu0 %1124
      %1126 = vrot.lane.b32.xlu0 %v528, 32
      %v1127 = vpop.permute.xlu0 %1126
      %1128 = vrot.lane.b32.xlu0 %v529, 32
      %v1129 = vpop.permute.xlu0 %1128
      %1130 = vrot.lane.b32.xlu0 %v530, 32
      %v1131 = vpop.permute.xlu0 %1130
      %1132 = vrot.lane.b32.xlu0 %v531, 32
      %v1133 = vpop.permute.xlu0 %1132
      %1134 = vrot.lane.b32.xlu0 %v532, 32
      %v1135 = vpop.permute.xlu0 %1134
      %1136 = vrot.lane.b32.xlu0 %v533, 32
      %v1137 = vpop.permute.xlu0 %1136
      %1138 = vrot.lane.b32.xlu0 %v534, 32
      %v1139 = vpop.permute.xlu0 %1138
      %1140 = vrot.lane.b32.xlu0 %v535, 32
      %v1141 = vpop.permute.xlu0 %1140
      %1142 = vrot.lane.b32.xlu0 %v536, 32
      %v1143 = vpop.permute.xlu0 %1142
      %1144 = vrot.lane.b32.xlu0 %v537, 32
      %v1145 = vpop.permute.xlu0 %1144
      %1146 = vrot.lane.b32.xlu0 %v538, 32
      %v1147 = vpop.permute.xlu0 %1146
      %1212 = vrot.lane.b32.xlu0 %v539, 40
      %v1213 = vpop.permute.xlu0 %1212
      %1214 = vrot.lane.b32.xlu0 %v540, 40
      %v1215 = vpop.permute.xlu0 %1214
      %1216 = vrot.lane.b32.xlu0 %v541, 40
      %v1217 = vpop.permute.xlu0 %1216
      %1218 = vrot.lane.b32.xlu0 %v542, 40
      %v1219 = vpop.permute.xlu0 %1218
      %1220 = vrot.lane.b32.xlu0 %v543, 40
      %v1221 = vpop.permute.xlu0 %1220
      %1222 = vrot.lane.b32.xlu0 %v544, 40
      %v1223 = vpop.permute.xlu0 %1222
      %1224 = vrot.lane.b32.xlu0 %v545, 40
      %v1225 = vpop.permute.xlu0 %1224
      %1226 = vrot.lane.b32.xlu0 %v546, 40
      %v1227 = vpop.permute.xlu0 %1226
      %1228 = vrot.lane.b32.xlu0 %v547, 40
      %v1229 = vpop.permute.xlu0 %1228
      %1230 = vrot.lane.b32.xlu0 %v548, 40
      %v1231 = vpop.permute.xlu0 %1230
      %1232 = vrot.lane.b32.xlu0 %v549, 40
      %v1233 = vpop.permute.xlu0 %1232
      %1234 = vrot.lane.b32.xlu0 %v550, 40
      %v1235 = vpop.permute.xlu0 %1234
      %1236 = vrot.lane.b32.xlu0 %v551, 40
      %v1237 = vpop.permute.xlu0 %1236
      %1238 = vrot.lane.b32.xlu0 %v552, 40
      %v1239 = vpop.permute.xlu0 %1238
      %1240 = vrot.lane.b32.xlu0 %v553, 40
      %v1241 = vpop.permute.xlu0 %1240
      %1242 = vrot.lane.b32.xlu0 %v554, 40
      %v1243 = vpop.permute.xlu0 %1242
      %1244 = vrot.lane.b32.xlu0 %v555, 40
      %v1245 = vpop.permute.xlu0 %1244
      %1246 = vrot.lane.b32.xlu0 %v556, 40
      %v1247 = vpop.permute.xlu0 %1246
      %1248 = vrot.lane.b32.xlu0 %v557, 40
      %v1249 = vpop.permute.xlu0 %1248
      %1250 = vrot.lane.b32.xlu0 %v558, 40
      %v1251 = vpop.permute.xlu0 %1250
      %1252 = vrot.lane.b32.xlu0 %v559, 40
      %v1253 = vpop.permute.xlu0 %1252
      %1254 = vrot.lane.b32.xlu0 %v560, 40
      %v1255 = vpop.permute.xlu0 %1254
      %1256 = vrot.lane.b32.xlu0 %v561, 40
      %v1257 = vpop.permute.xlu0 %1256
      %1258 = vrot.lane.b32.xlu0 %v562, 40
      %v1259 = vpop.permute.xlu0 %1258
      %1260 = vrot.lane.b32.xlu0 %v563, 40
      %v1261 = vpop.permute.xlu0 %1260
      %1262 = vrot.lane.b32.xlu0 %v564, 40
      %v1263 = vpop.permute.xlu0 %1262
      %1264 = vrot.lane.b32.xlu0 %v565, 40
      %v1265 = vpop.permute.xlu0 %1264
      %1266 = vrot.lane.b32.xlu0 %v566, 40
      %v1267 = vpop.permute.xlu0 %1266
      %1268 = vrot.lane.b32.xlu0 %v567, 40
      %v1269 = vpop.permute.xlu0 %1268
      %1270 = vrot.lane.b32.xlu0 %v568, 40
      %v1271 = vpop.permute.xlu0 %1270
      %1272 = vrot.lane.b32.xlu0 %v569, 40
      %v1273 = vpop.permute.xlu0 %1272
      %1274 = vrot.lane.b32.xlu0 %v570, 40
      %v1275 = vpop.permute.xlu0 %1274
      %1340 = vrot.lane.b32.xlu0 %v572, 48
      %v1341 = vpop.permute.xlu0 %1340
      %1342 = vrot.lane.b32.xlu0 %v573, 48
      %v1343 = vpop.permute.xlu0 %1342
      %1344 = vrot.lane.b32.xlu0 %v574, 48
      %v1345 = vpop.permute.xlu0 %1344
      %1346 = vrot.lane.b32.xlu0 %v575, 48
      %v1347 = vpop.permute.xlu0 %1346
      %1348 = vrot.lane.b32.xlu0 %v576, 48
      %v1349 = vpop.permute.xlu0 %1348
      %1350 = vrot.lane.b32.xlu0 %v577, 48
      %v1351 = vpop.permute.xlu0 %1350
      %1352 = vrot.lane.b32.xlu0 %v578, 48
      %v1353 = vpop.permute.xlu0 %1352
      %1354 = vrot.lane.b32.xlu0 %v579, 48
      %v1355 = vpop.permute.xlu0 %1354
      %1356 = vrot.lane.b32.xlu0 %v580, 48
      %v1357 = vpop.permute.xlu0 %1356
      %1358 = vrot.lane.b32.xlu0 %v581, 48
      %v1359 = vpop.permute.xlu0 %1358
      %1360 = vrot.lane.b32.xlu0 %v582, 48
      %v1361 = vpop.permute.xlu0 %1360
      %1362 = vrot.lane.b32.xlu0 %v583, 48
      %v1363 = vpop.permute.xlu0 %1362
      %1364 = vrot.lane.b32.xlu0 %v584, 48
      %v1365 = vpop.permute.xlu0 %1364
      %1366 = vrot.lane.b32.xlu0 %v585, 48
      %v1367 = vpop.permute.xlu0 %1366
      %1368 = vrot.lane.b32.xlu0 %v586, 48
      %v1369 = vpop.permute.xlu0 %1368
      %1370 = vrot.lane.b32.xlu0 %v587, 48
      %v1371 = vpop.permute.xlu0 %1370
      %1372 = vrot.lane.b32.xlu0 %v588, 48
      %v1373 = vpop.permute.xlu0 %1372
      %1374 = vrot.lane.b32.xlu0 %v589, 48
      %v1375 = vpop.permute.xlu0 %1374
      %1376 = vrot.lane.b32.xlu0 %v590, 48
      %v1377 = vpop.permute.xlu0 %1376
      %1378 = vrot.lane.b32.xlu0 %v591, 48
      %v1379 = vpop.permute.xlu0 %1378
      %1380 = vrot.lane.b32.xlu0 %v592, 48
      %v1381 = vpop.permute.xlu0 %1380
      %1382 = vrot.lane.b32.xlu0 %v593, 48
      %v1383 = vpop.permute.xlu0 %1382
      %1384 = vrot.lane.b32.xlu0 %v594, 48
      %v1385 = vpop.permute.xlu0 %1384
      %1386 = vrot.lane.b32.xlu0 %v595, 48
      %v1387 = vpop.permute.xlu0 %1386
      %1388 = vrot.lane.b32.xlu0 %v596, 48
      %v1389 = vpop.permute.xlu0 %1388
      %1390 = vrot.lane.b32.xlu0 %v597, 48
      %v1391 = vpop.permute.xlu0 %1390
      %1392 = vrot.lane.b32.xlu0 %v598, 48
      %v1393 = vpop.permute.xlu0 %1392
      %1394 = vrot.lane.b32.xlu0 %v599, 48
      %v1395 = vpop.permute.xlu0 %1394
      %1396 = vrot.lane.b32.xlu0 %v600, 48
      %v1397 = vpop.permute.xlu0 %1396
      %1398 = vrot.lane.b32.xlu0 %v601, 48
      %v1399 = vpop.permute.xlu0 %1398
      %1400 = vrot.lane.b32.xlu0 %v602, 48
      %v1401 = vpop.permute.xlu0 %1400
      %1402 = vrot.lane.b32.xlu0 %v603, 48
      %v1403 = vpop.permute.xlu0 %1402
      %1468 = vrot.lane.b32.xlu0 %v604, 56
      %v1469 = vpop.permute.xlu0 %1468
      %1470 = vrot.lane.b32.xlu0 %v605, 56
      %v1471 = vpop.permute.xlu0 %1470
      %1472 = vrot.lane.b32.xlu0 %v606, 56
      %v1473 = vpop.permute.xlu0 %1472
      %1474 = vrot.lane.b32.xlu0 %v607, 56
      %v1475 = vpop.permute.xlu0 %1474
      %1476 = vrot.lane.b32.xlu0 %v608, 56
      %v1477 = vpop.permute.xlu0 %1476
      %1478 = vrot.lane.b32.xlu0 %v609, 56
      %v1479 = vpop.permute.xlu0 %1478
      %1480 = vrot.lane.b32.xlu0 %v610, 56
      %v1481 = vpop.permute.xlu0 %1480
      %1482 = vrot.lane.b32.xlu0 %v611, 56
      %v1483 = vpop.permute.xlu0 %1482
      %1484 = vrot.lane.b32.xlu0 %v612, 56
      %v1485 = vpop.permute.xlu0 %1484
      %1486 = vrot.lane.b32.xlu0 %v613, 56
      %v1487 = vpop.permute.xlu0 %1486
      %1488 = vrot.lane.b32.xlu0 %v614, 56
      %v1489 = vpop.permute.xlu0 %1488
      %1490 = vrot.lane.b32.xlu0 %v615, 56
      %v1491 = vpop.permute.xlu0 %1490
      %1492 = vrot.lane.b32.xlu0 %v616, 56
      %v1493 = vpop.permute.xlu0 %1492
      %1494 = vrot.lane.b32.xlu0 %v617, 56
      %v1495 = vpop.permute.xlu0 %1494
      %1496 = vrot.lane.b32.xlu0 %v618, 56
      %v1497 = vpop.permute.xlu0 %1496
      %1498 = vrot.lane.b32.xlu0 %v619, 56
      %v1499 = vpop.permute.xlu0 %1498
      %1500 = vrot.lane.b32.xlu0 %v620, 56
      %v1501 = vpop.permute.xlu0 %1500
      %1502 = vrot.lane.b32.xlu0 %v621, 56
      %v1503 = vpop.permute.xlu0 %1502
      %1504 = vrot.lane.b32.xlu0 %v622, 56
      %v1505 = vpop.permute.xlu0 %1504
      %1506 = vrot.lane.b32.xlu0 %v623, 56
      %v1507 = vpop.permute.xlu0 %1506
      %1508 = vrot.lane.b32.xlu0 %v624, 56
      %v1509 = vpop.permute.xlu0 %1508
      %1510 = vrot.lane.b32.xlu0 %v625, 56
      %v1511 = vpop.permute.xlu0 %1510
      %1512 = vrot.lane.b32.xlu0 %v626, 56
      %v1513 = vpop.permute.xlu0 %1512
      %1514 = vrot.lane.b32.xlu0 %v627, 56
      %v1515 = vpop.permute.xlu0 %1514
      %1516 = vrot.lane.b32.xlu0 %v628, 56
      %v1517 = vpop.permute.xlu0 %1516
      %1518 = vrot.lane.b32.xlu0 %v629, 56
      %v1519 = vpop.permute.xlu0 %1518
      %1520 = vrot.lane.b32.xlu0 %v630, 56
      %v1521 = vpop.permute.xlu0 %1520
      %1522 = vrot.lane.b32.xlu0 %v631, 56
      %v1523 = vpop.permute.xlu0 %1522
      %1524 = vrot.lane.b32.xlu0 %v632, 56
      %v1525 = vpop.permute.xlu0 %1524
      %1526 = vrot.lane.b32.xlu0 %v633, 56
      %v1527 = vpop.permute.xlu0 %1526
      %1528 = vrot.lane.b32.xlu0 %v634, 56
      %v1529 = vpop.permute.xlu0 %1528
      %1530 = vrot.lane.b32.xlu0 %v635, 56
      %v1531 = vpop.permute.xlu0 %1530
      %1596 = vrot.lane.b32.xlu0 %v636, 64
      %v1597 = vpop.permute.xlu0 %1596
      %1598 = vrot.lane.b32.xlu0 %v637, 64
      %v1599 = vpop.permute.xlu0 %1598
      %1600 = vrot.lane.b32.xlu0 %v638, 64
      %v1601 = vpop.permute.xlu0 %1600
      %1602 = vrot.lane.b32.xlu0 %v639, 64
      %v1603 = vpop.permute.xlu0 %1602
      %1604 = vrot.lane.b32.xlu0 %v640, 64
      %v1605 = vpop.permute.xlu0 %1604
      %1606 = vrot.lane.b32.xlu0 %v641, 64
      %v1607 = vpop.permute.xlu0 %1606
      %1608 = vrot.lane.b32.xlu0 %v642, 64
      %v1609 = vpop.permute.xlu0 %1608
      %1610 = vrot.lane.b32.xlu0 %v643, 64
      %v1611 = vpop.permute.xlu0 %1610
      %1612 = vrot.lane.b32.xlu0 %v644, 64
      %v1613 = vpop.permute.xlu0 %1612
      %1614 = vrot.lane.b32.xlu0 %v645, 64
      %v1615 = vpop.permute.xlu0 %1614
      %1616 = vrot.lane.b32.xlu0 %v646, 64
      %v1617 = vpop.permute.xlu0 %1616
      %1618 = vrot.lane.b32.xlu0 %v647, 64
      %v1619 = vpop.permute.xlu0 %1618
      %1620 = vrot.lane.b32.xlu0 %v648, 64
      %v1621 = vpop.permute.xlu0 %1620
      %1622 = vrot.lane.b32.xlu0 %v649, 64
      %v1623 = vpop.permute.xlu0 %1622
      %1624 = vrot.lane.b32.xlu0 %v650, 64
      %v1625 = vpop.permute.xlu0 %1624
      %1626 = vrot.lane.b32.xlu0 %v651, 64
      %v1627 = vpop.permute.xlu0 %1626
      %1628 = vrot.lane.b32.xlu0 %v652, 64
      %v1629 = vpop.permute.xlu0 %1628
      %1630 = vrot.lane.b32.xlu0 %v653, 64
      %v1631 = vpop.permute.xlu0 %1630
      %1632 = vrot.lane.b32.xlu0 %v654, 64
      %v1633 = vpop.permute.xlu0 %1632
      %1634 = vrot.lane.b32.xlu0 %v655, 64
      %v1635 = vpop.permute.xlu0 %1634
      %1636 = vrot.lane.b32.xlu0 %v656, 64
      %v1637 = vpop.permute.xlu0 %1636
      %1638 = vrot.lane.b32.xlu0 %v657, 64
      %v1639 = vpop.permute.xlu0 %1638
      %1640 = vrot.lane.b32.xlu0 %v658, 64
      %v1641 = vpop.permute.xlu0 %1640
      %1642 = vrot.lane.b32.xlu0 %v659, 64
      %v1643 = vpop.permute.xlu0 %1642
      %1644 = vrot.lane.b32.xlu0 %v660, 64
      %v1645 = vpop.permute.xlu0 %1644
      %1646 = vrot.lane.b32.xlu0 %v661, 64
      %v1647 = vpop.permute.xlu0 %1646
      %1648 = vrot.lane.b32.xlu0 %v662, 64
      %v1649 = vpop.permute.xlu0 %1648
      %1650 = vrot.lane.b32.xlu0 %v663, 64
      %v1651 = vpop.permute.xlu0 %1650
      %1652 = vrot.lane.b32.xlu0 %v664, 64
      %v1653 = vpop.permute.xlu0 %1652
      %1654 = vrot.lane.b32.xlu0 %v665, 64
      %v1655 = vpop.permute.xlu0 %1654
      %1656 = vrot.lane.b32.xlu0 %v666, 64
      %v1657 = vpop.permute.xlu0 %1656
      %1658 = vrot.lane.b32.xlu0 %v667, 64
      %v1659 = vpop.permute.xlu0 %1658
      %v1692 = vsel %vm226, %v379, %v701
      %v1693 = vsel %vm226, %v380, %v703
      %v1694 = vsel %vm226, %v381, %v705
      %v1695 = vsel %vm226, %v382, %v707
      %v1696 = vsel %vm226, %v383, %v709
      %v1697 = vsel %vm226, %v384, %v711
      %v1698 = vsel %vm226, %v385, %v713
      %v1699 = vsel %vm226, %v386, %v715
      %v1700 = vsel %vm226, %v387, %v717
      %v1701 = vsel %vm226, %v388, %v719
      %v1702 = vsel %vm226, %v389, %v721
      %v1703 = vsel %vm226, %v390, %v723
      %v1704 = vsel %vm226, %v391, %v725
      %v1705 = vsel %vm226, %v392, %v727
      %v1706 = vsel %vm226, %v393, %v729
      %v1707 = vsel %vm226, %v394, %v731
      %v1708 = vsel %vm226, %v395, %v733
      %v1709 = vsel %vm226, %v396, %v735
      %v1710 = vsel %vm226, %v397, %v737
      %v1711 = vsel %vm226, %v398, %v739
      %v1712 = vsel %vm226, %v399, %v741
      %v1713 = vsel %vm226, %v400, %v743
      %v1714 = vsel %vm226, %v401, %v745
      %v1715 = vsel %vm226, %v402, %v747
      %v1716 = vsel %vm226, %v403, %v749
      %v1717 = vsel %vm226, %v404, %v751
      %v1718 = vsel %vm226, %v405, %v753
      %v1719 = vsel %vm226, %v406, %v755
      %v1720 = vsel %vm226, %v407, %v757
      %v1721 = vsel %vm226, %v408, %v759
      %v1722 = vsel %vm226, %v409, %v761
      %v1723 = vsel %vm226, %v410, %v763
      %vm1724 = vcmask 130048
      %v1725 = vsel %vm1724, %v1692, %v829
      %v1726 = vsel %vm1724, %v1693, %v831
      %v1727 = vsel %vm1724, %v1694, %v833
      %v1728 = vsel %vm1724, %v1695, %v835
      %v1729 = vsel %vm1724, %v1696, %v837
      %v1730 = vsel %vm1724, %v1697, %v839
      %v1731 = vsel %vm1724, %v1698, %v841
      %v1732 = vsel %vm1724, %v1699, %v843
      %v1733 = vsel %vm1724, %v1700, %v845
      %v1734 = vsel %vm1724, %v1701, %v847
      %v1735 = vsel %vm1724, %v1702, %v849
      %v1736 = vsel %vm1724, %v1703, %v851
      %v1737 = vsel %vm1724, %v1704, %v853
      %v1738 = vsel %vm1724, %v1705, %v855
      %v1739 = vsel %vm1724, %v1706, %v857
      %v1740 = vsel %vm1724, %v1707, %v859
      %v1741 = vsel %vm1724, %v1708, %v861
      %v1742 = vsel %vm1724, %v1709, %v863
      %v1743 = vsel %vm1724, %v1710, %v865
      %v1744 = vsel %vm1724, %v1711, %v867
      %v1745 = vsel %vm1724, %v1712, %v869
      %v1746 = vsel %vm1724, %v1713, %v871
      %v1747 = vsel %vm1724, %v1714, %v873
      %v1748 = vsel %vm1724, %v1715, %v875
      %v1749 = vsel %vm1724, %v1716, %v877
      %v1750 = vsel %vm1724, %v1717, %v879
      %v1751 = vsel %vm1724, %v1718, %v881
      %v1752 = vsel %vm1724, %v1719, %v883
      %v1753 = vsel %vm1724, %v1720, %v885
      %v1754 = vsel %vm1724, %v1721, %v887
      %v1755 = vsel %vm1724, %v1722, %v889
      %v1756 = vsel %vm1724, %v1723, %v891
      %vm1757 = vcmask 195584
      %v1758 = vsel %vm1757, %v1725, %v957
      %v1759 = vsel %vm1757, %v1726, %v959
      %v1760 = vsel %vm1757, %v1727, %v961
      %v1761 = vsel %vm1757, %v1728, %v963
      %v1762 = vsel %vm1757, %v1729, %v965
      %v1763 = vsel %vm1757, %v1730, %v967
      %v1764 = vsel %vm1757, %v1731, %v969
      %v1765 = vsel %vm1757, %v1732, %v971
      %v1766 = vsel %vm1757, %v1733, %v973
      %v1767 = vsel %vm1757, %v1734, %v975
      %v1768 = vsel %vm1757, %v1735, %v977
      %v1769 = vsel %vm1757, %v1736, %v979
      %v1770 = vsel %vm1757, %v1737, %v981
      %v1771 = vsel %vm1757, %v1738, %v983
      %v1772 = vsel %vm1757, %v1739, %v985
      %v1773 = vsel %vm1757, %v1740, %v987
      %v1774 = vsel %vm1757, %v1741, %v989
      %v1775 = vsel %vm1757, %v1742, %v991
      %v1776 = vsel %vm1757, %v1743, %v993
      %v1777 = vsel %vm1757, %v1744, %v995
      %v1778 = vsel %vm1757, %v1745, %v997
      %v1779 = vsel %vm1757, %v1746, %v999
      %v1780 = vsel %vm1757, %v1747, %v1001
      %v1781 = vsel %vm1757, %v1748, %v1003
      %v1782 = vsel %vm1757, %v1749, %v1005
      %v1783 = vsel %vm1757, %v1750, %v1007
      %v1784 = vsel %vm1757, %v1751, %v1009
      %v1785 = vsel %vm1757, %v1752, %v1011
      %v1786 = vsel %vm1757, %v1753, %v1013
      %v1787 = vsel %vm1757, %v1754, %v1015
      %v1788 = vsel %vm1757, %v1755, %v1017
      %v1789 = vsel %vm1757, %v1756, %v1019
      %vm1790 = vcmask 261120
      %v1791 = vsel %vm1790, %v1758, %v1085
      %v1792 = vsel %vm1790, %v1759, %v1087
      %v1793 = vsel %vm1790, %v1760, %v1089
      %v1794 = vsel %vm1790, %v1761, %v1091
      %v1795 = vsel %vm1790, %v1762, %v1093
      %v1796 = vsel %vm1790, %v1763, %v1095
      %v1797 = vsel %vm1790, %v1764, %v1097
      %v1798 = vsel %vm1790, %v1765, %v1099
      %v1799 = vsel %vm1790, %v1766, %v1101
      %v1800 = vsel %vm1790, %v1767, %v1103
      %v1801 = vsel %vm1790, %v1768, %v1105
      %v1802 = vsel %vm1790, %v1769, %v1107
      %v1803 = vsel %vm1790, %v1770, %v1109
      %v1804 = vsel %vm1790, %v1771, %v1111
      %v1805 = vsel %vm1790, %v1772, %v1113
      %v1806 = vsel %vm1790, %v1773, %v1115
      %v1807 = vsel %vm1790, %v1774, %v1117
      %v1808 = vsel %vm1790, %v1775, %v1119
      %v1809 = vsel %vm1790, %v1776, %v1121
      %v1810 = vsel %vm1790, %v1777, %v1123
      %v1811 = vsel %vm1790, %v1778, %v1125
      %v1812 = vsel %vm1790, %v1779, %v1127
      %v1813 = vsel %vm1790, %v1780, %v1129
      %v1814 = vsel %vm1790, %v1781, %v1131
      %v1815 = vsel %vm1790, %v1782, %v1133
      %v1816 = vsel %vm1790, %v1783, %v1135
      %v1817 = vsel %vm1790, %v1784, %v1137
      %v1818 = vsel %vm1790, %v1785, %v1139
      %v1819 = vsel %vm1790, %v1786, %v1141
      %v1820 = vsel %vm1790, %v1787, %v1143
      %v1821 = vsel %vm1790, %v1788, %v1145
      %v1822 = vsel %vm1790, %v1789, %v1147
      %vm1823 = vcmask 326656
      %v1824 = vsel %vm1823, %v1791, %v1213
      %v1825 = vsel %vm1823, %v1792, %v1215
      %v1826 = vsel %vm1823, %v1793, %v1217
      %v1827 = vsel %vm1823, %v1794, %v1219
      %v1828 = vsel %vm1823, %v1795, %v1221
      %v1829 = vsel %vm1823, %v1796, %v1223
      %v1830 = vsel %vm1823, %v1797, %v1225
      %v1831 = vsel %vm1823, %v1798, %v1227
      %v1832 = vsel %vm1823, %v1799, %v1229
      %v1833 = vsel %vm1823, %v1800, %v1231
      %v1834 = vsel %vm1823, %v1801, %v1233
      %v1835 = vsel %vm1823, %v1802, %v1235
      %v1836 = vsel %vm1823, %v1803, %v1237
      %v1837 = vsel %vm1823, %v1804, %v1239
      %v1838 = vsel %vm1823, %v1805, %v1241
      %v1839 = vsel %vm1823, %v1806, %v1243
      %v1840 = vsel %vm1823, %v1807, %v1245
      %v1841 = vsel %vm1823, %v1808, %v1247
      %v1842 = vsel %vm1823, %v1809, %v1249
      %v1843 = vsel %vm1823, %v1810, %v1251
      %v1844 = vsel %vm1823, %v1811, %v1253
      %v1845 = vsel %vm1823, %v1812, %v1255
      %v1846 = vsel %vm1823, %v1813, %v1257
      %v1847 = vsel %vm1823, %v1814, %v1259
      %v1848 = vsel %vm1823, %v1815, %v1261
      %v1849 = vsel %vm1823, %v1816, %v1263
      %v1850 = vsel %vm1823, %v1817, %v1265
      %v1851 = vsel %vm1823, %v1818, %v1267
      %v1852 = vsel %vm1823, %v1819, %v1269
      %v1853 = vsel %vm1823, %v1820, %v1271
      %v1854 = vsel %vm1823, %v1821, %v1273
      %v1855 = vsel %vm1823, %v1822, %v1275
      %vm1856 = vcmask 392192
      %v1857 = vsel %vm1856, %v1824, %v1341
      %v1858 = vsel %vm1856, %v1825, %v1343
      %v1859 = vsel %vm1856, %v1826, %v1345
      %v1860 = vsel %vm1856, %v1827, %v1347
      %v1861 = vsel %vm1856, %v1828, %v1349
      %v1862 = vsel %vm1856, %v1829, %v1351
      %v1863 = vsel %vm1856, %v1830, %v1353
      %v1864 = vsel %vm1856, %v1831, %v1355
      %v1865 = vsel %vm1856, %v1832, %v1357
      %v1866 = vsel %vm1856, %v1833, %v1359
      %v1867 = vsel %vm1856, %v1834, %v1361
      %v1868 = vsel %vm1856, %v1835, %v1363
      %v1869 = vsel %vm1856, %v1836, %v1365
      %v1870 = vsel %vm1856, %v1837, %v1367
      %v1871 = vsel %vm1856, %v1838, %v1369
      %v1872 = vsel %vm1856, %v1839, %v1371
      %v1873 = vsel %vm1856, %v1840, %v1373
      %v1874 = vsel %vm1856, %v1841, %v1375
      %v1875 = vsel %vm1856, %v1842, %v1377
      %v1876 = vsel %vm1856, %v1843, %v1379
      %v1877 = vsel %vm1856, %v1844, %v1381
      %v1878 = vsel %vm1856, %v1845, %v1383
      %v1879 = vsel %vm1856, %v1846, %v1385
      %v1880 = vsel %vm1856, %v1847, %v1387
      %v1881 = vsel %vm1856, %v1848, %v1389
      %v1882 = vsel %vm1856, %v1849, %v1391
      %v1883 = vsel %vm1856, %v1850, %v1393
      %v1884 = vsel %vm1856, %v1851, %v1395
      %v1885 = vsel %vm1856, %v1852, %v1397
      %v1886 = vsel %vm1856, %v1853, %v1399
      %v1887 = vsel %vm1856, %v1854, %v1401
      %v1888 = vsel %vm1856, %v1855, %v1403
      %vm1889 = vcmask 457728
      %v1890 = vsel %vm1889, %v1857, %v1469
      %v1891 = vsel %vm1889, %v1858, %v1471
      %v1892 = vsel %vm1889, %v1859, %v1473
      %v1893 = vsel %vm1889, %v1860, %v1475
      %v1894 = vsel %vm1889, %v1861, %v1477
      %v1895 = vsel %vm1889, %v1862, %v1479
      %v1896 = vsel %vm1889, %v1863, %v1481
      %v1897 = vsel %vm1889, %v1864, %v1483
      %v1898 = vsel %vm1889, %v1865, %v1485
      %v1899 = vsel %vm1889, %v1866, %v1487
      %v1900 = vsel %vm1889, %v1867, %v1489
      %v1901 = vsel %vm1889, %v1868, %v1491
      %v1902 = vsel %vm1889, %v1869, %v1493
      %v1903 = vsel %vm1889, %v1870, %v1495
      %v1904 = vsel %vm1889, %v1871, %v1497
      %v1905 = vsel %vm1889, %v1872, %v1499
      %v1906 = vsel %vm1889, %v1873, %v1501
      %v1907 = vsel %vm1889, %v1874, %v1503
      %v1908 = vsel %vm1889, %v1875, %v1505
      %v1909 = vsel %vm1889, %v1876, %v1507
      %v1910 = vsel %vm1889, %v1877, %v1509
      %v1911 = vsel %vm1889, %v1878, %v1511
      %v1912 = vsel %vm1889, %v1879, %v1513
      %v1913 = vsel %vm1889, %v1880, %v1515
      %v1914 = vsel %vm1889, %v1881, %v1517
      %v1915 = vsel %vm1889, %v1882, %v1519
      %v1916 = vsel %vm1889, %v1883, %v1521
      %v1917 = vsel %vm1889, %v1884, %v1523
      %v1918 = vsel %vm1889, %v1885, %v1525
      %v1919 = vsel %vm1889, %v1886, %v1527
      %v1920 = vsel %vm1889, %v1887, %v1529
      %v1921 = vsel %vm1889, %v1888, %v1531
      %vm1922 = vcmask 523264
      %v1923 = vsel %vm1922, %v1890, %v1597
      %v1924 = vsel %vm1922, %v1891, %v1599
      %v1925 = vsel %vm1922, %v1892, %v1601
      %v1926 = vsel %vm1922, %v1893, %v1603
      %v1927 = vsel %vm1922, %v1894, %v1605
      %v1928 = vsel %vm1922, %v1895, %v1607
      %v1929 = vsel %vm1922, %v1896, %v1609
      %v1930 = vsel %vm1922, %v1897, %v1611
      %v1931 = vsel %vm1922, %v1898, %v1613
      %v1932 = vsel %vm1922, %v1899, %v1615
      %v1933 = vsel %vm1922, %v1900, %v1617
      %v1934 = vsel %vm1922, %v1901, %v1619
      %v1935 = vsel %vm1922, %v1902, %v1621
      %v1936 = vsel %vm1922, %v1903, %v1623
      %v1937 = vsel %vm1922, %v1904, %v1625
      %v1938 = vsel %vm1922, %v1905, %v1627
      %v1939 = vsel %vm1922, %v1906, %v1629
      %v1940 = vsel %vm1922, %v1907, %v1631
      %v1941 = vsel %vm1922, %v1908, %v1633
      %v1942 = vsel %vm1922, %v1909, %v1635
      %v1943 = vsel %vm1922, %v1910, %v1637
      %v1944 = vsel %vm1922, %v1911, %v1639
      %v1945 = vsel %vm1922, %v1912, %v1641
      %v1946 = vsel %vm1922, %v1913, %v1643
      %v1947 = vsel %vm1922, %v1914, %v1645
      %v1948 = vsel %vm1922, %v1915, %v1647
      %v1949 = vsel %vm1922, %v1916, %v1649
      %v1950 = vsel %vm1922, %v1917, %v1651
      %v1951 = vsel %vm1922, %v1918, %v1653
      %v1952 = vsel %vm1922, %v1919, %v1655
      %v1953 = vsel %vm1922, %v1920, %v1657
      %v1954 = vsel %vm1922, %v1921, %v1659
      %v1955 = vpack.c.bf16 %v1924, %v1923
      %v1956 = vpack.c.bf16 %v1926, %v1925
      %v1957 = vpack.c.bf16 %v1928, %v1927
      %v1958 = vpack.c.bf16 %v1930, %v1929
      %v1959 = vpack.c.bf16 %v1932, %v1931
      %v1960 = vpack.c.bf16 %v1934, %v1933
      %v1961 = vpack.c.bf16 %v1936, %v1935
      %v1962 = vpack.c.bf16 %v1938, %v1937
      %v1963 = vpack.c.bf16 %v1940, %v1939
      %v1964 = vpack.c.bf16 %v1942, %v1941
      %v1965 = vpack.c.bf16 %v1944, %v1943
      %v1966 = vpack.c.bf16 %v1946, %v1945
      %v1967 = vpack.c.bf16 %v1948, %v1947
      %v1968 = vpack.c.bf16 %v1950, %v1949
      %v1969 = vpack.c.bf16 %v1952, %v1951
      %v1970 = vpack.c.bf16 %v1954, %v1953
      %v1971 = vld [vmem:[%s1] sm:$0xf]
      %v1972 = vld [vmem:[%s1 + $0x4] sm:$0xf]
      %v1973 = vld [vmem:[%s1 + $0x8] sm:$0xf]
      %v1974 = vld [vmem:[%s1 + $0xc] sm:$0xf]
      %v1975 = vld [vmem:[%s1 + $0x10] sm:$0xf]
      %v1976 = vld [vmem:[%s1 + $0x14] sm:$0xf]
      %v1977 = vld [vmem:[%s1 + $0x18] sm:$0xf]
      %v1978 = vld [vmem:[%s1 + $0x1c] sm:$0xf]
      %v1979 = vld [vmem:[%s1 + $0x20] sm:$0xf]
      %v1980 = vld [vmem:[%s2] sm:$0x1]
      %v1982 = vlaneseq
      %v1983 = vshrl.u32 %v1982, 7
      %v1984 = vsub.s32 0, %v1983
      %v1985 = vrot.slane %v1980, %v1984
      %v1996 = vunpack.c.l.b16 %v1971
      %v1997 = vunpack.c.l.b16 %v1972
      %v1998 = vunpack.c.l.b16 %v1973
      %v1999 = vunpack.c.l.b16 %v1974
      %v2000 = vunpack.c.l.b16 %v1975
      %v2001 = vunpack.c.l.b16 %v1976
      %v2002 = vunpack.c.l.b16 %v1977
      %v2003 = vunpack.c.l.b16 %v1978
      %v2004 = vunpack.c.l.b16 %v1979
      %v2005 = vpack.c.b16 %v1997, %v1996
      %v2006 = vpack.c.b16 %v1999, %v1998
      %v2007 = vpack.c.b16 %v2001, %v2000
      %v2008 = vpack.c.b16 %v2003, %v2002
      %v2009 = vpack.c.b16 %v2004, %v2004
      %vm2014 = vcmask 588800
      %v2016 = vsel %vm2014, %v1955, 0
      %v2019 = vsel %vm2014, %v1956, 0
      %v2022 = vsel %vm2014, %v1957, 0
      %v2025 = vsel %vm2014, %v1958, 0
      %v2028 = vsel %vm2014, %v1959, 0
      %v2031 = vsel %vm2014, %v1960, 0
      %v2034 = vsel %vm2014, %v1961, 0
      %v2037 = vsel %vm2014, %v1962, 0
      %v2040 = vsel %vm2014, %v1963, 0
      %v2043 = vsel %vm2014, %v1964, 0
      %v2046 = vsel %vm2014, %v1965, 0
      %v2049 = vsel %vm2014, %v1966, 0
      %v2052 = vsel %vm2014, %v1967, 0
      %v2055 = vsel %vm2014, %v1968, 0
      %v2058 = vsel %vm2014, %v1969, 0
      %v2061 = vsel %vm2014, %v1970, 0
      %vm2063 = vcmask 1043456
      %v2065 = vsel %vm2063, %v2009, 0
      %2067 = vmatprep.subr.bf16.mxu0 0
      %2068 = vmatpush1.bf16.msra.mxu0 %v2005
      %2069 = vmatprep.subr.bf16.mxu0 0
      %2070 = vmatpush1.bf16.msra.mxu0 %v2006
      %2071 = vmatprep.subr.bf16.mxu0 0
      %2072 = vmatpush1.bf16.msra.mxu0 %v2007
      %2073 = vmatprep.subr.bf16.mxu0 0
      %2074 = vmatpush1.bf16.msra.mxu0 %v2008
      %2075 = vmatprep.subr.bf16.mxu0 0
      %2076 = vmatpush1.bf16.msra.mxu0 %v2065
      %2077 = vmatprep.subr.bf16.mxu0 0
      %2078 = vmatpush1.bf16.msra.mxu0 0
      %2079 = vmatprep.subr.bf16.mxu0 0
      %2080 = vmatpush1.bf16.msra.mxu0 0
      %2081 = vmatprep.subr.bf16.mxu0 0
      %2082 = vmatpush1.bf16.msra.mxu0 0
      %2083 = vmatprep.subr.bf16.mxu0 0
      %2084 = vmatpush1.bf16.msra.mxu0 0
      %2085 = vmatprep.subr.bf16.mxu0 0
      %2086 = vmatpush1.bf16.msra.mxu0 0
      %2087 = vmatprep.subr.bf16.mxu0 0
      %2088 = vmatpush1.bf16.msra.mxu0 0
      %2089 = vmatprep.subr.bf16.mxu0 0
      %2090 = vmatpush1.bf16.msra.mxu0 0
      %2091 = vmatprep.subr.bf16.mxu0 0
      %2092 = vmatpush1.bf16.msra.mxu0 0
      %2093 = vmatprep.subr.bf16.mxu0 0
      %2094 = vmatpush1.bf16.msra.mxu0 0
      %2095 = vmatprep.subr.bf16.mxu0 0
      %2096 = vmatpush1.bf16.msra.mxu0 0
      %2097 = vmatprep.subr.bf16.mxu0 0
      %2098 = vmatpush1.bf16.msra.mxu0 0
      %2099 = vmatprep.mubr.bf16.mxu0 0
      %2100 = vmatmul.mubr.bf16.gmra.mrb[0].mxu0 %v2016
      %v2101 = vpop.f32.mrb[0].mxu0
      %v2102 = vadd.f32 %v1985, %v2101
      %v2103 = vpop.f32.mrb[0].mxu0
      %v2104 = vpop.f32.mrb[0].mxu0
      %v2105 = vadd.f32 %v1985, %v2104
      %v2106 = vpop.f32.mrb[0].mxu0
      %2107 = vmatprep.mubr.bf16.mxu0 0
      %2108 = vmatmul.mubr.bf16.gmra.mrb[0].mxu0 %v2019
      %v2109 = vpop.f32.mrb[0].mxu0
      %v2110 = vadd.f32 %v1985, %v2109
      %v2111 = vpop.f32.mrb[0].mxu0
      %v2112 = vpop.f32.mrb[0].mxu0
      %v2113 = vadd.f32 %v1985, %v2112
      %v2114 = vpop.f32.mrb[0].mxu0
      %2115 = vmatprep.mubr.bf16.mxu0 0
      %2116 = vmatmul.mubr.bf16.gmra.mrb[0].mxu0 %v2022
      %v2117 = vpop.f32.mrb[0].mxu0
      %v2118 = vadd.f32 %v1985, %v2117
      %v2119 = vpop.f32.mrb[0].mxu0
      %v2120 = vpop.f32.mrb[0].mxu0
      %v2121 = vadd.f32 %v1985, %v2120
      %v2122 = vpop.f32.mrb[0].mxu0
      %2123 = vmatprep.mubr.bf16.mxu0 0
      %2124 = vmatmul.mubr.bf16.gmra.mrb[0].mxu0 %v2025
      %v2125 = vpop.f32.mrb[0].mxu0
      %v2126 = vadd.f32 %v1985, %v2125
      %v2127 = vpop.f32.mrb[0].mxu0
      %v2128 = vpop.f32.mrb[0].mxu0
      %v2129 = vadd.f32 %v1985, %v2128
      %v2130 = vpop.f32.mrb[0].mxu0
      %2131 = vmatprep.mubr.bf16.mxu0 0
      %2132 = vmatmul.mubr.bf16.gmra.mrb[0].mxu0 %v2028
      %v2133 = vpop.f32.mrb[0].mxu0
      %v2134 = vadd.f32 %v1985, %v2133
      %v2135 = vpop.f32.mrb[0].mxu0
      %v2136 = vpop.f32.mrb[0].mxu0
      %v2137 = vadd.f32 %v1985, %v2136
      %v2138 = vpop.f32.mrb[0].mxu0
      %2139 = vmatprep.mubr.bf16.mxu0 0
      %2140 = vmatmul.mubr.bf16.gmra.mrb[0].mxu0 %v2031
      %v2141 = vpop.f32.mrb[0].mxu0
      %v2142 = vadd.f32 %v1985, %v2141
      %v2143 = vpop.f32.mrb[0].mxu0
      %v2144 = vpop.f32.mrb[0].mxu0
      %v2145 = vadd.f32 %v1985, %v2144
      %v2146 = vpop.f32.mrb[0].mxu0
      %2147 = vmatprep.mubr.bf16.mxu0 0
      %2148 = vmatmul.mubr.bf16.gmra.mrb[0].mxu0 %v2034
      %v2149 = vpop.f32.mrb[0].mxu0
      %v2150 = vadd.f32 %v1985, %v2149
      %v2151 = vpop.f32.mrb[0].mxu0
      %v2152 = vpop.f32.mrb[0].mxu0
      %v2153 = vadd.f32 %v1985, %v2152
      %v2154 = vpop.f32.mrb[0].mxu0
      %2155 = vmatprep.mubr.bf16.mxu0 0
      %2156 = vmatmul.mubr.bf16.gmra.mrb[0].mxu0 %v2037
      %v2157 = vpop.f32.mrb[0].mxu0
      %v2158 = vadd.f32 %v1985, %v2157
      %v2159 = vpop.f32.mrb[0].mxu0
      %v2160 = vpop.f32.mrb[0].mxu0
      %v2161 = vadd.f32 %v1985, %v2160
      %v2162 = vpop.f32.mrb[0].mxu0
      %2163 = vmatprep.mubr.bf16.mxu0 0
      %2164 = vmatmul.mubr.bf16.gmra.mrb[0].mxu0 %v2040
      %v2165 = vpop.f32.mrb[0].mxu0
      %v2166 = vadd.f32 %v1985, %v2165
      %v2167 = vpop.f32.mrb[0].mxu0
      %v2168 = vpop.f32.mrb[0].mxu0
      %v2169 = vadd.f32 %v1985, %v2168
      %v2170 = vpop.f32.mrb[0].mxu0
      %2171 = vmatprep.mubr.bf16.mxu0 0
      %2172 = vmatmul.mubr.bf16.gmra.mrb[0].mxu0 %v2043
      %v2173 = vpop.f32.mrb[0].mxu0
      %v2174 = vadd.f32 %v1985, %v2173
      %v2175 = vpop.f32.mrb[0].mxu0
      %v2176 = vpop.f32.mrb[0].mxu0
      %v2177 = vadd.f32 %v1985, %v2176
      %v2178 = vpop.f32.mrb[0].mxu0
      %2179 = vmatprep.mubr.bf16.mxu0 0
      %2180 = vmatmul.mubr.bf16.gmra.mrb[0].mxu0 %v2046
      %v2181 = vpop.f32.mrb[0].mxu0
      %v2182 = vadd.f32 %v1985, %v2181
      %v2183 = vpop.f32.mrb[0].mxu0
      %v2184 = vpop.f32.mrb[0].mxu0
      %v2185 = vadd.f32 %v1985, %v2184
      %v2186 = vpop.f32.mrb[0].mxu0
      %2187 = vmatprep.mubr.bf16.mxu0 0
      %2188 = vmatmul.mubr.bf16.gmra.mrb[0].mxu0 %v2049
      %v2189 = vpop.f32.mrb[0].mxu0
      %v2190 = vadd.f32 %v1985, %v2189
      %v2191 = vpop.f32.mrb[0].mxu0
      %v2192 = vpop.f32.mrb[0].mxu0
      %v2193 = vadd.f32 %v1985, %v2192
      %v2194 = vpop.f32.mrb[0].mxu0
      %2195 = vmatprep.mubr.bf16.mxu0 0
      %2196 = vmatmul.mubr.bf16.gmra.mrb[0].mxu0 %v2052
      %v2197 = vpop.f32.mrb[0].mxu0
      %v2198 = vadd.f32 %v1985, %v2197
      %v2199 = vpop.f32.mrb[0].mxu0
      %v2200 = vpop.f32.mrb[0].mxu0
      %v2201 = vadd.f32 %v1985, %v2200
      %v2202 = vpop.f32.mrb[0].mxu0
      %2203 = vmatprep.mubr.bf16.mxu0 0
      %2204 = vmatmul.mubr.bf16.gmra.mrb[0].mxu0 %v2055
      %v2205 = vpop.f32.mrb[0].mxu0
      %v2206 = vadd.f32 %v1985, %v2205
      %v2207 = vpop.f32.mrb[0].mxu0
      %v2208 = vpop.f32.mrb[0].mxu0
      %v2209 = vadd.f32 %v1985, %v2208
      %v2210 = vpop.f32.mrb[0].mxu0
      %2211 = vmatprep.mubr.bf16.mxu0 0
      %2212 = vmatmul.mubr.bf16.gmra.mrb[0].mxu0 %v2058
      %v2213 = vpop.f32.mrb[0].mxu0
      %v2214 = vadd.f32 %v1985, %v2213
      %v2215 = vpop.f32.mrb[0].mxu0
      %v2216 = vpop.f32.mrb[0].mxu0
      %v2217 = vadd.f32 %v1985, %v2216
      %v2218 = vpop.f32.mrb[0].mxu0
      %2219 = vmatprep.mubr.bf16.mxu0 0
      %2220 = vmatmul.mubr.bf16.gmra.mrb[0].mxu0 %v2061
      %v2221 = vpop.f32.mrb[0].mxu0
      %v2222 = vadd.f32 %v1985, %v2221
      %v2223 = vpop.f32.mrb[0].mxu0
      %v2224 = vpop.f32.mrb[0].mxu0
      %v2225 = vadd.f32 %v1985, %v2224
      %v2226 = vpop.f32.mrb[0].mxu0
      %2227 = vdwg.mxu0
      %v2228 = vmax.f32 %v2102, 0.0
      %v2229 = vmax.f32 %v2105, 0.0
      %v2230 = vmax.f32 %v2110, 0.0
      %v2231 = vmax.f32 %v2113, 0.0
      %v2232 = vmax.f32 %v2118, 0.0
      %v2233 = vmax.f32 %v2121, 0.0
      %v2234 = vmax.f32 %v2126, 0.0
      %v2235 = vmax.f32 %v2129, 0.0
      %v2236 = vmax.f32 %v2134, 0.0
      %v2237 = vmax.f32 %v2137, 0.0
      %v2238 = vmax.f32 %v2142, 0.0
      %v2239 = vmax.f32 %v2145, 0.0
      %v2240 = vmax.f32 %v2150, 0.0
      %v2241 = vmax.f32 %v2153, 0.0
      %v2242 = vmax.f32 %v2158, 0.0
      %v2243 = vmax.f32 %v2161, 0.0
      %v2244 = vmax.f32 %v2166, 0.0
      %v2245 = vmax.f32 %v2169, 0.0
      %v2246 = vmax.f32 %v2174, 0.0
      %v2247 = vmax.f32 %v2177, 0.0
      %v2248 = vmax.f32 %v2182, 0.0
      %v2249 = vmax.f32 %v2185, 0.0
      %v2250 = vmax.f32 %v2190, 0.0
      %v2251 = vmax.f32 %v2193, 0.0
      %v2252 = vmax.f32 %v2198, 0.0
      %v2253 = vmax.f32 %v2201, 0.0
      %v2254 = vmax.f32 %v2206, 0.0
      %v2255 = vmax.f32 %v2209, 0.0
      %v2256 = vmax.f32 %v2214, 0.0
      %v2257 = vmax.f32 %v2217, 0.0
      %v2258 = vmax.f32 %v2222, 0.0
      %v2259 = vmax.f32 %v2225, 0.0
      %2260 = vst.msk [vmem:[#allocation3] sm:$0xff] %vm1724, 0.0
      %2261 = vst.msk [vmem:[#allocation3 + $0x8] sm:$0xff] %vm1724, 0.0
      %vm2262 = vcmask 123904
      %2263 = vst.msk [vmem:[#allocation3 + $0x10] sm:$0x3] %vm2262, 0.0
      %2264 = vst.msk [vmem:[#allocation3 + $0x18] sm:$0xff] %vm1724, 0.0
      %2265 = vst.msk [vmem:[#allocation3 + $0x20] sm:$0xff] %vm1724, 0.0
      %2266 = vst.msk [vmem:[#allocation3 + $0x28] sm:$0x3] %vm2262, 0.0
      %2267 = vst.msk [vmem:[#allocation3 + $0x30] sm:$0xff] %vm1724, 0.0
      %2268 = vst.msk [vmem:[#allocation3 + $0x38] sm:$0xff] %vm1724, 0.0
      %2269 = vst.msk [vmem:[#allocation3 + $0x40] sm:$0x3] %vm2262, 0.0
      %2270 = vst.msk [vmem:[#allocation3 + $0x48] sm:$0xff] %vm1724, 0.0
      %2271 = vst.msk [vmem:[#allocation3 + $0x50] sm:$0xff] %vm1724, 0.0
      %2272 = vst.msk [vmem:[#allocation3 + $0x58] sm:$0x3] %vm2262, 0.0
      %2273 = vst.msk [vmem:[#allocation3 + $0x60] sm:$0xff] %vm1724, 0.0
      %2274 = vst.msk [vmem:[#allocation3 + $0x68] sm:$0xff] %vm1724, 0.0
      %2275 = vst.msk [vmem:[#allocation3 + $0x70] sm:$0x3] %vm2262, 0.0
      %2276 = vst.msk [vmem:[#allocation3 + $0x78] sm:$0xff] %vm1724, 0.0
      %2277 = vst.msk [vmem:[#allocation3 + $0x80] sm:$0xff] %vm1724, 0.0
      %2278 = vst.msk [vmem:[#allocation3 + $0x88] sm:$0x3] %vm2262, 0.0
      %2279 = vst.msk [vmem:[#allocation3 + $0x90] sm:$0xff] %vm1724, 0.0
      %2280 = vst.msk [vmem:[#allocation3 + $0x98] sm:$0xff] %vm1724, 0.0
      %2281 = vst.msk [vmem:[#allocation3 + $0xa0] sm:$0x3] %vm2262, 0.0
      %2282 = vst.msk [vmem:[#allocation3 + $0xa8] sm:$0xff] %vm1724, 0.0
      %2283 = vst.msk [vmem:[#allocation3 + $0xb0] sm:$0xff] %vm1724, 0.0
      %2284 = vst.msk [vmem:[#allocation3 + $0xb8] sm:$0x3] %vm2262, 0.0
      %2285 = vst.msk [vmem:[#allocation3 + $0xc0] sm:$0xff] %vm1724, 0.0
      %2286 = vst.msk [vmem:[#allocation3 + $0xc8] sm:$0xff] %vm1724, 0.0
      %2287 = vst.msk [vmem:[#allocation3 + $0xd0] sm:$0x3] %vm2262, 0.0
      %2288 = vst.msk [vmem:[#allocation3 + $0xd8] sm:$0xff] %vm1724, 0.0
      %2289 = vst.msk [vmem:[#allocation3 + $0xe0] sm:$0xff] %vm1724, 0.0
      %2290 = vst.msk [vmem:[#allocation3 + $0xe8] sm:$0x3] %vm2262, 0.0
      %2291 = vst.msk [vmem:[#allocation3 + $0xf0] sm:$0xff] %vm1724, 0.0
      %2292 = vst.msk [vmem:[#allocation3 + $0xf8] sm:$0xff] %vm1724, 0.0
      %2293 = vst.msk [vmem:[#allocation3 + $0x100] sm:$0x3] %vm2262, 0.0
      %2294 = vst.msk [vmem:[#allocation3 + $0x108] sm:$0xff] %vm1724, 0.0
      %2295 = vst.msk [vmem:[#allocation3 + $0x110] sm:$0xff] %vm1724, 0.0
      %2296 = vst.msk [vmem:[#allocation3 + $0x118] sm:$0x3] %vm2262, 0.0
      %2297 = vst.msk [vmem:[#allocation3 + $0x120] sm:$0xff] %vm1724, 0.0
      %2298 = vst.msk [vmem:[#allocation3 + $0x128] sm:$0xff] %vm1724, 0.0
      %2299 = vst.msk [vmem:[#allocation3 + $0x130] sm:$0x3] %vm2262, 0.0
      %2300 = vst.msk [vmem:[#allocation3 + $0x138] sm:$0xff] %vm1724, 0.0
      %2301 = vst.msk [vmem:[#allocation3 + $0x140] sm:$0xff] %vm1724, 0.0
      %2302 = vst.msk [vmem:[#allocation3 + $0x148] sm:$0x3] %vm2262, 0.0
      %2303 = vst.msk [vmem:[#allocation3 + $0x150] sm:$0xff] %vm1724, 0.0
      %2304 = vst.msk [vmem:[#allocation3 + $0x158] sm:$0xff] %vm1724, 0.0
      %2305 = vst.msk [vmem:[#allocation3 + $0x160] sm:$0x3] %vm2262, 0.0
      %2306 = vst.msk [vmem:[#allocation3 + $0x168] sm:$0xff] %vm1724, 0.0
      %2307 = vst.msk [vmem:[#allocation3 + $0x170] sm:$0xff] %vm1724, 0.0
      %2308 = vst.msk [vmem:[#allocation3 + $0x178] sm:$0x3] %vm2262, 0.0
      %2309 = vst.msk [vmem:[#allocation3 + $0x180] sm:$0xff] %vm1724, 0.0
      %2310 = vst.msk [vmem:[#allocation3 + $0x188] sm:$0xff] %vm1724, 0.0
      %2311 = vst.msk [vmem:[#allocation3 + $0x190] sm:$0x3] %vm2262, 0.0
      %2312 = vst.msk [vmem:[#allocation3 + $0x198] sm:$0xff] %vm1724, 0.0
      %2313 = vst.msk [vmem:[#allocation3 + $0x1a0] sm:$0xff] %vm1724, 0.0
      %2314 = vst.msk [vmem:[#allocation3 + $0x1a8] sm:$0x3] %vm2262, 0.0
      %s2315 = scalar_lea.vmem [#allocation3], 24
      %2316 = vst.msk [vmem:[%s2315 + $0x1] sm:$0xff] %vm1724, %v2228
      %2317 = vst.msk [vmem:[%s2315 + $0x9] sm:$0xff] %vm1724, %v2229
      %2318 = vst.msk [vmem:[%s2315 + $0x19] sm:$0xff] %vm1724, %v2230
      %2319 = vst.msk [vmem:[%s2315 + $0x21] sm:$0xff] %vm1724, %v2231
      %2320 = vst.msk [vmem:[%s2315 + $0x31] sm:$0xff] %vm1724, %v2232
      %2321 = vst.msk [vmem:[%s2315 + $0x39] sm:$0xff] %vm1724, %v2233
      %2322 = vst.msk [vmem:[%s2315 + $0x49] sm:$0xff] %vm1724, %v2234
      %2323 = vst.msk [vmem:[%s2315 + $0x51] sm:$0xff] %vm1724, %v2235
      %2324 = vst.msk [vmem:[%s2315 + $0x61] sm:$0xff] %vm1724, %v2236
      %2325 = vst.msk [vmem:[%s2315 + $0x69] sm:$0xff] %vm1724, %v2237
      %2326 = vst.msk [vmem:[%s2315 + $0x79] sm:$0xff] %vm1724, %v2238
      %2327 = vst.msk [vmem:[%s2315 + $0x81] sm:$0xff] %vm1724, %v2239
      %2328 = vst.msk [vmem:[%s2315 + $0x91] sm:$0xff] %vm1724, %v2240
      %2329 = vst.msk [vmem:[%s2315 + $0x99] sm:$0xff] %vm1724, %v2241
      %2330 = vst.msk [vmem:[%s2315 + $0xa9] sm:$0xff] %vm1724, %v2242
      %2331 = vst.msk [vmem:[%s2315 + $0xb1] sm:$0xff] %vm1724, %v2243
      %2332 = vst.msk [vmem:[%s2315 + $0xc1] sm:$0xff] %vm1724, %v2244
      %2333 = vst.msk [vmem:[%s2315 + $0xc9] sm:$0xff] %vm1724, %v2245
      %2334 = vst.msk [vmem:[%s2315 + $0xd9] sm:$0xff] %vm1724, %v2246
      %2335 = vst.msk [vmem:[%s2315 + $0xe1] sm:$0xff] %vm1724, %v2247
      %2336 = vst.msk [vmem:[%s2315 + $0xf1] sm:$0xff] %vm1724, %v2248
      %2337 = vst.msk [vmem:[%s2315 + $0xf9] sm:$0xff] %vm1724, %v2249
      %2338 = vst.msk [vmem:[%s2315 + $0x109] sm:$0xff] %vm1724, %v2250
      %2339 = vst.msk [vmem:[%s2315 + $0x111] sm:$0xff] %vm1724, %v2251
      %2340 = vst.msk [vmem:[%s2315 + $0x121] sm:$0xff] %vm1724, %v2252
      %2341 = vst.msk [vmem:[%s2315 + $0x129] sm:$0xff] %vm1724, %v2253
      %2342 = vst.msk [vmem:[%s2315 + $0x139] sm:$0xff] %vm1724, %v2254
      %2343 = vst.msk [vmem:[%s2315 + $0x141] sm:$0xff] %vm1724, %v2255
      %2344 = vst.msk [vmem:[%s2315 + $0x151] sm:$0xff] %vm1724, %v2256
      %2345 = vst.msk [vmem:[%s2315 + $0x159] sm:$0xff] %vm1724, %v2257
      %2346 = vst.msk [vmem:[%s2315 + $0x169] sm:$0xff] %vm1724, %v2258
      %2347 = vst.msk [vmem:[%s2315 + $0x171] sm:$0xff] %vm1724, %v2259
      %v2348 = vld [vmem:[#allocation3] sm:$0xff]
      %v2349 = vld [vmem:[#allocation3 + $0x8] sm:$0xff]
      %v2350 = vld [vmem:[#allocation3 + $0x18] sm:$0xff]
      %v2351 = vld [vmem:[#allocation3 + $0x20] sm:$0xff]
      %v2352 = vld [vmem:[#allocation3 + $0x30] sm:$0xff]
      %v2353 = vld [vmem:[#allocation3 + $0x38] sm:$0xff]
      %v2354 = vld [vmem:[#allocation3 + $0x48] sm:$0xff]
      %v2355 = vld [vmem:[#allocation3 + $0x50] sm:$0xff]
      %v2356 = vld [vmem:[#allocation3 + $0x60] sm:$0xff]
      %v2357 = vld [vmem:[#allocation3 + $0x68] sm:$0xff]
      %v2358 = vld [vmem:[#allocation3 + $0x78] sm:$0xff]
      %v2359 = vld [vmem:[#allocation3 + $0x80] sm:$0xff]
      %v2360 = vld [vmem:[#allocation3 + $0x90] sm:$0xff]
      %v2361 = vld [vmem:[#allocation3 + $0x98] sm:$0xff]
      %v2362 = vld [vmem:[#allocation3 + $0xa8] sm:$0xff]
      %v2363 = vld [vmem:[#allocation3 + $0xb0] sm:$0xff]
      %v2364 = vld [vmem:[#allocation3 + $0xc0] sm:$0xff]
      %v2365 = vld [vmem:[#allocation3 + $0xc8] sm:$0xff]
      %v2366 = vld [vmem:[#allocation3 + $0xd8] sm:$0xff]
      %v2367 = vld [vmem:[#allocation3 + $0xe0] sm:$0xff]
      %v2368 = vld [vmem:[#allocation3 + $0xf0] sm:$0xff]
      %v2369 = vld [vmem:[#allocation3 + $0xf8] sm:$0xff]
      %v2370 = vld [vmem:[#allocation3 + $0x108] sm:$0xff]
      %v2371 = vld [vmem:[#allocation3 + $0x110] sm:$0xff]
      %v2372 = vld [vmem:[#allocation3 + $0x120] sm:$0xff]
      %v2373 = vld [vmem:[#allocation3 + $0x128] sm:$0xff]
      %v2374 = vld [vmem:[#allocation3 + $0x138] sm:$0xff]
      %v2375 = vld [vmem:[#allocation3 + $0x140] sm:$0xff]
      %v2376 = vld [vmem:[#allocation3 + $0x150] sm:$0xff]
      %v2377 = vld [vmem:[#allocation3 + $0x158] sm:$0xff]
      %v2378 = vld [vmem:[#allocation3 + $0x168] sm:$0xff]
      %v2379 = vld [vmem:[#allocation3 + $0x170] sm:$0xff]
      %v2380 = vld [vmem:[#allocation3 + $0x1] sm:$0xff]
      %v2381 = vld [vmem:[#allocation3 + $0x9] sm:$0xff]
      %v2382 = vld [vmem:[#allocation3 + $0x19] sm:$0xff]
      %v2383 = vld [vmem:[#allocation3 + $0x21] sm:$0xff]
      %v2384 = vld [vmem:[#allocation3 + $0x31] sm:$0xff]
      %v2385 = vld [vmem:[#allocation3 + $0x39] sm:$0xff]
      %v2386 = vld [vmem:[#allocation3 + $0x49] sm:$0xff]
      %v2387 = vld [vmem:[#allocation3 + $0x51] sm:$0xff]
      %v2388 = vld [vmem:[#allocation3 + $0x61] sm:$0xff]
      %v2389 = vld [vmem:[#allocation3 + $0x69] sm:$0xff]
      %v2390 = vld [vmem:[#allocation3 + $0x79] sm:$0xff]
      %v2391 = vld [vmem:[#allocation3 + $0x81] sm:$0xff]
      %v2392 = vld [vmem:[#allocation3 + $0x91] sm:$0xff]
      %v2393 = vld [vmem:[#allocation3 + $0x99] sm:$0xff]
      %v2394 = vld [vmem:[#allocation3 + $0xa9] sm:$0xff]
      %v2395 = vld [vmem:[#allocation3 + $0xb1] sm:$0xff]
      %v2396 = vld [vmem:[#allocation3 + $0xc1] sm:$0xff]
      %v2397 = vld [vmem:[#allocation3 + $0xc9] sm:$0xff]
      %v2398 = vld [vmem:[#allocation3 + $0xd9] sm:$0xff]
      %v2399 = vld [vmem:[#allocation3 + $0xe1] sm:$0xff]
      %v2400 = vld [vmem:[#allocation3 + $0xf1] sm:$0xff]
      %v2401 = vld [vmem:[#allocation3 + $0xf9] sm:$0xff]
      %v2402 = vld [vmem:[#allocation3 + $0x109] sm:$0xff]
      %v2403 = vld [vmem:[#allocation3 + $0x111] sm:$0xff]
      %v2404 = vld [vmem:[#allocation3 + $0x121] sm:$0xff]
      %v2405 = vld [vmem:[#allocation3 + $0x129] sm:$0xff]
      %v2406 = vld [vmem:[#allocation3 + $0x139] sm:$0xff]
      %v2407 = vld [vmem:[#allocation3 + $0x141] sm:$0xff]
      %v2408 = vld [vmem:[#allocation3 + $0x151] sm:$0xff]
      %v2409 = vld [vmem:[#allocation3 + $0x159] sm:$0xff]
      %v2410 = vld [vmem:[#allocation3 + $0x169] sm:$0xff]
      %v2411 = vld [vmem:[#allocation3 + $0x171] sm:$0xff]
      %v2412 = vld [vmem:[#allocation3 + $0x2] sm:$0xff]
      %v2413 = vld [vmem:[#allocation3 + $0xa] sm:$0xff]
      %v2414 = vld [vmem:[#allocation3 + $0x1a] sm:$0xff]
      %v2415 = vld [vmem:[#allocation3 + $0x22] sm:$0xff]
      %v2416 = vld [vmem:[#allocation3 + $0x32] sm:$0xff]
      %v2417 = vld [vmem:[#allocation3 + $0x3a] sm:$0xff]
      %v2418 = vld [vmem:[#allocation3 + $0x4a] sm:$0xff]
      %v2419 = vld [vmem:[#allocation3 + $0x52] sm:$0xff]
      %v2420 = vld [vmem:[#allocation3 + $0x62] sm:$0xff]
      %v2421 = vld [vmem:[#allocation3 + $0x6a] sm:$0xff]
      %v2422 = vld [vmem:[#allocation3 + $0x7a] sm:$0xff]
      %v2423 = vld [vmem:[#allocation3 + $0x82] sm:$0xff]
      %v2424 = vld [vmem:[#allocation3 + $0x92] sm:$0xff]
      %v2425 = vld [vmem:[#allocation3 + $0x9a] sm:$0xff]
      %v2426 = vld [vmem:[#allocation3 + $0xaa] sm:$0xff]
      %v2427 = vld [vmem:[#allocation3 + $0xb2] sm:$0xff]
      %v2428 = vld [vmem:[#allocation3 + $0xc2] sm:$0xff]
      %v2429 = vld [vmem:[#allocation3 + $0xca] sm:$0xff]
      %v2430 = vld [vmem:[#allocation3 + $0xda] sm:$0xff]
      %v2431 = vld [vmem:[#allocation3 + $0xe2] sm:$0xff]
      %v2432 = vld [vmem:[#allocation3 + $0xf2] sm:$0xff]
      %v2433 = vld [vmem:[#allocation3 + $0xfa] sm:$0xff]
      %v2434 = vld [vmem:[#allocation3 + $0x10a] sm:$0xff]
      %v2435 = vld [vmem:[#allocation3 + $0x112] sm:$0xff]
      %v2436 = vld [vmem:[#allocation3 + $0x122] sm:$0xff]
      %v2437 = vld [vmem:[#allocation3 + $0x12a] sm:$0xff]
      %v2438 = vld [vmem:[#allocation3 + $0x13a] sm:$0xff]
      %v2439 = vld [vmem:[#allocation3 + $0x142] sm:$0xff]
      %v2440 = vld [vmem:[#allocation3 + $0x152] sm:$0xff]
      %v2441 = vld [vmem:[#allocation3 + $0x15a] sm:$0xff]
      %v2442 = vld [vmem:[#allocation3 + $0x16a] sm:$0xff]
      %v2443 = vld [vmem:[#allocation3 + $0x172] sm:$0xff]
      %v2444 = vld [vmem:[%s2315] sm:$0xff]
      %v2445 = vld [vmem:[%s2315 + $0x8] sm:$0xff]
      %v2446 = vld [vmem:[%s2315 + $0x18] sm:$0xff]
      %v2447 = vld [vmem:[%s2315 + $0x20] sm:$0xff]
      %v2448 = vld [vmem:[%s2315 + $0x30] sm:$0xff]
      %v2449 = vld [vmem:[%s2315 + $0x38] sm:$0xff]
      %v2450 = vld [vmem:[%s2315 + $0x48] sm:$0xff]
      %v2451 = vld [vmem:[%s2315 + $0x50] sm:$0xff]
      %v2452 = vld [vmem:[%s2315 + $0x60] sm:$0xff]
      %v2453 = vld [vmem:[%s2315 + $0x68] sm:$0xff]
      %v2454 = vld [vmem:[%s2315 + $0x78] sm:$0xff]
      %v2455 = vld [vmem:[%s2315 + $0x80] sm:$0xff]
      %v2456 = vld [vmem:[%s2315 + $0x90] sm:$0xff]
      %v2457 = vld [vmem:[%s2315 + $0x98] sm:$0xff]
      %v2458 = vld [vmem:[%s2315 + $0xa8] sm:$0xff]
      %v2459 = vld [vmem:[%s2315 + $0xb0] sm:$0xff]
      %v2460 = vld [vmem:[%s2315 + $0xc0] sm:$0xff]
      %v2461 = vld [vmem:[%s2315 + $0xc8] sm:$0xff]
      %v2462 = vld [vmem:[%s2315 + $0xd8] sm:$0xff]
      %v2463 = vld [vmem:[%s2315 + $0xe0] sm:$0xff]
      %v2464 = vld [vmem:[%s2315 + $0xf0] sm:$0xff]
      %v2465 = vld [vmem:[%s2315 + $0xf8] sm:$0xff]
      %v2466 = vld [vmem:[%s2315 + $0x108] sm:$0xff]
      %v2467 = vld [vmem:[%s2315 + $0x110] sm:$0xff]
      %v2468 = vld [vmem:[%s2315 + $0x120] sm:$0xff]
      %v2469 = vld [vmem:[%s2315 + $0x128] sm:$0xff]
      %v2470 = vld [vmem:[%s2315 + $0x138] sm:$0xff]
      %v2471 = vld [vmem:[%s2315 + $0x140] sm:$0xff]
      %v2472 = vld [vmem:[%s2315 + $0x150] sm:$0xff]
      %v2473 = vld [vmem:[%s2315 + $0x158] sm:$0xff]
      %v2474 = vld [vmem:[%s2315 + $0x168] sm:$0xff]
      %v2475 = vld [vmem:[%s2315 + $0x170] sm:$0xff]
      %v2476 = vld [vmem:[%s2315 + $0x1] sm:$0xff]
      %v2477 = vld [vmem:[%s2315 + $0x9] sm:$0xff]
      %v2478 = vld [vmem:[%s2315 + $0x19] sm:$0xff]
      %v2479 = vld [vmem:[%s2315 + $0x21] sm:$0xff]
      %v2480 = vld [vmem:[%s2315 + $0x31] sm:$0xff]
      %v2481 = vld [vmem:[%s2315 + $0x39] sm:$0xff]
      %v2482 = vld [vmem:[%s2315 + $0x49] sm:$0xff]
      %v2483 = vld [vmem:[%s2315 + $0x51] sm:$0xff]
      %v2484 = vld [vmem:[%s2315 + $0x61] sm:$0xff]
      %v2485 = vld [vmem:[%s2315 + $0x69] sm:$0xff]
      %v2486 = vld [vmem:[%s2315 + $0x79] sm:$0xff]
      %v2487 = vld [vmem:[%s2315 + $0x81] sm:$0xff]
      %v2488 = vld [vmem:[%s2315 + $0x91] sm:$0xff]
      %v2489 = vld [vmem:[%s2315 + $0x99] sm:$0xff]
      %v2490 = vld [vmem:[%s2315 + $0xa9] sm:$0xff]
      %v2491 = vld [vmem:[%s2315 + $0xb1] sm:$0xff]
      %v2492 = vld [vmem:[%s2315 + $0xc1] sm:$0xff]
      %v2493 = vld [vmem:[%s2315 + $0xc9] sm:$0xff]
      %v2494 = vld [vmem:[%s2315 + $0xd9] sm:$0xff]
      %v2495 = vld [vmem:[%s2315 + $0xe1] sm:$0xff]
      %v2496 = vld [vmem:[%s2315 + $0xf1] sm:$0xff]
      %v2497 = vld [vmem:[%s2315 + $0xf9] sm:$0xff]
      %v2498 = vld [vmem:[%s2315 + $0x109] sm:$0xff]
      %v2499 = vld [vmem:[%s2315 + $0x111] sm:$0xff]
      %v2500 = vld [vmem:[%s2315 + $0x121] sm:$0xff]
      %v2501 = vld [vmem:[%s2315 + $0x129] sm:$0xff]
      %v2502 = vld [vmem:[%s2315 + $0x139] sm:$0xff]
      %v2503 = vld [vmem:[%s2315 + $0x141] sm:$0xff]
      %v2504 = vld [vmem:[%s2315 + $0x151] sm:$0xff]
      %v2505 = vld [vmem:[%s2315 + $0x159] sm:$0xff]
      %v2506 = vld [vmem:[%s2315 + $0x169] sm:$0xff]
      %v2507 = vld [vmem:[%s2315 + $0x171] sm:$0xff]
      %v2508 = vld [vmem:[%s2315 + $0x2] sm:$0xff]
      %v2509 = vld [vmem:[%s2315 + $0xa] sm:$0xff]
      %v2510 = vld [vmem:[%s2315 + $0x1a] sm:$0xff]
      %v2511 = vld [vmem:[%s2315 + $0x22] sm:$0xff]
      %v2512 = vld [vmem:[%s2315 + $0x32] sm:$0xff]
      %v2513 = vld [vmem:[%s2315 + $0x3a] sm:$0xff]
      %v2514 = vld [vmem:[%s2315 + $0x4a] sm:$0xff]
      %v2515 = vld [vmem:[%s2315 + $0x52] sm:$0xff]
      %v2516 = vld [vmem:[%s2315 + $0x62] sm:$0xff]
      %v2517 = vld [vmem:[%s2315 + $0x6a] sm:$0xff]
      %v2518 = vld [vmem:[%s2315 + $0x7a] sm:$0xff]
      %v2519 = vld [vmem:[%s2315 + $0x82] sm:$0xff]
      %v2520 = vld [vmem:[%s2315 + $0x92] sm:$0xff]
      %v2521 = vld [vmem:[%s2315 + $0x9a] sm:$0xff]
      %v2522 = vld [vmem:[%s2315 + $0xaa] sm:$0xff]
      %v2523 = vld [vmem:[%s2315 + $0xb2] sm:$0xff]
      %v2524 = vld [vmem:[%s2315 + $0xc2] sm:$0xff]
      %v2525 = vld [vmem:[%s2315 + $0xca] sm:$0xff]
      %v2526 = vld [vmem:[%s2315 + $0xda] sm:$0xff]
      %v2527 = vld [vmem:[%s2315 + $0xe2] sm:$0xff]
      %v2528 = vld [vmem:[%s2315 + $0xf2] sm:$0xff]
      %v2529 = vld [vmem:[%s2315 + $0xfa] sm:$0xff]
      %v2530 = vld [vmem:[%s2315 + $0x10a] sm:$0xff]
      %v2531 = vld [vmem:[%s2315 + $0x112] sm:$0xff]
      %v2532 = vld [vmem:[%s2315 + $0x122] sm:$0xff]
      %v2533 = vld [vmem:[%s2315 + $0x12a] sm:$0xff]
      %v2534 = vld [vmem:[%s2315 + $0x13a] sm:$0xff]
      %v2535 = vld [vmem:[%s2315 + $0x142] sm:$0xff]
      %v2536 = vld [vmem:[%s2315 + $0x152] sm:$0xff]
      %v2537 = vld [vmem:[%s2315 + $0x15a] sm:$0xff]
      %v2538 = vld [vmem:[%s2315 + $0x16a] sm:$0xff]
      %v2539 = vld [vmem:[%s2315 + $0x172] sm:$0xff]
      %s2540 = scalar_lea.vmem [#allocation3], 48
      %v2541 = vld [vmem:[%s2540] sm:$0xff]
      %v2542 = vld [vmem:[%s2540 + $0x8] sm:$0xff]
      %v2543 = vld [vmem:[%s2540 + $0x18] sm:$0xff]
      %v2544 = vld [vmem:[%s2540 + $0x20] sm:$0xff]
      %v2545 = vld [vmem:[%s2540 + $0x30] sm:$0xff]
      %v2546 = vld [vmem:[%s2540 + $0x38] sm:$0xff]
      %v2547 = vld [vmem:[%s2540 + $0x48] sm:$0xff]
      %v2548 = vld [vmem:[%s2540 + $0x50] sm:$0xff]
      %v2549 = vld [vmem:[%s2540 + $0x60] sm:$0xff]
      %v2550 = vld [vmem:[%s2540 + $0x68] sm:$0xff]
      %v2551 = vld [vmem:[%s2540 + $0x78] sm:$0xff]
      %v2552 = vld [vmem:[%s2540 + $0x80] sm:$0xff]
      %v2553 = vld [vmem:[%s2540 + $0x90] sm:$0xff]
      %v2554 = vld [vmem:[%s2540 + $0x98] sm:$0xff]
      %v2555 = vld [vmem:[%s2540 + $0xa8] sm:$0xff]
      %v2556 = vld [vmem:[%s2540 + $0xb0] sm:$0xff]
      %v2557 = vld [vmem:[%s2540 + $0xc0] sm:$0xff]
      %v2558 = vld [vmem:[%s2540 + $0xc8] sm:$0xff]
      %v2559 = vld [vmem:[%s2540 + $0xd8] sm:$0xff]
      %v2560 = vld [vmem:[%s2540 + $0xe0] sm:$0xff]
      %v2561 = vld [vmem:[%s2540 + $0xf0] sm:$0xff]
      %v2562 = vld [vmem:[%s2540 + $0xf8] sm:$0xff]
      %v2563 = vld [vmem:[%s2540 + $0x108] sm:$0xff]
      %v2564 = vld [vmem:[%s2540 + $0x110] sm:$0xff]
      %v2565 = vld [vmem:[%s2540 + $0x120] sm:$0xff]
      %v2566 = vld [vmem:[%s2540 + $0x128] sm:$0xff]
      %v2567 = vld [vmem:[%s2540 + $0x138] sm:$0xff]
      %v2568 = vld [vmem:[%s2540 + $0x140] sm:$0xff]
      %v2569 = vld [vmem:[%s2540 + $0x150] sm:$0xff]
      %v2570 = vld [vmem:[%s2540 + $0x158] sm:$0xff]
      %v2571 = vld [vmem:[%s2540 + $0x168] sm:$0xff]
      %v2572 = vld [vmem:[%s2540 + $0x170] sm:$0xff]
      %v2573 = vld [vmem:[%s2540 + $0x1] sm:$0xff]
      %v2574 = vld [vmem:[%s2540 + $0x9] sm:$0xff]
      %v2575 = vld [vmem:[%s2540 + $0x19] sm:$0xff]
      %v2576 = vld [vmem:[%s2540 + $0x21] sm:$0xff]
      %v2577 = vld [vmem:[%s2540 + $0x31] sm:$0xff]
      %v2578 = vld [vmem:[%s2540 + $0x39] sm:$0xff]
      %v2579 = vld [vmem:[%s2540 + $0x49] sm:$0xff]
      %v2580 = vld [vmem:[%s2540 + $0x51] sm:$0xff]
      %v2581 = vld [vmem:[%s2540 + $0x61] sm:$0xff]
      %v2582 = vld [vmem:[%s2540 + $0x69] sm:$0xff]
      %v2583 = vld [vmem:[%s2540 + $0x79] sm:$0xff]
      %v2584 = vld [vmem:[%s2540 + $0x81] sm:$0xff]
      %v2585 = vld [vmem:[%s2540 + $0x91] sm:$0xff]
      %v2586 = vld [vmem:[%s2540 + $0x99] sm:$0xff]
      %v2587 = vld [vmem:[%s2540 + $0xa9] sm:$0xff]
      %v2588 = vld [vmem:[%s2540 + $0xb1] sm:$0xff]
      %v2589 = vld [vmem:[%s2540 + $0xc1] sm:$0xff]
      %v2590 = vld [vmem:[%s2540 + $0xc9] sm:$0xff]
      %v2591 = vld [vmem:[%s2540 + $0xd9] sm:$0xff]
      %v2592 = vld [vmem:[%s2540 + $0xe1] sm:$0xff]
      %v2593 = vld [vmem:[%s2540 + $0xf1] sm:$0xff]
      %v2594 = vld [vmem:[%s2540 + $0xf9] sm:$0xff]
      %v2595 = vld [vmem:[%s2540 + $0x109] sm:$0xff]
      %v2596 = vld [vmem:[%s2540 + $0x111] sm:$0xff]
      %v2597 = vld [vmem:[%s2540 + $0x121] sm:$0xff]
      %v2598 = vld [vmem:[%s2540 + $0x129] sm:$0xff]
      %v2599 = vld [vmem:[%s2540 + $0x139] sm:$0xff]
      %v2600 = vld [vmem:[%s2540 + $0x141] sm:$0xff]
      %v2601 = vld [vmem:[%s2540 + $0x151] sm:$0xff]
      %v2602 = vld [vmem:[%s2540 + $0x159] sm:$0xff]
      %v2603 = vld [vmem:[%s2540 + $0x169] sm:$0xff]
      %v2604 = vld [vmem:[%s2540 + $0x171] sm:$0xff]
      %v2605 = vld [vmem:[%s2540 + $0x2] sm:$0xff]
      %v2606 = vld [vmem:[%s2540 + $0xa] sm:$0xff]
      %v2607 = vld [vmem:[%s2540 + $0x1a] sm:$0xff]
      %v2608 = vld [vmem:[%s2540 + $0x22] sm:$0xff]
      %v2609 = vld [vmem:[%s2540 + $0x32] sm:$0xff]
      %v2610 = vld [vmem:[%s2540 + $0x3a] sm:$0xff]
      %v2611 = vld [vmem:[%s2540 + $0x4a] sm:$0xff]
      %v2612 = vld [vmem:[%s2540 + $0x52] sm:$0xff]
      %v2613 = vld [vmem:[%s2540 + $0x62] sm:$0xff]
      %v2614 = vld [vmem:[%s2540 + $0x6a] sm:$0xff]
      %v2615 = vld [vmem:[%s2540 + $0x7a] sm:$0xff]
      %v2616 = vld [vmem:[%s2540 + $0x82] sm:$0xff]
      %v2617 = vld [vmem:[%s2540 + $0x92] sm:$0xff]
      %v2618 = vld [vmem:[%s2540 + $0x9a] sm:$0xff]
      %v2619 = vld [vmem:[%s2540 + $0xaa] sm:$0xff]
      %v2620 = vld [vmem:[%s2540 + $0xb2] sm:$0xff]
      %v2621 = vld [vmem:[%s2540 + $0xc2] sm:$0xff]
      %v2622 = vld [vmem:[%s2540 + $0xca] sm:$0xff]
      %v2623 = vld [vmem:[%s2540 + $0xda] sm:$0xff]
      %v2624 = vld [vmem:[%s2540 + $0xe2] sm:$0xff]
      %v2625 = vld [vmem:[%s2540 + $0xf2] sm:$0xff]
      %v2626 = vld [vmem:[%s2540 + $0xfa] sm:$0xff]
      %v2627 = vld [vmem:[%s2540 + $0x10a] sm:$0xff]
      %v2628 = vld [vmem:[%s2540 + $0x112] sm:$0xff]
      %v2629 = vld [vmem:[%s2540 + $0x122] sm:$0xff]
      %v2630 = vld [vmem:[%s2540 + $0x12a] sm:$0xff]
      %v2631 = vld [vmem:[%s2540 + $0x13a] sm:$0xff]
      %v2632 = vld [vmem:[%s2540 + $0x142] sm:$0xff]
      %v2633 = vld [vmem:[%s2540 + $0x152] sm:$0xff]
      %v2634 = vld [vmem:[%s2540 + $0x15a] sm:$0xff]
      %v2635 = vld [vmem:[%s2540 + $0x16a] sm:$0xff]
      %v2636 = vld [vmem:[%s2540 + $0x172] sm:$0xff]
      %2669 = vrot.lane.b32.xlu0 %v2380, 16
      %v2670 = vpop.permute.xlu0 %2669
      %2671 = vrot.lane.b32.xlu0 %v2381, 16
      %v2672 = vpop.permute.xlu0 %2671
      %2673 = vrot.lane.b32.xlu0 %v2382, 16
      %v2674 = vpop.permute.xlu0 %2673
      %2675 = vrot.lane.b32.xlu0 %v2383, 16
      %v2676 = vpop.permute.xlu0 %2675
      %2677 = vrot.lane.b32.xlu0 %v2384, 16
      %v2678 = vpop.permute.xlu0 %2677
      %2679 = vrot.lane.b32.xlu0 %v2385, 16
      %v2680 = vpop.permute.xlu0 %2679
      %2681 = vrot.lane.b32.xlu0 %v2386, 16
      %v2682 = vpop.permute.xlu0 %2681
      %2683 = vrot.lane.b32.xlu0 %v2387, 16
      %v2684 = vpop.permute.xlu0 %2683
      %2685 = vrot.lane.b32.xlu0 %v2388, 16
      %v2686 = vpop.permute.xlu0 %2685
      %2687 = vrot.lane.b32.xlu0 %v2389, 16
      %v2688 = vpop.permute.xlu0 %2687
      %2689 = vrot.lane.b32.xlu0 %v2390, 16
      %v2690 = vpop.permute.xlu0 %2689
      %2691 = vrot.lane.b32.xlu0 %v2391, 16
      %v2692 = vpop.permute.xlu0 %2691
      %2693 = vrot.lane.b32.xlu0 %v2392, 16
      %v2694 = vpop.permute.xlu0 %2693
      %2695 = vrot.lane.b32.xlu0 %v2393, 16
      %v2696 = vpop.permute.xlu0 %2695
      %2697 = vrot.lane.b32.xlu0 %v2394, 16
      %v2698 = vpop.permute.xlu0 %2697
      %2699 = vrot.lane.b32.xlu0 %v2395, 16
      %v2700 = vpop.permute.xlu0 %2699
      %2701 = vrot.lane.b32.xlu0 %v2396, 16
      %v2702 = vpop.permute.xlu0 %2701
      %2703 = vrot.lane.b32.xlu0 %v2397, 16
      %v2704 = vpop.permute.xlu0 %2703
      %2705 = vrot.lane.b32.xlu0 %v2398, 16
      %v2706 = vpop.permute.xlu0 %2705
      %2707 = vrot.lane.b32.xlu0 %v2399, 16
      %v2708 = vpop.permute.xlu0 %2707
      %2709 = vrot.lane.b32.xlu0 %v2400, 16
      %v2710 = vpop.permute.xlu0 %2709
      %2711 = vrot.lane.b32.xlu0 %v2401, 16
      %v2712 = vpop.permute.xlu0 %2711
      %2713 = vrot.lane.b32.xlu0 %v2402, 16
      %v2714 = vpop.permute.xlu0 %2713
      %2715 = vrot.lane.b32.xlu0 %v2403, 16
      %v2716 = vpop.permute.xlu0 %2715
      %2717 = vrot.lane.b32.xlu0 %v2404, 16
      %v2718 = vpop.permute.xlu0 %2717
      %2719 = vrot.lane.b32.xlu0 %v2405, 16
      %v2720 = vpop.permute.xlu0 %2719
      %2721 = vrot.lane.b32.xlu0 %v2406, 16
      %v2722 = vpop.permute.xlu0 %2721
      %2723 = vrot.lane.b32.xlu0 %v2407, 16
      %v2724 = vpop.permute.xlu0 %2723
      %2725 = vrot.lane.b32.xlu0 %v2408, 16
      %v2726 = vpop.permute.xlu0 %2725
      %2727 = vrot.lane.b32.xlu0 %v2409, 16
      %v2728 = vpop.permute.xlu0 %2727
      %2729 = vrot.lane.b32.xlu0 %v2410, 16
      %v2730 = vpop.permute.xlu0 %2729
      %2731 = vrot.lane.b32.xlu0 %v2411, 16
      %v2732 = vpop.permute.xlu0 %2731
      %2797 = vrot.lane.b32.xlu0 %v2412, 32
      %v2798 = vpop.permute.xlu0 %2797
      %2799 = vrot.lane.b32.xlu0 %v2413, 32
      %v2800 = vpop.permute.xlu0 %2799
      %2801 = vrot.lane.b32.xlu0 %v2414, 32
      %v2802 = vpop.permute.xlu0 %2801
      %2803 = vrot.lane.b32.xlu0 %v2415, 32
      %v2804 = vpop.permute.xlu0 %2803
      %2805 = vrot.lane.b32.xlu0 %v2416, 32
      %v2806 = vpop.permute.xlu0 %2805
      %2807 = vrot.lane.b32.xlu0 %v2417, 32
      %v2808 = vpop.permute.xlu0 %2807
      %2809 = vrot.lane.b32.xlu0 %v2418, 32
      %v2810 = vpop.permute.xlu0 %2809
      %2811 = vrot.lane.b32.xlu0 %v2419, 32
      %v2812 = vpop.permute.xlu0 %2811
      %2813 = vrot.lane.b32.xlu0 %v2420, 32
      %v2814 = vpop.permute.xlu0 %2813
      %2815 = vrot.lane.b32.xlu0 %v2421, 32
      %v2816 = vpop.permute.xlu0 %2815
      %2817 = vrot.lane.b32.xlu0 %v2422, 32
      %v2818 = vpop.permute.xlu0 %2817
      %2819 = vrot.lane.b32.xlu0 %v2423, 32
      %v2820 = vpop.permute.xlu0 %2819
      %2821 = vrot.lane.b32.xlu0 %v2424, 32
      %v2822 = vpop.permute.xlu0 %2821
      %2823 = vrot.lane.b32.xlu0 %v2425, 32
      %v2824 = vpop.permute.xlu0 %2823
      %2825 = vrot.lane.b32.xlu0 %v2426, 32
      %v2826 = vpop.permute.xlu0 %2825
      %2827 = vrot.lane.b32.xlu0 %v2427, 32
      %v2828 = vpop.permute.xlu0 %2827
      %2829 = vrot.lane.b32.xlu0 %v2428, 32
      %v2830 = vpop.permute.xlu0 %2829
      %2831 = vrot.lane.b32.xlu0 %v2429, 32
      %v2832 = vpop.permute.xlu0 %2831
      %2833 = vrot.lane.b32.xlu0 %v2430, 32
      %v2834 = vpop.permute.xlu0 %2833
      %2835 = vrot.lane.b32.xlu0 %v2431, 32
      %v2836 = vpop.permute.xlu0 %2835
      %2837 = vrot.lane.b32.xlu0 %v2432, 32
      %v2838 = vpop.permute.xlu0 %2837
      %2839 = vrot.lane.b32.xlu0 %v2433, 32
      %v2840 = vpop.permute.xlu0 %2839
      %2841 = vrot.lane.b32.xlu0 %v2434, 32
      %v2842 = vpop.permute.xlu0 %2841
      %2843 = vrot.lane.b32.xlu0 %v2435, 32
      %v2844 = vpop.permute.xlu0 %2843
      %2845 = vrot.lane.b32.xlu0 %v2436, 32
      %v2846 = vpop.permute.xlu0 %2845
      %2847 = vrot.lane.b32.xlu0 %v2437, 32
      %v2848 = vpop.permute.xlu0 %2847
      %2849 = vrot.lane.b32.xlu0 %v2438, 32
      %v2850 = vpop.permute.xlu0 %2849
      %2851 = vrot.lane.b32.xlu0 %v2439, 32
      %v2852 = vpop.permute.xlu0 %2851
      %2853 = vrot.lane.b32.xlu0 %v2440, 32
      %v2854 = vpop.permute.xlu0 %2853
      %2855 = vrot.lane.b32.xlu0 %v2441, 32
      %v2856 = vpop.permute.xlu0 %2855
      %2857 = vrot.lane.b32.xlu0 %v2442, 32
      %v2858 = vpop.permute.xlu0 %2857
      %2859 = vrot.lane.b32.xlu0 %v2443, 32
      %v2860 = vpop.permute.xlu0 %2859
      %2925 = vrot.lane.b32.xlu0 %v2444, 48
      %v2926 = vpop.permute.xlu0 %2925
      %2927 = vrot.lane.b32.xlu0 %v2445, 48
      %v2928 = vpop.permute.xlu0 %2927
      %2929 = vrot.lane.b32.xlu0 %v2446, 48
      %v2930 = vpop.permute.xlu0 %2929
      %2931 = vrot.lane.b32.xlu0 %v2447, 48
      %v2932 = vpop.permute.xlu0 %2931
      %2933 = vrot.lane.b32.xlu0 %v2448, 48
      %v2934 = vpop.permute.xlu0 %2933
      %2935 = vrot.lane.b32.xlu0 %v2449, 48
      %v2936 = vpop.permute.xlu0 %2935
      %2937 = vrot.lane.b32.xlu0 %v2450, 48
      %v2938 = vpop.permute.xlu0 %2937
      %2939 = vrot.lane.b32.xlu0 %v2451, 48
      %v2940 = vpop.permute.xlu0 %2939
      %2941 = vrot.lane.b32.xlu0 %v2452, 48
      %v2942 = vpop.permute.xlu0 %2941
      %2943 = vrot.lane.b32.xlu0 %v2453, 48
      %v2944 = vpop.permute.xlu0 %2943
      %2945 = vrot.lane.b32.xlu0 %v2454, 48
      %v2946 = vpop.permute.xlu0 %2945
      %2947 = vrot.lane.b32.xlu0 %v2455, 48
      %v2948 = vpop.permute.xlu0 %2947
      %2949 = vrot.lane.b32.xlu0 %v2456, 48
      %v2950 = vpop.permute.xlu0 %2949
      %2951 = vrot.lane.b32.xlu0 %v2457, 48
      %v2952 = vpop.permute.xlu0 %2951
      %2953 = vrot.lane.b32.xlu0 %v2458, 48
      %v2954 = vpop.permute.xlu0 %2953
      %2955 = vrot.lane.b32.xlu0 %v2459, 48
      %v2956 = vpop.permute.xlu0 %2955
      %2957 = vrot.lane.b32.xlu0 %v2460, 48
      %v2958 = vpop.permute.xlu0 %2957
      %2959 = vrot.lane.b32.xlu0 %v2461, 48
      %v2960 = vpop.permute.xlu0 %2959
      %2961 = vrot.lane.b32.xlu0 %v2462, 48
      %v2962 = vpop.permute.xlu0 %2961
      %2963 = vrot.lane.b32.xlu0 %v2463, 48
      %v2964 = vpop.permute.xlu0 %2963
      %2965 = vrot.lane.b32.xlu0 %v2464, 48
      %v2966 = vpop.permute.xlu0 %2965
      %2967 = vrot.lane.b32.xlu0 %v2465, 48
      %v2968 = vpop.permute.xlu0 %2967
      %2969 = vrot.lane.b32.xlu0 %v2466, 48
      %v2970 = vpop.permute.xlu0 %2969
      %2971 = vrot.lane.b32.xlu0 %v2467, 48
      %v2972 = vpop.permute.xlu0 %2971
      %2973 = vrot.lane.b32.xlu0 %v2468, 48
      %v2974 = vpop.permute.xlu0 %2973
      %2975 = vrot.lane.b32.xlu0 %v2469, 48
      %v2976 = vpop.permute.xlu0 %2975
      %2977 = vrot.lane.b32.xlu0 %v2470, 48
      %v2978 = vpop.permute.xlu0 %2977
      %2979 = vrot.lane.b32.xlu0 %v2471, 48
      %v2980 = vpop.permute.xlu0 %2979
      %2981 = vrot.lane.b32.xlu0 %v2472, 48
      %v2982 = vpop.permute.xlu0 %2981
      %2983 = vrot.lane.b32.xlu0 %v2473, 48
      %v2984 = vpop.permute.xlu0 %2983
      %2985 = vrot.lane.b32.xlu0 %v2474, 48
      %v2986 = vpop.permute.xlu0 %2985
      %2987 = vrot.lane.b32.xlu0 %v2475, 48
      %v2988 = vpop.permute.xlu0 %2987
      %3053 = vrot.lane.b32.xlu0 %v2476, 64
      %v3054 = vpop.permute.xlu0 %3053
      %3055 = vrot.lane.b32.xlu0 %v2477, 64
      %v3056 = vpop.permute.xlu0 %3055
      %3057 = vrot.lane.b32.xlu0 %v2478, 64
      %v3058 = vpop.permute.xlu0 %3057
      %3059 = vrot.lane.b32.xlu0 %v2479, 64
      %v3060 = vpop.permute.xlu0 %3059
      %3061 = vrot.lane.b32.xlu0 %v2480, 64
      %v3062 = vpop.permute.xlu0 %3061
      %3063 = vrot.lane.b32.xlu0 %v2481, 64
      %v3064 = vpop.permute.xlu0 %3063
      %3065 = vrot.lane.b32.xlu0 %v2482, 64
      %v3066 = vpop.permute.xlu0 %3065
      %3067 = vrot.lane.b32.xlu0 %v2483, 64
      %v3068 = vpop.permute.xlu0 %3067
      %3069 = vrot.lane.b32.xlu0 %v2484, 64
      %v3070 = vpop.permute.xlu0 %3069
      %3071 = vrot.lane.b32.xlu0 %v2485, 64
      %v3072 = vpop.permute.xlu0 %3071
      %3073 = vrot.lane.b32.xlu0 %v2486, 64
      %v3074 = vpop.permute.xlu0 %3073
      %3075 = vrot.lane.b32.xlu0 %v2487, 64
      %v3076 = vpop.permute.xlu0 %3075
      %3077 = vrot.lane.b32.xlu0 %v2488, 64
      %v3078 = vpop.permute.xlu0 %3077
      %3079 = vrot.lane.b32.xlu0 %v2489, 64
      %v3080 = vpop.permute.xlu0 %3079
      %3081 = vrot.lane.b32.xlu0 %v2490, 64
      %v3082 = vpop.permute.xlu0 %3081
      %3083 = vrot.lane.b32.xlu0 %v2491, 64
      %v3084 = vpop.permute.xlu0 %3083
      %3085 = vrot.lane.b32.xlu0 %v2492, 64
      %v3086 = vpop.permute.xlu0 %3085
      %3087 = vrot.lane.b32.xlu0 %v2493, 64
      %v3088 = vpop.permute.xlu0 %3087
      %3089 = vrot.lane.b32.xlu0 %v2494, 64
      %v3090 = vpop.permute.xlu0 %3089
      %3091 = vrot.lane.b32.xlu0 %v2495, 64
      %v3092 = vpop.permute.xlu0 %3091
      %3093 = vrot.lane.b32.xlu0 %v2496, 64
      %v3094 = vpop.permute.xlu0 %3093
      %3095 = vrot.lane.b32.xlu0 %v2497, 64
      %v3096 = vpop.permute.xlu0 %3095
      %3097 = vrot.lane.b32.xlu0 %v2498, 64
      %v3098 = vpop.permute.xlu0 %3097
      %3099 = vrot.lane.b32.xlu0 %v2499, 64
      %v3100 = vpop.permute.xlu0 %3099
      %3101 = vrot.lane.b32.xlu0 %v2500, 64
      %v3102 = vpop.permute.xlu0 %3101
      %3103 = vrot.lane.b32.xlu0 %v2501, 64
      %v3104 = vpop.permute.xlu0 %3103
      %3105 = vrot.lane.b32.xlu0 %v2502, 64
      %v3106 = vpop.permute.xlu0 %3105
      %3107 = vrot.lane.b32.xlu0 %v2503, 64
      %v3108 = vpop.permute.xlu0 %3107
      %3109 = vrot.lane.b32.xlu0 %v2504, 64
      %v3110 = vpop.permute.xlu0 %3109
      %3111 = vrot.lane.b32.xlu0 %v2505, 64
      %v3112 = vpop.permute.xlu0 %3111
      %3113 = vrot.lane.b32.xlu0 %v2506, 64
      %v3114 = vpop.permute.xlu0 %3113
      %3115 = vrot.lane.b32.xlu0 %v2507, 64
      %v3116 = vpop.permute.xlu0 %3115
      %3181 = vrot.lane.b32.xlu0 %v2508, 80
      %v3182 = vpop.permute.xlu0 %3181
      %3183 = vrot.lane.b32.xlu0 %v2509, 80
      %v3184 = vpop.permute.xlu0 %3183
      %3185 = vrot.lane.b32.xlu0 %v2510, 80
      %v3186 = vpop.permute.xlu0 %3185
      %3187 = vrot.lane.b32.xlu0 %v2511, 80
      %v3188 = vpop.permute.xlu0 %3187
      %3189 = vrot.lane.b32.xlu0 %v2512, 80
      %v3190 = vpop.permute.xlu0 %3189
      %3191 = vrot.lane.b32.xlu0 %v2513, 80
      %v3192 = vpop.permute.xlu0 %3191
      %3193 = vrot.lane.b32.xlu0 %v2514, 80
      %v3194 = vpop.permute.xlu0 %3193
      %3195 = vrot.lane.b32.xlu0 %v2515, 80
      %v3196 = vpop.permute.xlu0 %3195
      %3197 = vrot.lane.b32.xlu0 %v2516, 80
      %v3198 = vpop.permute.xlu0 %3197
      %3199 = vrot.lane.b32.xlu0 %v2517, 80
      %v3200 = vpop.permute.xlu0 %3199
      %3201 = vrot.lane.b32.xlu0 %v2518, 80
      %v3202 = vpop.permute.xlu0 %3201
      %3203 = vrot.lane.b32.xlu0 %v2519, 80
      %v3204 = vpop.permute.xlu0 %3203
      %3205 = vrot.lane.b32.xlu0 %v2520, 80
      %v3206 = vpop.permute.xlu0 %3205
      %3207 = vrot.lane.b32.xlu0 %v2521, 80
      %v3208 = vpop.permute.xlu0 %3207
      %3209 = vrot.lane.b32.xlu0 %v2522, 80
      %v3210 = vpop.permute.xlu0 %3209
      %3211 = vrot.lane.b32.xlu0 %v2523, 80
      %v3212 = vpop.permute.xlu0 %3211
      %3213 = vrot.lane.b32.xlu0 %v2524, 80
      %v3214 = vpop.permute.xlu0 %3213
      %3215 = vrot.lane.b32.xlu0 %v2525, 80
      %v3216 = vpop.permute.xlu0 %3215
      %3217 = vrot.lane.b32.xlu0 %v2526, 80
      %v3218 = vpop.permute.xlu0 %3217
      %3219 = vrot.lane.b32.xlu0 %v2527, 80
      %v3220 = vpop.permute.xlu0 %3219
      %3221 = vrot.lane.b32.xlu0 %v2528, 80
      %v3222 = vpop.permute.xlu0 %3221
      %3223 = vrot.lane.b32.xlu0 %v2529, 80
      %v3224 = vpop.permute.xlu0 %3223
      %3225 = vrot.lane.b32.xlu0 %v2530, 80
      %v3226 = vpop.permute.xlu0 %3225
      %3227 = vrot.lane.b32.xlu0 %v2531, 80
      %v3228 = vpop.permute.xlu0 %3227
      %3229 = vrot.lane.b32.xlu0 %v2532, 80
      %v3230 = vpop.permute.xlu0 %3229
      %3231 = vrot.lane.b32.xlu0 %v2533, 80
      %v3232 = vpop.permute.xlu0 %3231
      %3233 = vrot.lane.b32.xlu0 %v2534, 80
      %v3234 = vpop.permute.xlu0 %3233
      %3235 = vrot.lane.b32.xlu0 %v2535, 80
      %v3236 = vpop.permute.xlu0 %3235
      %3237 = vrot.lane.b32.xlu0 %v2536, 80
      %v3238 = vpop.permute.xlu0 %3237
      %3239 = vrot.lane.b32.xlu0 %v2537, 80
      %v3240 = vpop.permute.xlu0 %3239
      %3241 = vrot.lane.b32.xlu0 %v2538, 80
      %v3242 = vpop.permute.xlu0 %3241
      %3243 = vrot.lane.b32.xlu0 %v2539, 80
      %v3244 = vpop.permute.xlu0 %3243
      %3309 = vrot.lane.b32.xlu0 %v2541, 96
      %v3310 = vpop.permute.xlu0 %3309
      %3311 = vrot.lane.b32.xlu0 %v2542, 96
      %v3312 = vpop.permute.xlu0 %3311
      %3313 = vrot.lane.b32.xlu0 %v2543, 96
      %v3314 = vpop.permute.xlu0 %3313
      %3315 = vrot.lane.b32.xlu0 %v2544, 96
      %v3316 = vpop.permute.xlu0 %3315
      %3317 = vrot.lane.b32.xlu0 %v2545, 96
      %v3318 = vpop.permute.xlu0 %3317
      %3319 = vrot.lane.b32.xlu0 %v2546, 96
      %v3320 = vpop.permute.xlu0 %3319
      %3321 = vrot.lane.b32.xlu0 %v2547, 96
      %v3322 = vpop.permute.xlu0 %3321
      %3323 = vrot.lane.b32.xlu0 %v2548, 96
      %v3324 = vpop.permute.xlu0 %3323
      %3325 = vrot.lane.b32.xlu0 %v2549, 96
      %v3326 = vpop.permute.xlu0 %3325
      %3327 = vrot.lane.b32.xlu0 %v2550, 96
      %v3328 = vpop.permute.xlu0 %3327
      %3329 = vrot.lane.b32.xlu0 %v2551, 96
      %v3330 = vpop.permute.xlu0 %3329
      %3331 = vrot.lane.b32.xlu0 %v2552, 96
      %v3332 = vpop.permute.xlu0 %3331
      %3333 = vrot.lane.b32.xlu0 %v2553, 96
      %v3334 = vpop.permute.xlu0 %3333
      %3335 = vrot.lane.b32.xlu0 %v2554, 96
      %v3336 = vpop.permute.xlu0 %3335
      %3337 = vrot.lane.b32.xlu0 %v2555, 96
      %v3338 = vpop.permute.xlu0 %3337
      %3339 = vrot.lane.b32.xlu0 %v2556, 96
      %v3340 = vpop.permute.xlu0 %3339
      %3341 = vrot.lane.b32.xlu0 %v2557, 96
      %v3342 = vpop.permute.xlu0 %3341
      %3343 = vrot.lane.b32.xlu0 %v2558, 96
      %v3344 = vpop.permute.xlu0 %3343
      %3345 = vrot.lane.b32.xlu0 %v2559, 96
      %v3346 = vpop.permute.xlu0 %3345
      %3347 = vrot.lane.b32.xlu0 %v2560, 96
      %v3348 = vpop.permute.xlu0 %3347
      %3349 = vrot.lane.b32.xlu0 %v2561, 96
      %v3350 = vpop.permute.xlu0 %3349
      %3351 = vrot.lane.b32.xlu0 %v2562, 96
      %v3352 = vpop.permute.xlu0 %3351
      %3353 = vrot.lane.b32.xlu0 %v2563, 96
      %v3354 = vpop.permute.xlu0 %3353
      %3355 = vrot.lane.b32.xlu0 %v2564, 96
      %v3356 = vpop.permute.xlu0 %3355
      %3357 = vrot.lane.b32.xlu0 %v2565, 96
      %v3358 = vpop.permute.xlu0 %3357
      %3359 = vrot.lane.b32.xlu0 %v2566, 96
      %v3360 = vpop.permute.xlu0 %3359
      %3361 = vrot.lane.b32.xlu0 %v2567, 96
      %v3362 = vpop.permute.xlu0 %3361
      %3363 = vrot.lane.b32.xlu0 %v2568, 96
      %v3364 = vpop.permute.xlu0 %3363
      %3365 = vrot.lane.b32.xlu0 %v2569, 96
      %v3366 = vpop.permute.xlu0 %3365
      %3367 = vrot.lane.b32.xlu0 %v2570, 96
      %v3368 = vpop.permute.xlu0 %3367
      %3369 = vrot.lane.b32.xlu0 %v2571, 96
      %v3370 = vpop.permute.xlu0 %3369
      %3371 = vrot.lane.b32.xlu0 %v2572, 96
      %v3372 = vpop.permute.xlu0 %3371
      %3437 = vrot.lane.b32.xlu0 %v2573, 112
      %v3438 = vpop.permute.xlu0 %3437
      %3439 = vrot.lane.b32.xlu0 %v2574, 112
      %v3440 = vpop.permute.xlu0 %3439
      %3441 = vrot.lane.b32.xlu0 %v2575, 112
      %v3442 = vpop.permute.xlu0 %3441
      %3443 = vrot.lane.b32.xlu0 %v2576, 112
      %v3444 = vpop.permute.xlu0 %3443
      %3445 = vrot.lane.b32.xlu0 %v2577, 112
      %v3446 = vpop.permute.xlu0 %3445
      %3447 = vrot.lane.b32.xlu0 %v2578, 112
      %v3448 = vpop.permute.xlu0 %3447
      %3449 = vrot.lane.b32.xlu0 %v2579, 112
      %v3450 = vpop.permute.xlu0 %3449
      %3451 = vrot.lane.b32.xlu0 %v2580, 112
      %v3452 = vpop.permute.xlu0 %3451
      %3453 = vrot.lane.b32.xlu0 %v2581, 112
      %v3454 = vpop.permute.xlu0 %3453
      %3455 = vrot.lane.b32.xlu0 %v2582, 112
      %v3456 = vpop.permute.xlu0 %3455
      %3457 = vrot.lane.b32.xlu0 %v2583, 112
      %v3458 = vpop.permute.xlu0 %3457
      %3459 = vrot.lane.b32.xlu0 %v2584, 112
      %v3460 = vpop.permute.xlu0 %3459
      %3461 = vrot.lane.b32.xlu0 %v2585, 112
      %v3462 = vpop.permute.xlu0 %3461
      %3463 = vrot.lane.b32.xlu0 %v2586, 112
      %v3464 = vpop.permute.xlu0 %3463
      %3465 = vrot.lane.b32.xlu0 %v2587, 112
      %v3466 = vpop.permute.xlu0 %3465
      %3467 = vrot.lane.b32.xlu0 %v2588, 112
      %v3468 = vpop.permute.xlu0 %3467
      %3469 = vrot.lane.b32.xlu0 %v2589, 112
      %v3470 = vpop.permute.xlu0 %3469
      %3471 = vrot.lane.b32.xlu0 %v2590, 112
      %v3472 = vpop.permute.xlu0 %3471
      %3473 = vrot.lane.b32.xlu0 %v2591, 112
      %v3474 = vpop.permute.xlu0 %3473
      %3475 = vrot.lane.b32.xlu0 %v2592, 112
      %v3476 = vpop.permute.xlu0 %3475
      %3477 = vrot.lane.b32.xlu0 %v2593, 112
      %v3478 = vpop.permute.xlu0 %3477
      %3479 = vrot.lane.b32.xlu0 %v2594, 112
      %v3480 = vpop.permute.xlu0 %3479
      %3481 = vrot.lane.b32.xlu0 %v2595, 112
      %v3482 = vpop.permute.xlu0 %3481
      %3483 = vrot.lane.b32.xlu0 %v2596, 112
      %v3484 = vpop.permute.xlu0 %3483
      %3485 = vrot.lane.b32.xlu0 %v2597, 112
      %v3486 = vpop.permute.xlu0 %3485
      %3487 = vrot.lane.b32.xlu0 %v2598, 112
      %v3488 = vpop.permute.xlu0 %3487
      %3489 = vrot.lane.b32.xlu0 %v2599, 112
      %v3490 = vpop.permute.xlu0 %3489
      %3491 = vrot.lane.b32.xlu0 %v2600, 112
      %v3492 = vpop.permute.xlu0 %3491
      %3493 = vrot.lane.b32.xlu0 %v2601, 112
      %v3494 = vpop.permute.xlu0 %3493
      %3495 = vrot.lane.b32.xlu0 %v2602, 112
      %v3496 = vpop.permute.xlu0 %3495
      %3497 = vrot.lane.b32.xlu0 %v2603, 112
      %v3498 = vpop.permute.xlu0 %3497
      %3499 = vrot.lane.b32.xlu0 %v2604, 112
      %v3500 = vpop.permute.xlu0 %3499
      %v3533 = vsel %vm1724, %v2348, %v2670
      %v3534 = vsel %vm1724, %v2349, %v2672
      %v3535 = vsel %vm1724, %v2350, %v2674
      %v3536 = vsel %vm1724, %v2351, %v2676
      %v3537 = vsel %vm1724, %v2352, %v2678
      %v3538 = vsel %vm1724, %v2353, %v2680
      %v3539 = vsel %vm1724, %v2354, %v2682
      %v3540 = vsel %vm1724, %v2355, %v2684
      %v3541 = vsel %vm1724, %v2356, %v2686
      %v3542 = vsel %vm1724, %v2357, %v2688
      %v3543 = vsel %vm1724, %v2358, %v2690
      %v3544 = vsel %vm1724, %v2359, %v2692
      %v3545 = vsel %vm1724, %v2360, %v2694
      %v3546 = vsel %vm1724, %v2361, %v2696
      %v3547 = vsel %vm1724, %v2362, %v2698
      %v3548 = vsel %vm1724, %v2363, %v2700
      %v3549 = vsel %vm1724, %v2364, %v2702
      %v3550 = vsel %vm1724, %v2365, %v2704
      %v3551 = vsel %vm1724, %v2366, %v2706
      %v3552 = vsel %vm1724, %v2367, %v2708
      %v3553 = vsel %vm1724, %v2368, %v2710
      %v3554 = vsel %vm1724, %v2369, %v2712
      %v3555 = vsel %vm1724, %v2370, %v2714
      %v3556 = vsel %vm1724, %v2371, %v2716
      %v3557 = vsel %vm1724, %v2372, %v2718
      %v3558 = vsel %vm1724, %v2373, %v2720
      %v3559 = vsel %vm1724, %v2374, %v2722
      %v3560 = vsel %vm1724, %v2375, %v2724
      %v3561 = vsel %vm1724, %v2376, %v2726
      %v3562 = vsel %vm1724, %v2377, %v2728
      %v3563 = vsel %vm1724, %v2378, %v2730
      %v3564 = vsel %vm1724, %v2379, %v2732
      %v3565 = vsel %vm1790, %v3533, %v2798
      %v3566 = vsel %vm1790, %v3534, %v2800
      %v3567 = vsel %vm1790, %v3535, %v2802
      %v3568 = vsel %vm1790, %v3536, %v2804
      %v3569 = vsel %vm1790, %v3537, %v2806
      %v3570 = vsel %vm1790, %v3538, %v2808
      %v3571 = vsel %vm1790, %v3539, %v2810
      %v3572 = vsel %vm1790, %v3540, %v2812
      %v3573 = vsel %vm1790, %v3541, %v2814
      %v3574 = vsel %vm1790, %v3542, %v2816
      %v3575 = vsel %vm1790, %v3543, %v2818
      %v3576 = vsel %vm1790, %v3544, %v2820
      %v3577 = vsel %vm1790, %v3545, %v2822
      %v3578 = vsel %vm1790, %v3546, %v2824
      %v3579 = vsel %vm1790, %v3547, %v2826
      %v3580 = vsel %vm1790, %v3548, %v2828
      %v3581 = vsel %vm1790, %v3549, %v2830
      %v3582 = vsel %vm1790, %v3550, %v2832
      %v3583 = vsel %vm1790, %v3551, %v2834
      %v3584 = vsel %vm1790, %v3552, %v2836
      %v3585 = vsel %vm1790, %v3553, %v2838
      %v3586 = vsel %vm1790, %v3554, %v2840
      %v3587 = vsel %vm1790, %v3555, %v2842
      %v3588 = vsel %vm1790, %v3556, %v2844
      %v3589 = vsel %vm1790, %v3557, %v2846
      %v3590 = vsel %vm1790, %v3558, %v2848
      %v3591 = vsel %vm1790, %v3559, %v2850
      %v3592 = vsel %vm1790, %v3560, %v2852
      %v3593 = vsel %vm1790, %v3561, %v2854
      %v3594 = vsel %vm1790, %v3562, %v2856
      %v3595 = vsel %vm1790, %v3563, %v2858
      %v3596 = vsel %vm1790, %v3564, %v2860
      %v3597 = vsel %vm1856, %v3565, %v2926
      %v3598 = vsel %vm1856, %v3566, %v2928
      %v3599 = vsel %vm1856, %v3567, %v2930
      %v3600 = vsel %vm1856, %v3568, %v2932
      %v3601 = vsel %vm1856, %v3569, %v2934
      %v3602 = vsel %vm1856, %v3570, %v2936
      %v3603 = vsel %vm1856, %v3571, %v2938
      %v3604 = vsel %vm1856, %v3572, %v2940
      %v3605 = vsel %vm1856, %v3573, %v2942
      %v3606 = vsel %vm1856, %v3574, %v2944
      %v3607 = vsel %vm1856, %v3575, %v2946
      %v3608 = vsel %vm1856, %v3576, %v2948
      %v3609 = vsel %vm1856, %v3577, %v2950
      %v3610 = vsel %vm1856, %v3578, %v2952
      %v3611 = vsel %vm1856, %v3579, %v2954
      %v3612 = vsel %vm1856, %v3580, %v2956
      %v3613 = vsel %vm1856, %v3581, %v2958
      %v3614 = vsel %vm1856, %v3582, %v2960
      %v3615 = vsel %vm1856, %v3583, %v2962
      %v3616 = vsel %vm1856, %v3584, %v2964
      %v3617 = vsel %vm1856, %v3585, %v2966
      %v3618 = vsel %vm1856, %v3586, %v2968
      %v3619 = vsel %vm1856, %v3587, %v2970
      %v3620 = vsel %vm1856, %v3588, %v2972
      %v3621 = vsel %vm1856, %v3589, %v2974
      %v3622 = vsel %vm1856, %v3590, %v2976
      %v3623 = vsel %vm1856, %v3591, %v2978
      %v3624 = vsel %vm1856, %v3592, %v2980
      %v3625 = vsel %vm1856, %v3593, %v2982
      %v3626 = vsel %vm1856, %v3594, %v2984
      %v3627 = vsel %vm1856, %v3595, %v2986
      %v3628 = vsel %vm1856, %v3596, %v2988
      %v3629 = vsel %vm1922, %v3597, %v3054
      %v3630 = vsel %vm1922, %v3598, %v3056
      %v3631 = vsel %vm1922, %v3599, %v3058
      %v3632 = vsel %vm1922, %v3600, %v3060
      %v3633 = vsel %vm1922, %v3601, %v3062
      %v3634 = vsel %vm1922, %v3602, %v3064
      %v3635 = vsel %vm1922, %v3603, %v3066
      %v3636 = vsel %vm1922, %v3604, %v3068
      %v3637 = vsel %vm1922, %v3605, %v3070
      %v3638 = vsel %vm1922, %v3606, %v3072
      %v3639 = vsel %vm1922, %v3607, %v3074
      %v3640 = vsel %vm1922, %v3608, %v3076
      %v3641 = vsel %vm1922, %v3609, %v3078
      %v3642 = vsel %vm1922, %v3610, %v3080
      %v3643 = vsel %vm1922, %v3611, %v3082
      %v3644 = vsel %vm1922, %v3612, %v3084
      %v3645 = vsel %vm1922, %v3613, %v3086
      %v3646 = vsel %vm1922, %v3614, %v3088
      %v3647 = vsel %vm1922, %v3615, %v3090
      %v3648 = vsel %vm1922, %v3616, %v3092
      %v3649 = vsel %vm1922, %v3617, %v3094
      %v3650 = vsel %vm1922, %v3618, %v3096
      %v3651 = vsel %vm1922, %v3619, %v3098
      %v3652 = vsel %vm1922, %v3620, %v3100
      %v3653 = vsel %vm1922, %v3621, %v3102
      %v3654 = vsel %vm1922, %v3622, %v3104
      %v3655 = vsel %vm1922, %v3623, %v3106
      %v3656 = vsel %vm1922, %v3624, %v3108
      %v3657 = vsel %vm1922, %v3625, %v3110
      %v3658 = vsel %vm1922, %v3626, %v3112
      %v3659 = vsel %vm1922, %v3627, %v3114
      %v3660 = vsel %vm1922, %v3628, %v3116
      %vm3661 = vcmask 654336
      %v3662 = vsel %vm3661, %v3629, %v3182
      %v3663 = vsel %vm3661, %v3630, %v3184
      %v3664 = vsel %vm3661, %v3631, %v3186
      %v3665 = vsel %vm3661, %v3632, %v3188
      %v3666 = vsel %vm3661, %v3633, %v3190
      %v3667 = vsel %vm3661, %v3634, %v3192
      %v3668 = vsel %vm3661, %v3635, %v3194
      %v3669 = vsel %vm3661, %v3636, %v3196
      %v3670 = vsel %vm3661, %v3637, %v3198
      %v3671 = vsel %vm3661, %v3638, %v3200
      %v3672 = vsel %vm3661, %v3639, %v3202
      %v3673 = vsel %vm3661, %v3640, %v3204
      %v3674 = vsel %vm3661, %v3641, %v3206
      %v3675 = vsel %vm3661, %v3642, %v3208
      %v3676 = vsel %vm3661, %v3643, %v3210
      %v3677 = vsel %vm3661, %v3644, %v3212
      %v3678 = vsel %vm3661, %v3645, %v3214
      %v3679 = vsel %vm3661, %v3646, %v3216
      %v3680 = vsel %vm3661, %v3647, %v3218
      %v3681 = vsel %vm3661, %v3648, %v3220
      %v3682 = vsel %vm3661, %v3649, %v3222
      %v3683 = vsel %vm3661, %v3650, %v3224
      %v3684 = vsel %vm3661, %v3651, %v3226
      %v3685 = vsel %vm3661, %v3652, %v3228
      %v3686 = vsel %vm3661, %v3653, %v3230
      %v3687 = vsel %vm3661, %v3654, %v3232
      %v3688 = vsel %vm3661, %v3655, %v3234
      %v3689 = vsel %vm3661, %v3656, %v3236
      %v3690 = vsel %vm3661, %v3657, %v3238
      %v3691 = vsel %vm3661, %v3658, %v3240
      %v3692 = vsel %vm3661, %v3659, %v3242
      %v3693 = vsel %vm3661, %v3660, %v3244
      %vm3694 = vcmask 785408
      %v3695 = vsel %vm3694, %v3662, %v3310
      %v3696 = vsel %vm3694, %v3663, %v3312
      %v3697 = vsel %vm3694, %v3664, %v3314
      %v3698 = vsel %vm3694, %v3665, %v3316
      %v3699 = vsel %vm3694, %v3666, %v3318
      %v3700 = vsel %vm3694, %v3667, %v3320
      %v3701 = vsel %vm3694, %v3668, %v3322
      %v3702 = vsel %vm3694, %v3669, %v3324
      %v3703 = vsel %vm3694, %v3670, %v3326
      %v3704 = vsel %vm3694, %v3671, %v3328
      %v3705 = vsel %vm3694, %v3672, %v3330
      %v3706 = vsel %vm3694, %v3673, %v3332
      %v3707 = vsel %vm3694, %v3674, %v3334
      %v3708 = vsel %vm3694, %v3675, %v3336
      %v3709 = vsel %vm3694, %v3676, %v3338
      %v3710 = vsel %vm3694, %v3677, %v3340
      %v3711 = vsel %vm3694, %v3678, %v3342
      %v3712 = vsel %vm3694, %v3679, %v3344
      %v3713 = vsel %vm3694, %v3680, %v3346
      %v3714 = vsel %vm3694, %v3681, %v3348
      %v3715 = vsel %vm3694, %v3682, %v3350
      %v3716 = vsel %vm3694, %v3683, %v3352
      %v3717 = vsel %vm3694, %v3684, %v3354
      %v3718 = vsel %vm3694, %v3685, %v3356
      %v3719 = vsel %vm3694, %v3686, %v3358
      %v3720 = vsel %vm3694, %v3687, %v3360
      %v3721 = vsel %vm3694, %v3688, %v3362
      %v3722 = vsel %vm3694, %v3689, %v3364
      %v3723 = vsel %vm3694, %v3690, %v3366
      %v3724 = vsel %vm3694, %v3691, %v3368
      %v3725 = vsel %vm3694, %v3692, %v3370
      %v3726 = vsel %vm3694, %v3693, %v3372
      %vm3727 = vcmask 916480
      %v3728 = vsel %vm3727, %v3695, %v3438
      %v3729 = vsel %vm3727, %v3696, %v3440
      %v3730 = vsel %vm3727, %v3697, %v3442
      %v3731 = vsel %vm3727, %v3698, %v3444
      %v3732 = vsel %vm3727, %v3699, %v3446
      %v3733 = vsel %vm3727, %v3700, %v3448
      %v3734 = vsel %vm3727, %v3701, %v3450
      %v3735 = vsel %vm3727, %v3702, %v3452
      %v3736 = vsel %vm3727, %v3703, %v3454
      %v3737 = vsel %vm3727, %v3704, %v3456
      %v3738 = vsel %vm3727, %v3705, %v3458
      %v3739 = vsel %vm3727, %v3706, %v3460
      %v3740 = vsel %vm3727, %v3707, %v3462
      %v3741 = vsel %vm3727, %v3708, %v3464
      %v3742 = vsel %vm3727, %v3709, %v3466
      %v3743 = vsel %vm3727, %v3710, %v3468
      %v3744 = vsel %vm3727, %v3711, %v3470
      %v3745 = vsel %vm3727, %v3712, %v3472
      %v3746 = vsel %vm3727, %v3713, %v3474
      %v3747 = vsel %vm3727, %v3714, %v3476
      %v3748 = vsel %vm3727, %v3715, %v3478
      %v3749 = vsel %vm3727, %v3716, %v3480
      %v3750 = vsel %vm3727, %v3717, %v3482
      %v3751 = vsel %vm3727, %v3718, %v3484
      %v3752 = vsel %vm3727, %v3719, %v3486
      %v3753 = vsel %vm3727, %v3720, %v3488
      %v3754 = vsel %vm3727, %v3721, %v3490
      %v3755 = vsel %vm3727, %v3722, %v3492
      %v3756 = vsel %vm3727, %v3723, %v3494
      %v3757 = vsel %vm3727, %v3724, %v3496
      %v3758 = vsel %vm3727, %v3725, %v3498
      %v3759 = vsel %vm3727, %v3726, %v3500
      %v3760 = vpack.c.bf16 %v3729, %v3728
      %v3761 = vpack.c.bf16 %v2606, %v2605
      %v3762 = vpack.c.bf16 %v3731, %v3730
      %v3763 = vpack.c.bf16 %v2608, %v2607
      %v3764 = vpack.c.bf16 %v3733, %v3732
      %v3765 = vpack.c.bf16 %v2610, %v2609
      %v3766 = vpack.c.bf16 %v3735, %v3734
      %v3767 = vpack.c.bf16 %v2612, %v2611
      %v3768 = vpack.c.bf16 %v3737, %v3736
      %v3769 = vpack.c.bf16 %v2614, %v2613
      %v3770 = vpack.c.bf16 %v3739, %v3738
      %v3771 = vpack.c.bf16 %v2616, %v2615
      %v3772 = vpack.c.bf16 %v3741, %v3740
      %v3773 = vpack.c.bf16 %v2618, %v2617
      %v3774 = vpack.c.bf16 %v3743, %v3742
      %v3775 = vpack.c.bf16 %v2620, %v2619
      %v3776 = vpack.c.bf16 %v3745, %v3744
      %v3777 = vpack.c.bf16 %v2622, %v2621
      %v3778 = vpack.c.bf16 %v3747, %v3746
      %v3779 = vpack.c.bf16 %v2624, %v2623
      %v3780 = vpack.c.bf16 %v3749, %v3748
      %v3781 = vpack.c.bf16 %v2626, %v2625
      %v3782 = vpack.c.bf16 %v3751, %v3750
      %v3783 = vpack.c.bf16 %v2628, %v2627
      %v3784 = vpack.c.bf16 %v3753, %v3752
      %v3785 = vpack.c.bf16 %v2630, %v2629
      %v3786 = vpack.c.bf16 %v3755, %v3754
      %v3787 = vpack.c.bf16 %v2632, %v2631
      %v3788 = vpack.c.bf16 %v3757, %v3756
      %v3789 = vpack.c.bf16 %v2634, %v2633
      %v3790 = vpack.c.bf16 %v3759, %v3758
      %v3791 = vpack.c.bf16 %v2636, %v2635
      %v3792 = vld [vmem:[%s3] sm:$0xf]
      %v3793 = vld [vmem:[%s3 + $0x4] sm:$0xf]
      %v3794 = vld [vmem:[%s3 + $0x8] sm:$0xf]
      %v3795 = vld [vmem:[%s3 + $0xc] sm:$0xf]
      %v3796 = vld [vmem:[%s3 + $0x10] sm:$0xf]
      %v3797 = vld [vmem:[%s3 + $0x14] sm:$0xf]
      %v3798 = vld [vmem:[%s3 + $0x18] sm:$0xf]
      %v3799 = vld [vmem:[%s3 + $0x1c] sm:$0xf]
      %v3800 = vld [vmem:[%s3 + $0x20] sm:$0xf]
      %v3801 = vld [vmem:[%s3 + $0x24] sm:$0xf]
      %v3802 = vld [vmem:[%s3 + $0x28] sm:$0xf]
      %v3803 = vld [vmem:[%s3 + $0x2c] sm:$0xf]
      %v3804 = vld [vmem:[%s3 + $0x30] sm:$0xf]
      %v3805 = vld [vmem:[%s3 + $0x34] sm:$0xf]
      %v3806 = vld [vmem:[%s3 + $0x38] sm:$0xf]
      %v3807 = vld [vmem:[%s3 + $0x3c] sm:$0xf]
      %v3808 = vld [vmem:[%s3 + $0x40] sm:$0xf]
      %v3809 = vld [vmem:[%s3 + $0x44] sm:$0xf]
      %v3810 = vld [vmem:[%s4] sm:$0x1]
      %v3812 = vlaneseq
      %v3813 = vshrl.u32 %v3812, 7
      %v3814 = vsub.s32 0, %v3813
      %v3815 = vrot.slane %v3810, %v3814
      %v3835 = vunpack.c.l.b16 %v3792
      %v3836 = vunpack.c.l.b16 %v3793
      %v3837 = vunpack.c.l.b16 %v3794
      %v3838 = vunpack.c.l.b16 %v3795
      %v3839 = vunpack.c.l.b16 %v3796
      %v3840 = vunpack.c.l.b16 %v3797
      %v3841 = vunpack.c.l.b16 %v3798
      %v3842 = vunpack.c.l.b16 %v3799
      %v3843 = vunpack.c.l.b16 %v3800
      %v3844 = vunpack.c.l.b16 %v3801
      %v3845 = vunpack.c.l.b16 %v3802
      %v3846 = vunpack.c.l.b16 %v3803
      %v3847 = vunpack.c.l.b16 %v3804
      %v3848 = vunpack.c.l.b16 %v3805
      %v3849 = vunpack.c.l.b16 %v3806
      %v3850 = vunpack.c.l.b16 %v3807
      %v3851 = vunpack.c.l.b16 %v3808
      %v3852 = vunpack.c.l.b16 %v3809
      %v3853 = vpack.c.b16 %v3836, %v3835
      %v3854 = vpack.c.b16 %v3838, %v3837
      %v3855 = vpack.c.b16 %v3840, %v3839
      %v3856 = vpack.c.b16 %v3842, %v3841
      %v3857 = vpack.c.b16 %v3844, %v3843
      %v3858 = vpack.c.b16 %v3846, %v3845
      %v3859 = vpack.c.b16 %v3848, %v3847
      %v3860 = vpack.c.b16 %v3850, %v3849
      %v3861 = vpack.c.b16 %v3852, %v3851
      %v3872 = vsel %vm1724, %v3761, 0
      %v3875 = vsel %vm1724, %v3763, 0
      %v3878 = vsel %vm1724, %v3765, 0
      %v3881 = vsel %vm1724, %v3767, 0
      %v3884 = vsel %vm1724, %v3769, 0
      %v3887 = vsel %vm1724, %v3771, 0
      %v3890 = vsel %vm1724, %v3773, 0
      %v3893 = vsel %vm1724, %v3775, 0
      %v3896 = vsel %vm1724, %v3777, 0
      %v3899 = vsel %vm1724, %v3779, 0
      %v3902 = vsel %vm1724, %v3781, 0
      %v3905 = vsel %vm1724, %v3783, 0
      %v3908 = vsel %vm1724, %v3785, 0
      %v3911 = vsel %vm1724, %v3787, 0
      %v3914 = vsel %vm1724, %v3789, 0
      %v3917 = vsel %vm1724, %v3791, 0
      %3919 = vmatprep.subr.bf16.mxu0 0
      %3920 = vmatpush1.bf16.msra.mxu0 %v3853
      %3921 = vmatprep.subr.bf16.mxu0 0
      %3922 = vmatpush1.bf16.msra.mxu0 %v3854
      %3923 = vmatprep.subr.bf16.mxu0 0
      %3924 = vmatpush1.bf16.msra.mxu0 %v3855
      %3925 = vmatprep.subr.bf16.mxu0 0
      %3926 = vmatpush1.bf16.msra.mxu0 %v3856
      %3927 = vmatprep.subr.bf16.mxu0 0
      %3928 = vmatpush1.bf16.msra.mxu0 %v3857
      %3929 = vmatprep.subr.bf16.mxu0 0
      %3930 = vmatpush1.bf16.msra.mxu0 %v3858
      %3931 = vmatprep.subr.bf16.mxu0 0
      %3932 = vmatpush1.bf16.msra.mxu0 %v3859
      %3933 = vmatprep.subr.bf16.mxu0 0
      %3934 = vmatpush1.bf16.msra.mxu0 %v3860
      %3935 = vmatprep.subr.bf16.mxu0 0
      %3936 = vmatpush1.bf16.msra.mxu0 %v3861
      %3937 = vmatprep.subr.bf16.mxu0 0
      %3938 = vmatpush1.bf16.msra.mxu0 0
      %3939 = vmatprep.subr.bf16.mxu0 0
      %3940 = vmatpush1.bf16.msra.mxu0 0
      %3941 = vmatprep.subr.bf16.mxu0 0
      %3942 = vmatpush1.bf16.msra.mxu0 0
      %3943 = vmatprep.subr.bf16.mxu0 0
      %3944 = vmatpush1.bf16.msra.mxu0 0
      %3945 = vmatprep.subr.bf16.mxu0 0
      %3946 = vmatpush1.bf16.msra.mxu0 0
      %3947 = vmatprep.subr.bf16.mxu0 0
      %3948 = vmatpush1.bf16.msra.mxu0 0
      %3949 = vmatprep.subr.bf16.mxu0 0
      %3950 = vmatpush1.bf16.msra.mxu0 0
      %3951 = vmatprep.mubr.bf16.mxu0 %v3872
      %3952 = vmatmul.mubr.bf16.gmra.mrb[0].mxu0 %v3760
      %v3953 = vpop.f32.mrb[0].mxu0
      %v3954 = vadd.f32 %v3815, %v3953
      %v3955 = vpop.f32.mrb[0].mxu0
      %v3956 = vpop.f32.mrb[0].mxu0
      %v3957 = vadd.f32 %v3815, %v3956
      %v3958 = vpop.f32.mrb[0].mxu0
      %3959 = vmatprep.mubr.bf16.mxu0 %v3875
      %3960 = vmatmul.mubr.bf16.gmra.mrb[0].mxu0 %v3762
      %v3961 = vpop.f32.mrb[0].mxu0
      %v3962 = vadd.f32 %v3815, %v3961
      %v3963 = vpop.f32.mrb[0].mxu0
      %v3964 = vpop.f32.mrb[0].mxu0
      %v3965 = vadd.f32 %v3815, %v3964
      %v3966 = vpop.f32.mrb[0].mxu0
      %3967 = vmatprep.mubr.bf16.mxu0 %v3878
      %3968 = vmatmul.mubr.bf16.gmra.mrb[0].mxu0 %v3764
      %v3969 = vpop.f32.mrb[0].mxu0
      %v3970 = vadd.f32 %v3815, %v3969
      %v3971 = vpop.f32.mrb[0].mxu0
      %v3972 = vpop.f32.mrb[0].mxu0
      %v3973 = vadd.f32 %v3815, %v3972
      %v3974 = vpop.f32.mrb[0].mxu0
      %3975 = vmatprep.mubr.bf16.mxu0 %v3881
      %3976 = vmatmul.mubr.bf16.gmra.mrb[0].mxu0 %v3766
      %v3977 = vpop.f32.mrb[0].mxu0
      %v3978 = vadd.f32 %v3815, %v3977
      %v3979 = vpop.f32.mrb[0].mxu0
      %v3980 = vpop.f32.mrb[0].mxu0
      %v3981 = vadd.f32 %v3815, %v3980
      %v3982 = vpop.f32.mrb[0].mxu0
      %3983 = vmatprep.mubr.bf16.mxu0 %v3884
      %3984 = vmatmul.mubr.bf16.gmra.mrb[0].mxu0 %v3768
      %v3985 = vpop.f32.mrb[0].mxu0
      %v3986 = vadd.f32 %v3815, %v3985
      %v3987 = vpop.f32.mrb[0].mxu0
      %v3988 = vpop.f32.mrb[0].mxu0
      %v3989 = vadd.f32 %v3815, %v3988
      %v3990 = vpop.f32.mrb[0].mxu0
      %3991 = vmatprep.mubr.bf16.mxu0 %v3887
      %3992 = vmatmul.mubr.bf16.gmra.mrb[0].mxu0 %v3770
      %v3993 = vpop.f32.mrb[0].mxu0
      %v3994 = vadd.f32 %v3815, %v3993
      %v3995 = vpop.f32.mrb[0].mxu0
      %v3996 = vpop.f32.mrb[0].mxu0
      %v3997 = vadd.f32 %v3815, %v3996
      %v3998 = vpop.f32.mrb[0].mxu0
      %3999 = vmatprep.mubr.bf16.mxu0 %v3890
      %4000 = vmatmul.mubr.bf16.gmra.mrb[0].mxu0 %v3772
      %v4001 = vpop.f32.mrb[0].mxu0
      %v4002 = vadd.f32 %v3815, %v4001
      %v4003 = vpop.f32.mrb[0].mxu0
      %v4004 = vpop.f32.mrb[0].mxu0
      %v4005 = vadd.f32 %v3815, %v4004
      %v4006 = vpop.f32.mrb[0].mxu0
      %4007 = vmatprep.mubr.bf16.mxu0 %v3893
      %4008 = vmatmul.mubr.bf16.gmra.mrb[0].mxu0 %v3774
      %v4009 = vpop.f32.mrb[0].mxu0
      %v4010 = vadd.f32 %v3815, %v4009
      %v4011 = vpop.f32.mrb[0].mxu0
      %v4012 = vpop.f32.mrb[0].mxu0
      %v4013 = vadd.f32 %v3815, %v4012
      %v4014 = vpop.f32.mrb[0].mxu0
      %4015 = vmatprep.mubr.bf16.mxu0 %v3896
      %4016 = vmatmul.mubr.bf16.gmra.mrb[0].mxu0 %v3776
      %v4017 = vpop.f32.mrb[0].mxu0
      %v4018 = vadd.f32 %v3815, %v4017
      %v4019 = vpop.f32.mrb[0].mxu0
      %v4020 = vpop.f32.mrb[0].mxu0
      %v4021 = vadd.f32 %v3815, %v4020
      %v4022 = vpop.f32.mrb[0].mxu0
      %4023 = vmatprep.mubr.bf16.mxu0 %v3899
      %4024 = vmatmul.mubr.bf16.gmra.mrb[0].mxu0 %v3778
      %v4025 = vpop.f32.mrb[0].mxu0
      %v4026 = vadd.f32 %v3815, %v4025
      %v4027 = vpop.f32.mrb[0].mxu0
      %v4028 = vpop.f32.mrb[0].mxu0
      %v4029 = vadd.f32 %v3815, %v4028
      %v4030 = vpop.f32.mrb[0].mxu0
      %4031 = vmatprep.mubr.bf16.mxu0 %v3902
      %4032 = vmatmul.mubr.bf16.gmra.mrb[0].mxu0 %v3780
      %v4033 = vpop.f32.mrb[0].mxu0
      %v4034 = vadd.f32 %v3815, %v4033
      %v4035 = vpop.f32.mrb[0].mxu0
      %v4036 = vpop.f32.mrb[0].mxu0
      %v4037 = vadd.f32 %v3815, %v4036
      %v4038 = vpop.f32.mrb[0].mxu0
      %4039 = vmatprep.mubr.bf16.mxu0 %v3905
      %4040 = vmatmul.mubr.bf16.gmra.mrb[0].mxu0 %v3782
      %v4041 = vpop.f32.mrb[0].mxu0
      %v4042 = vadd.f32 %v3815, %v4041
      %v4043 = vpop.f32.mrb[0].mxu0
      %v4044 = vpop.f32.mrb[0].mxu0
      %v4045 = vadd.f32 %v3815, %v4044
      %v4046 = vpop.f32.mrb[0].mxu0
      %4047 = vmatprep.mubr.bf16.mxu0 %v3908
      %4048 = vmatmul.mubr.bf16.gmra.mrb[0].mxu0 %v3784
      %v4049 = vpop.f32.mrb[0].mxu0
      %v4050 = vadd.f32 %v3815, %v4049
      %v4051 = vpop.f32.mrb[0].mxu0
      %v4052 = vpop.f32.mrb[0].mxu0
      %v4053 = vadd.f32 %v3815, %v4052
      %v4054 = vpop.f32.mrb[0].mxu0
      %4055 = vmatprep.mubr.bf16.mxu0 %v3911
      %4056 = vmatmul.mubr.bf16.gmra.mrb[0].mxu0 %v3786
      %v4057 = vpop.f32.mrb[0].mxu0
      %v4058 = vadd.f32 %v3815, %v4057
      %v4059 = vpop.f32.mrb[0].mxu0
      %v4060 = vpop.f32.mrb[0].mxu0
      %v4061 = vadd.f32 %v3815, %v4060
      %v4062 = vpop.f32.mrb[0].mxu0
      %4063 = vmatprep.mubr.bf16.mxu0 %v3914
      %4064 = vmatmul.mubr.bf16.gmra.mrb[0].mxu0 %v3788
      %v4065 = vpop.f32.mrb[0].mxu0
      %v4066 = vadd.f32 %v3815, %v4065
      %v4067 = vpop.f32.mrb[0].mxu0
      %v4068 = vpop.f32.mrb[0].mxu0
      %v4069 = vadd.f32 %v3815, %v4068
      %v4070 = vpop.f32.mrb[0].mxu0
      %4071 = vmatprep.mubr.bf16.mxu0 %v3917
      %4072 = vmatmul.mubr.bf16.gmra.mrb[0].mxu0 %v3790
      %v4073 = vpop.f32.mrb[0].mxu0
      %v4074 = vadd.f32 %v3815, %v4073
      %v4075 = vpop.f32.mrb[0].mxu0
      %v4076 = vpop.f32.mrb[0].mxu0
      %v4077 = vadd.f32 %v3815, %v4076
      %v4078 = vpop.f32.mrb[0].mxu0
      %4079 = vdwg.mxu0
      %vm4080 = vcmask 162816
      %4081 = vst.msk [vmem:[%s224] sm:$0xff] %vm4080, %v3954
      %4082 = vst.msk [vmem:[%s224 + $0x8] sm:$0xff] %vm4080, %v3957
      %4083 = vst.msk [vmem:[%s224 + $0x10] sm:$0xff] %vm4080, %v3962
      %4084 = vst.msk [vmem:[%s224 + $0x18] sm:$0xff] %vm4080, %v3965
      %4085 = vst.msk [vmem:[%s224 + $0x20] sm:$0xff] %vm4080, %v3970
      %4086 = vst.msk [vmem:[%s224 + $0x28] sm:$0xff] %vm4080, %v3973
      %4087 = vst.msk [vmem:[%s224 + $0x30] sm:$0xff] %vm4080, %v3978
      %4088 = vst.msk [vmem:[%s224 + $0x38] sm:$0xff] %vm4080, %v3981
      %4089 = vst.msk [vmem:[%s224 + $0x40] sm:$0xff] %vm4080, %v3986
      %4090 = vst.msk [vmem:[%s224 + $0x48] sm:$0xff] %vm4080, %v3989
      %4091 = vst.msk [vmem:[%s224 + $0x50] sm:$0xff] %vm4080, %v3994
      %4092 = vst.msk [vmem:[%s224 + $0x58] sm:$0xff] %vm4080, %v3997
      %4093 = vst.msk [vmem:[%s224 + $0x60] sm:$0xff] %vm4080, %v4002
      %4094 = vst.msk [vmem:[%s224 + $0x68] sm:$0xff] %vm4080, %v4005
      %4095 = vst.msk [vmem:[%s224 + $0x70] sm:$0xff] %vm4080, %v4010
      %4096 = vst.msk [vmem:[%s224 + $0x78] sm:$0xff] %vm4080, %v4013
      %4097 = vst.msk [vmem:[%s224 + $0x80] sm:$0xff] %vm4080, %v4018
      %4098 = vst.msk [vmem:[%s224 + $0x88] sm:$0xff] %vm4080, %v4021
      %4099 = vst.msk [vmem:[%s224 + $0x90] sm:$0xff] %vm4080, %v4026
      %4100 = vst.msk [vmem:[%s224 + $0x98] sm:$0xff] %vm4080, %v4029
      %4101 = vst.msk [vmem:[%s224 + $0xa0] sm:$0xff] %vm4080, %v4034
      %4102 = vst.msk [vmem:[%s224 + $0xa8] sm:$0xff] %vm4080, %v4037
      %4103 = vst.msk [vmem:[%s224 + $0xb0] sm:$0xff] %vm4080, %v4042
      %4104 = vst.msk [vmem:[%s224 + $0xb8] sm:$0xff] %vm4080, %v4045
      %4105 = vst.msk [vmem:[%s224 + $0xc0] sm:$0xff] %vm4080, %v4050
      %4106 = vst.msk [vmem:[%s224 + $0xc8] sm:$0xff] %vm4080, %v4053
      %4107 = vst.msk [vmem:[%s224 + $0xd0] sm:$0xff] %vm4080, %v4058
      %4108 = vst.msk [vmem:[%s224 + $0xd8] sm:$0xff] %vm4080, %v4061
      %4109 = vst.msk [vmem:[%s224 + $0xe0] sm:$0xff] %vm4080, %v4066
      %4110 = vst.msk [vmem:[%s224 + $0xe8] sm:$0xff] %vm4080, %v4069
      %4111 = vst.msk [vmem:[%s224 + $0xf0] sm:$0xff] %vm4080, %v4074
      %4112 = vst.msk [vmem:[%s224 + $0xf8] sm:$0xff] %vm4080, %v4077
      %p4113 = scmp.lt.s32.totalorder %s16, 1
      %s4114 = scalar_select %p4113, %s16, 1
      %s4115 = smul.addr %s4114, 32
      %s4116 = smul.addr %s4115, 8
      %s4117 = scalar_lea.vmem %s5, %s4116
      // Predicated region
      $region41: #{tpu_custom_call.1} parent=39 // pred_check
        %p4118 = pneg %p144
      $region42: #{tpu_custom_call.1} parent=39 // pred_check_branch
        %4120 = sbr.rel (%p4118) target = $region44
      $region43: #{tpu_custom_call.1} parent=39 // pred_region
        _
      $region44: #{tpu_custom_call.1} parent=39 // pred_fallthru
        _
    $region40: #{tpu_custom_call.1} parent=5 // pred_fallthru
      _
    %p4121 = scmp.le.s32.totalorder 2, %s11
    // Predicated region
    $region45: #{tpu_custom_call.1} parent=5 // pred_check
      %p4122 = pneg %p4121
    $region46: #{tpu_custom_call.1} parent=5 // pred_check_branch
      %4124 = sbr.rel (%p4122) target = $region48
    $region47: #{tpu_custom_call.1} parent=5 // pred_region
      %s4125 = ssub.s32 %s11, 2
      // Predicated region
      $region49: #{tpu_custom_call.1} parent=47 // pred_check
        %p4126 = pneg %p150
      $region50: #{tpu_custom_call.1} parent=47 // pred_check_branch
        %4128 = sbr.rel (%p4126) target = $region52
      $region51: #{tpu_custom_call.1} parent=47 // pred_region
        %p4129 = scmp.lt.s32.totalorder %s17, 1
        %s4130 = scalar_select %p4129, %s17, 1
        %s4131 = smul.addr %s4130, 32
        %s4132 = smul.addr %s4131, 8
        %s4133 = scalar_lea.vmem %s5, %s4132
      $region52: #{tpu_custom_call.1} parent=47 // pred_fallthru
        _
    $region48: #{tpu_custom_call.1} parent=5 // pred_fallthru
      _
  $region6: #{tpu_custom_call.1} parent=0 // loop_footer
    %s15 = sadd.s32 1, %s11
  $region7: #{tpu_custom_call.1} parent=0 // loop_footer_branch
    %10 = sbr.rel target = $region3
  $region8: #{tpu_custom_call.1} parent=0 // loop_exit
    _

</llo_original>
